<compile_context>
chip_gen: v5e
topology: v5e:2x2
jax: 0.10.0
libtpu: 0.0.40
codegen_flags: <defaults>
</compile_context>

<pallas_src>
import math
import functools

import jax
import jax.numpy as jnp
from jax.experimental import pallas as pl
from jax.experimental.pallas import tpu as pltpu

# ---------------- model hyper-params (small, consistent with the module) ----------------
EMBED_DIM = 32
NUM_HEADS = 4
NUM_LAYERS = 4          # fetch_idx = [3, 7, 11] -> with 4 layers, one feature (layer 3)
TRANS_DIM = 32
GROUP_SIZE = 8
DROP_PATH_RATE = 0.1    # DropPath == identity at inference
FETCH_IDX = (3, 7, 11)
LN_EPS = 1e-5


# ---------------------------------- kernel helpers ----------------------------------
def _layer_norm(x, g, b, eps=LN_EPS):
    # PyTorch LayerNorm: biased variance over last dim, eps inside rsqrt.
    mu = jnp.mean(x, axis=-1, keepdims=True)
    xc = x - mu
    var = jnp.mean(xc * xc, axis=-1, keepdims=True)
    return xc * jax.lax.rsqrt(var + eps) * g + b


def _gelu_exact(x):
    # nn.GELU default = exact erf form.
    return 0.5 * x * (1.0 + jax.lax.erf(x * 0.7071067811865476))


def _matmul_t(x, w):
    # y = x @ w.T   (PyTorch Linear convention, w: [out, in])
    return jax.lax.dot_general(x, w, (((1,), (1,)), ((), ())),
                               preferred_element_type=jnp.float32)


def _bmm(a, b, contract_dim):
    # batched (leading dim) matmul: contract a's last dim with b's `contract_dim`
    return jax.lax.dot_general(a, b, (((2,), (contract_dim,)), ((0,), (0,))),
                               preferred_element_type=jnp.float32)


# ---------------------------------- fused kernel ----------------------------------
def gpt_fused_kernel(x_ref, pos_ref,
                     wqkv_ref,   # [3L, H, d, E]   q/k/v projection weights, per head
                     bqkv_ref,   # [3L, H, 1, d]   q/k/v projection biases, per head
                     wo_ref,     # [L,  H, d, E]   out_proj weight, per head (wo.T reshaped)
                     w1_ref,     # [L, 4E, E]      mlp fc1
                     w2_ref,     # [L,  E, 4E]     mlp fc2
                     vec_ref,    # [L,  7, 4E]     rows: ln1_g ln1_b ln2_g ln2_b bo b2 b1
                     lnf_ref,    # [2,  E]         final LayerNorm gamma/beta
                     *out_refs,  # [feat outputs ..., final output]
                     num_layers, num_heads, fetch_layers):
    _, S, E = x_ref.shape
    H = num_heads
    d = E // H
    scale = 1.0 / math.sqrt(d)

    pos = pos_ref[0]                                    # [S, E]
    x = x_ref[0]                                        # [S, E]  resident for all layers

    # strictly-upper-triangular causal mask, hoisted out of the layer loop
    ri = jax.lax.broadcasted_iota(jnp.int32, (S, S), 0)
    ci = jax.lax.broadcasted_iota(jnp.int32, (S, S), 1)
    maskH = jnp.broadcast_to((ci > ri)[None], (H, S, S))
    neg = jnp.float32(-1e30)                            # finite mask value (no inf-inf NaN risk)

    n_feat = 0
    for l in range(num_layers):                         # unrolled: weights stay VMEM-resident
        h = x + pos                                     # `layer(h + pos)` every layer
        xn = _layer_norm(h, vec_ref[l, 0, :E], vec_ref[l, 1, :E])     # ln_1

        # --- causal multi-head self-attention, all heads batched ---
        xnH = jnp.broadcast_to(xn[None], (H, S, E))                   # [H, S, E]
        q = _bmm(xnH, wqkv_ref[3 * l + 0], 2) + bqkv_ref[3 * l + 0]   # [H, S, d]
        k = _bmm(xnH, wqkv_ref[3 * l + 1], 2) + bqkv_ref[3 * l + 1]   # [H, S, d]
        v = _bmm(xnH, wqkv_ref[3 * l + 2], 2) + bqkv_ref[3 * l + 2]   # [H, S, d]

        s = _bmm(q, k, 2) * scale                                     # [H, S, S]
        s = jnp.where(maskH, neg, s)
        m = jnp.max(s, axis=-1, keepdims=True)
        e = jnp.exp(s - m)
        p = e / jnp.sum(e, axis=-1, keepdims=True)
        o = _bmm(p, v, 1)                                             # [H, S, d]

        yh = _bmm(o, wo_ref[l], 1)                                    # [H, S, E] per-head out_proj
        attn = yh[0]
        for hh in range(1, H):                                        # head merge = 3 VPU adds
            attn = attn + yh[hh]
        attn = attn + vec_ref[l, 4, :E]                               # + out_proj bias

        # reference quirk: residual base is ln_1(x), not the pre-norm x
        x = xn + attn

        # --- MLP ---
        xn2 = _layer_norm(x, vec_ref[l, 2, :E], vec_ref[l, 3, :E])    # ln_2
        h1 = _gelu_exact(_matmul_t(xn2, w1_ref[l]) + vec_ref[l, 6, :])
        h2 = _matmul_t(h1, w2_ref[l]) + vec_ref[l, 5, :E]
        x = x + h2

        if l in fetch_layers:                                         # feature tap (pre ln_f)
            out_refs[n_feat][0] = x
            n_feat += 1

    out_refs[-1][0] = _layer_norm(x, lnf_ref[0], lnf_ref[1])          # ln_f


def gpt_layers_fused(x, pos, packed, num_heads=NUM_HEADS):
    """x, pos: [B, S, E] float32. One fused pallas_call for all layers + ln_f."""
    B, S, E = x.shape
    num_layers = packed["wo"].shape[0]
    fetch_layers = tuple(i for i in FETCH_IDX if i < num_layers)

    weights = [packed["wqkv"], packed["bqkv"], packed["wo"],
               packed["w1"], packed["w2"], packed["vec"], packed["lnf"]]

    act_spec = pl.BlockSpec((1, S, E), lambda b: (b, 0, 0))
    w_specs = [pl.BlockSpec(w.shape, lambda b, nd=w.ndim: (0,) * nd) for w in weights]

    n_out = len(fetch_layers) + 1
    out_shape = [jax.ShapeDtypeStruct((B, S, E), jnp.float32)] * n_out
    out_specs = [pl.BlockSpec((1, S, E), lambda b: (b, 0, 0)) for _ in range(n_out)]

    kernel = functools.partial(gpt_fused_kernel, num_layers=num_layers,
                               num_heads=num_heads, fetch_layers=fetch_layers)

    return pl.pallas_call(
        kernel,
        out_shape=out_shape,
        grid=(B,),
        in_specs=[act_spec, act_spec] + w_specs,
        out_specs=out_specs,
        compiler_params=pltpu.CompilerParams(dimension_semantics=("parallel",)),
    )(x, pos, *weights)


# ---------------------------------- parameters ----------------------------------
def init_params(key, embed_dim, num_layers):
    E = embed_dim
    keys = jax.random.split(key, 1 + num_layers)
    sos = jax.random.normal(keys[0], (E,), jnp.float32)          # nn.init.normal_(self.sos)
    layers = []
    for i in range(num_layers):
        ks = jax.random.split(keys[1 + i], 8)
        layers.append(dict(
            ln1_g=jnp.ones((E,), jnp.float32),
            ln1_b=jnp.zeros((E,), jnp.float32),
            wqkv=0.02 * jax.random.normal(ks[0], (3 * E, E), jnp.float32),
            bqkv=0.02 * jax.random.normal(ks[1], (3 * E,), jnp.float32),
            wo=0.02 * jax.random.normal(ks[2], (E, E), jnp.float32),
            bo=0.02 * jax.random.normal(ks[3], (E,), jnp.float32),
            ln2_g=jnp.ones((E,), jnp.float32),
            ln2_b=jnp.zeros((E,), jnp.float32),
            w1=0.02 * jax.random.normal(ks[4], (4 * E, E), jnp.float32),
            b1=0.02 * jax.random.normal(ks[5], (4 * E,), jnp.float32),
            w2=0.02 * jax.random.normal(ks[6], (E, 4 * E), jnp.float32),
            b2=0.02 * jax.random.normal(ks[7], (E,), jnp.float32),
        ))
    return dict(sos=sos, layers=layers,
                ln_f_g=jnp.ones((E,), jnp.float32),
                ln_f_b=jnp.zeros((E,), jnp.float32))
    # TODO(synk): self.increase_dim (Conv1d trans_dim -> 3*group_size) is unused in forward.


def pack_params(params, num_heads=NUM_HEADS):
    """Stack per-layer weights into leading-dim-L slabs consumed by the fused kernel."""
    layers = params["layers"]
    E = layers[0]["wo"].shape[0]
    H = num_heads
    d = E // H
    F = 4 * E

    def pad_row(v):
        return jnp.concatenate([v, jnp.zeros((F - v.shape[0],), v.dtype)])

    wqkv_l, bqkv_l, wo_l, w1_l, w2_l, vec_l = [], [], [], [], [], []
    for lp in layers:
        wqkv_l.append(lp["wqkv"].reshape(3, H, d, E))        # [3,H,d,E]
        bqkv_l.append(lp["bqkv"].reshape(3, H, 1, d))        # [3,H,1,d]
        wo_l.append(lp["wo"].T.reshape(H, d, E))             # wo[e, h*d+j] -> [h, j, e]
        w1_l.append(lp["w1"])                                # [4E, E]
        w2_l.append(lp["w2"])                                # [E, 4E]
        vec_l.append(jnp.stack([pad_row(lp["ln1_g"]), pad_row(lp["ln1_b"]),
                                pad_row(lp["ln2_g"]), pad_row(lp["ln2_b"]),
                                pad_row(lp["bo"]), pad_row(lp["b2"]),
                                lp["b1"]], axis=0))          # [7, 4E]

    return dict(
        wqkv=jnp.concatenate(wqkv_l, axis=0),                # [3L, H, d, E]
        bqkv=jnp.concatenate(bqkv_l, axis=0),                # [3L, H, 1, d]
        wo=jnp.stack(wo_l, axis=0),                          # [L, H, d, E]
        w1=jnp.stack(w1_l, axis=0),                          # [L, 4E, E]
        w2=jnp.stack(w2_l, axis=0),                          # [L, E, 4E]
        vec=jnp.stack(vec_l, axis=0),                        # [L, 7, 4E]
        lnf=jnp.stack([params["ln_f_g"], params["ln_f_b"]], axis=0),  # [2, E]
        sos=params["sos"],                                   # [E]
    )


# ---------------------------------- GPT_extractor forward ----------------------------------
def gpt_extractor_forward(h, pos, packed, classify=False):
    """h, pos: [batch, length, embed_dim] -> (encoded_points [B,S,E], feature_list)."""
    B, L, E = h.shape
    h_sbe = jnp.transpose(h, (1, 0, 2))                      # [L, B, E] (h.transpose(0,1))
    pos_sbe = jnp.transpose(pos, (1, 0, 2))

    sos = jnp.ones((1, B, E), h.dtype) * packed["sos"]
    if not classify:
        h_sbe = jnp.concatenate([sos, h_sbe[:-1]], axis=0)
    else:
        h_sbe = jnp.concatenate([sos, h_sbe], axis=0)

    # kernel works batch-major [B, S, E]
    x = jnp.transpose(h_sbe, (1, 0, 2))
    p = jnp.transpose(pos_sbe, (1, 0, 2))

    outs = gpt_layers_fused(x, p, packed)                    # [feat..., ln_f(x)]
    feature_list = [f[:, 2:] for f in outs[:-1]]             # h.transpose(0,1)[:, 2:]
    encoded_points = outs[-1]                                # already [B, S, E]
    return encoded_points, feature_list


# ---------------------------------- main ----------------------------------
if __name__ == "__main__":
    key = jax.random.PRNGKey(0)
    kp, kh, kpos = jax.random.split(key, 3)

    B, L = 2, 8
    params = init_params(kp, EMBED_DIM, NUM_LAYERS)
    packed = pack_params(params)

    h = jax.random.normal(kh, (B, L, EMBED_DIM), jnp.float32)
    pos = jax.random.normal(kpos, (B, L, EMBED_DIM), jnp.float32)

    forward = jax.jit(gpt_extractor_forward, static_argnames=("classify",))
    encoded_points, feature_list = forward(h, pos, packed, classify=False)

    jax.block_until_ready(encoded_points)
    for f in feature_list:
        jax.block_until_ready(f)

    assert encoded_points.shape == (B, L, EMBED_DIM)
    assert len(feature_list) == 1 and feature_list[0].shape == (B, L - 2, EMBED_DIM)
    assert bool(jnp.all(jnp.isfinite(encoded_points)))
    print("KERNEL_OK")
</pallas_src>

<mosaic_0001>
module attributes {stable_mosaic.version = 11 : i64} {
  func.func @gpt_fused_kernel(%arg0: i32, %arg1: memref<1x8x32xf32, #tpu.memory_space<vmem>>, %arg2: memref<1x8x32xf32, #tpu.memory_space<vmem>>, %arg3: memref<12x4x8x32xf32, #tpu.memory_space<vmem>>, %arg4: memref<12x4x1x8xf32, #tpu.memory_space<vmem>>, %arg5: memref<4x4x8x32xf32, #tpu.memory_space<vmem>>, %arg6: memref<4x128x32xf32, #tpu.memory_space<vmem>>, %arg7: memref<4x32x128xf32, #tpu.memory_space<vmem>>, %arg8: memref<4x7x128xf32, #tpu.memory_space<vmem>>, %arg9: memref<2x32xf32, #tpu.memory_space<vmem>>, %arg10: memref<1x8x32xf32, #tpu.memory_space<vmem>>, %arg11: memref<1x8x32xf32, #tpu.memory_space<vmem>>) attributes {dimension_semantics = [#tpu.dimension_semantics<parallel>], iteration_bounds = array<i64: 2>, scalar_prefetch = 0 : i64, scratch_operands = 0 : i64, tpu.core_type = #tpu.core_type<tc>, window_params = [{transform_indices = @transform_0, window_bounds = array<i64: 1, 8, 32>}, {transform_indices = @transform_1, window_bounds = array<i64: 1, 8, 32>}, {pipeline_mode = #tpu.pipeline_mode<synchronous>, transform_indices = @transform_2, window_bounds = array<i64: 12, 4, 8, 32>}, {pipeline_mode = #tpu.pipeline_mode<synchronous>, transform_indices = @transform_3, window_bounds = array<i64: 12, 4, 1, 8>}, {pipeline_mode = #tpu.pipeline_mode<synchronous>, transform_indices = @transform_4, window_bounds = array<i64: 4, 4, 8, 32>}, {pipeline_mode = #tpu.pipeline_mode<synchronous>, transform_indices = @transform_5, window_bounds = array<i64: 4, 128, 32>}, {pipeline_mode = #tpu.pipeline_mode<synchronous>, transform_indices = @transform_6, window_bounds = array<i64: 4, 32, 128>}, {pipeline_mode = #tpu.pipeline_mode<synchronous>, transform_indices = @transform_7, window_bounds = array<i64: 4, 7, 128>}, {pipeline_mode = #tpu.pipeline_mode<synchronous>, transform_indices = @transform_8, window_bounds = array<i64: 2, 32>}, {transform_indices = @transform_9, window_bounds = array<i64: 1, 8, 32>}, {transform_indices = @transform_10, window_bounds = array<i64: 1, 8, 32>}]} {
    %c0 = arith.constant 0 : index
    %c0_0 = arith.constant 0 : index
    %c0_1 = arith.constant 0 : index
    %0 = vector.load %arg2[%c0, %c0_0, %c0_1] : memref<1x8x32xf32, #tpu.memory_space<vmem>>, vector<1x8x32xf32>
    %1 = vector.shape_cast %0 : vector<1x8x32xf32> to vector<8x32xf32>
    %c0_2 = arith.constant 0 : index
    %c0_3 = arith.constant 0 : index
    %c0_4 = arith.constant 0 : index
    %2 = vector.load %arg1[%c0_2, %c0_3, %c0_4] : memref<1x8x32xf32, #tpu.memory_space<vmem>>, vector<1x8x32xf32>
    %3 = vector.shape_cast %2 : vector<1x8x32xf32> to vector<8x32xf32>
    %4 = tpu.iota {dimensions = array<i32: 0>} : vector<8x8xi32>
    %5 = tpu.iota {dimensions = array<i32: 1>} : vector<8x8xi32>
    %6 = arith.cmpi sgt, %5, %4 : vector<8x8xi32>
    %7 = vector.shape_cast %6 : vector<8x8xi1> to vector<1x8x8xi1>
    %8 = vector.shape_cast %7 : vector<1x8x8xi1> to vector<1x8x8xi1>
    %9 = vector.broadcast %8 : vector<1x8x8xi1> to vector<4x8x8xi1>
    %10 = arith.addf %3, %1 : vector<8x32xf32>
    %c0_5 = arith.constant 0 : index
    %c0_6 = arith.constant 0 : index
    %c0_7 = arith.constant 0 : index
    %11 = vector.load %arg8[%c0_5, %c0_6, %c0_7] : memref<4x7x128xf32, #tpu.memory_space<vmem>>, vector<1x1x32xf32>
    %12 = vector.shape_cast %11 : vector<1x1x32xf32> to vector<32xf32>
    %c0_8 = arith.constant 0 : index
    %c1 = arith.constant 1 : index
    %c0_9 = arith.constant 0 : index
    %13 = vector.load %arg8[%c0_8, %c1, %c0_9] : memref<4x7x128xf32, #tpu.memory_space<vmem>>, vector<1x1x32xf32>
    %14 = vector.shape_cast %13 : vector<1x1x32xf32> to vector<32xf32>
    %cst = arith.constant dense<0.000000e+00> : vector<8xf32>
    %15 = vector.multi_reduction <add>, %10, %cst [1] : vector<8x32xf32> to vector<8xf32>
    %16 = vector.shape_cast %15 : vector<8xf32> to vector<8x1xf32>
    %cst_10 = arith.constant 3.200000e+01 : f32
    %17 = vector.broadcast %cst_10 : f32 to vector<8x1xf32>
    %18 = arith.divf %16, %17 : vector<8x1xf32>
    %19 = vector.broadcast %18 : vector<8x1xf32> to vector<8x32xf32>
    %20 = arith.subf %10, %19 : vector<8x32xf32>
    %21 = arith.mulf %20, %20 : vector<8x32xf32>
    %cst_11 = arith.constant dense<0.000000e+00> : vector<8xf32>
    %22 = vector.multi_reduction <add>, %21, %cst_11 [1] : vector<8x32xf32> to vector<8xf32>
    %23 = vector.shape_cast %22 : vector<8xf32> to vector<8x1xf32>
    %cst_12 = arith.constant 3.200000e+01 : f32
    %24 = vector.broadcast %cst_12 : f32 to vector<8x1xf32>
    %25 = arith.divf %23, %24 : vector<8x1xf32>
    %cst_13 = arith.constant 9.99999974E-6 : f32
    %26 = vector.broadcast %cst_13 : f32 to vector<8x1xf32>
    %27 = arith.addf %25, %26 : vector<8x1xf32>
    %28 = math.rsqrt %27 : vector<8x1xf32>
    %29 = vector.broadcast %28 : vector<8x1xf32> to vector<8x32xf32>
    %30 = arith.mulf %20, %29 : vector<8x32xf32>
    %31 = vector.shape_cast %12 : vector<32xf32> to vector<1x32xf32>
    %32 = vector.broadcast %31 : vector<1x32xf32> to vector<8x32xf32>
    %33 = arith.mulf %30, %32 : vector<8x32xf32>
    %34 = vector.shape_cast %14 : vector<32xf32> to vector<1x32xf32>
    %35 = vector.broadcast %34 : vector<1x32xf32> to vector<8x32xf32>
    %36 = arith.addf %33, %35 : vector<8x32xf32>
    %37 = vector.shape_cast %36 : vector<8x32xf32> to vector<1x8x32xf32>
    %38 = vector.shape_cast %37 : vector<1x8x32xf32> to vector<1x8x32xf32>
    %39 = vector.broadcast %38 : vector<1x8x32xf32> to vector<4x8x32xf32>
    %c0_14 = arith.constant 0 : index
    %c0_15 = arith.constant 0 : index
    %c0_16 = arith.constant 0 : index
    %c0_17 = arith.constant 0 : index
    %40 = vector.load %arg3[%c0_14, %c0_15, %c0_16, %c0_17] : memref<12x4x8x32xf32, #tpu.memory_space<vmem>>, vector<1x4x8x32xf32>
    %41 = vector.shape_cast %40 : vector<1x4x8x32xf32> to vector<4x8x32xf32>
    %cst_18 = arith.constant dense<0.000000e+00> : vector<4x8x8xf32>
    %42 = tpu.matmul %39, %41, %cst_18 {dimension_numbers = #tpu.dot_dimension_numbers<[2], [2], [1], [1], [0, 0, 0, 1, 1, 1], [0], [0]>} : vector<4x8x32xf32>, vector<4x8x32xf32>, vector<4x8x8xf32> -> vector<4x8x8xf32>
    %c0_19 = arith.constant 0 : index
    %c0_20 = arith.constant 0 : index
    %c0_21 = arith.constant 0 : index
    %c0_22 = arith.constant 0 : index
    %43 = vector.load %arg4[%c0_19, %c0_20, %c0_21, %c0_22] : memref<12x4x1x8xf32, #tpu.memory_space<vmem>>, vector<1x4x1x8xf32>
    %44 = vector.shape_cast %43 : vector<1x4x1x8xf32> to vector<4x1x8xf32>
    %45 = vector.broadcast %44 : vector<4x1x8xf32> to vector<4x8x8xf32>
    %46 = arith.addf %42, %45 : vector<4x8x8xf32>
    %c1_23 = arith.constant 1 : index
    %c0_24 = arith.constant 0 : index
    %c0_25 = arith.constant 0 : index
    %c0_26 = arith.constant 0 : index
    %47 = vector.load %arg3[%c1_23, %c0_24, %c0_25, %c0_26] : memref<12x4x8x32xf32, #tpu.memory_space<vmem>>, vector<1x4x8x32xf32>
    %48 = vector.shape_cast %47 : vector<1x4x8x32xf32> to vector<4x8x32xf32>
    %cst_27 = arith.constant dense<0.000000e+00> : vector<4x8x8xf32>
    %49 = tpu.matmul %39, %48, %cst_27 {dimension_numbers = #tpu.dot_dimension_numbers<[2], [2], [1], [1], [0, 0, 0, 1, 1, 1], [0], [0]>} : vector<4x8x32xf32>, vector<4x8x32xf32>, vector<4x8x8xf32> -> vector<4x8x8xf32>
    %c1_28 = arith.constant 1 : index
    %c0_29 = arith.constant 0 : index
    %c0_30 = arith.constant 0 : index
    %c0_31 = arith.constant 0 : index
    %50 = vector.load %arg4[%c1_28, %c0_29, %c0_30, %c0_31] : memref<12x4x1x8xf32, #tpu.memory_space<vmem>>, vector<1x4x1x8xf32>
    %51 = vector.shape_cast %50 : vector<1x4x1x8xf32> to vector<4x1x8xf32>
    %52 = vector.broadcast %51 : vector<4x1x8xf32> to vector<4x8x8xf32>
    %53 = arith.addf %49, %52 : vector<4x8x8xf32>
    %c2 = arith.constant 2 : index
    %c0_32 = arith.constant 0 : index
    %c0_33 = arith.constant 0 : index
    %c0_34 = arith.constant 0 : index
    %54 = vector.load %arg3[%c2, %c0_32, %c0_33, %c0_34] : memref<12x4x8x32xf32, #tpu.memory_space<vmem>>, vector<1x4x8x32xf32>
    %55 = vector.shape_cast %54 : vector<1x4x8x32xf32> to vector<4x8x32xf32>
    %cst_35 = arith.constant dense<0.000000e+00> : vector<4x8x8xf32>
    %56 = tpu.matmul %39, %55, %cst_35 {dimension_numbers = #tpu.dot_dimension_numbers<[2], [2], [1], [1], [0, 0, 0, 1, 1, 1], [0], [0]>} : vector<4x8x32xf32>, vector<4x8x32xf32>, vector<4x8x8xf32> -> vector<4x8x8xf32>
    %c2_36 = arith.constant 2 : index
    %c0_37 = arith.constant 0 : index
    %c0_38 = arith.constant 0 : index
    %c0_39 = arith.constant 0 : index
    %57 = vector.load %arg4[%c2_36, %c0_37, %c0_38, %c0_39] : memref<12x4x1x8xf32, #tpu.memory_space<vmem>>, vector<1x4x1x8xf32>
    %58 = vector.shape_cast %57 : vector<1x4x1x8xf32> to vector<4x1x8xf32>
    %59 = vector.broadcast %58 : vector<4x1x8xf32> to vector<4x8x8xf32>
    %60 = arith.addf %56, %59 : vector<4x8x8xf32>
    %cst_40 = arith.constant dense<0.000000e+00> : vector<4x8x8xf32>
    %61 = tpu.matmul %46, %53, %cst_40 {dimension_numbers = #tpu.dot_dimension_numbers<[2], [2], [1], [1], [0, 0, 0, 1, 1, 1], [0], [0]>} : vector<4x8x8xf32>, vector<4x8x8xf32>, vector<4x8x8xf32> -> vector<4x8x8xf32>
    %cst_41 = arith.constant 0.353553385 : f32
    %62 = vector.broadcast %cst_41 : f32 to vector<4x8x8xf32>
    %63 = arith.mulf %61, %62 : vector<4x8x8xf32>
    %cst_42 = arith.constant -1.000000e+30 : f32
    %64 = vector.broadcast %cst_42 : f32 to vector<4x8x8xf32>
    %65 = arith.select %9, %64, %63 : vector<4x8x8xi1>, vector<4x8x8xf32>
    %cst_43 = arith.constant dense<0xFF800000> : vector<4x8xf32>
    %66 = vector.multi_reduction <maximumf>, %65, %cst_43 [2] : vector<4x8x8xf32> to vector<4x8xf32>
    %67 = vector.shape_cast %66 : vector<4x8xf32> to vector<4x8x1xf32>
    %68 = vector.broadcast %67 : vector<4x8x1xf32> to vector<4x8x8xf32>
    %69 = arith.subf %65, %68 : vector<4x8x8xf32>
    %70 = math.exp %69 : vector<4x8x8xf32>
    %cst_44 = arith.constant dense<0.000000e+00> : vector<4x8xf32>
    %71 = vector.multi_reduction <add>, %70, %cst_44 [2] : vector<4x8x8xf32> to vector<4x8xf32>
    %72 = vector.shape_cast %71 : vector<4x8xf32> to vector<4x8x1xf32>
    %73 = vector.broadcast %72 : vector<4x8x1xf32> to vector<4x8x8xf32>
    %74 = arith.divf %70, %73 : vector<4x8x8xf32>
    %cst_45 = arith.constant dense<0.000000e+00> : vector<4x8x8xf32>
    %75 = tpu.matmul %74, %60, %cst_45 {dimension_numbers = #tpu.dot_dimension_numbers<[2], [1], [1], [2], [0, 0, 0, 1, 1, 2], [0], [0]>} : vector<4x8x8xf32>, vector<4x8x8xf32>, vector<4x8x8xf32> -> vector<4x8x8xf32>
    %c0_46 = arith.constant 0 : index
    %c0_47 = arith.constant 0 : index
    %c0_48 = arith.constant 0 : index
    %c0_49 = arith.constant 0 : index
    %76 = vector.load %arg5[%c0_46, %c0_47, %c0_48, %c0_49] : memref<4x4x8x32xf32, #tpu.memory_space<vmem>>, vector<1x4x8x32xf32>
    %77 = vector.shape_cast %76 : vector<1x4x8x32xf32> to vector<4x8x32xf32>
    %cst_50 = arith.constant dense<0.000000e+00> : vector<4x8x32xf32>
    %78 = tpu.matmul %75, %77, %cst_50 {dimension_numbers = #tpu.dot_dimension_numbers<[2], [1], [1], [2], [0, 0, 0, 1, 1, 2], [0], [0]>} : vector<4x8x8xf32>, vector<4x8x32xf32>, vector<4x8x32xf32> -> vector<4x8x32xf32>
    %79 = vector.extract_strided_slice %78 {offsets = [0, 0, 0], sizes = [1, 8, 32], strides = [1, 1, 1]} : vector<4x8x32xf32> to vector<1x8x32xf32>
    %80 = vector.shape_cast %79 : vector<1x8x32xf32> to vector<8x32xf32>
    %81 = vector.extract_strided_slice %78 {offsets = [1, 0, 0], sizes = [1, 8, 32], strides = [1, 1, 1]} : vector<4x8x32xf32> to vector<1x8x32xf32>
    %82 = vector.shape_cast %81 : vector<1x8x32xf32> to vector<8x32xf32>
    %83 = arith.addf %80, %82 : vector<8x32xf32>
    %84 = vector.extract_strided_slice %78 {offsets = [2, 0, 0], sizes = [1, 8, 32], strides = [1, 1, 1]} : vector<4x8x32xf32> to vector<1x8x32xf32>
    %85 = vector.shape_cast %84 : vector<1x8x32xf32> to vector<8x32xf32>
    %86 = arith.addf %83, %85 : vector<8x32xf32>
    %87 = vector.extract_strided_slice %78 {offsets = [3, 0, 0], sizes = [1, 8, 32], strides = [1, 1, 1]} : vector<4x8x32xf32> to vector<1x8x32xf32>
    %88 = vector.shape_cast %87 : vector<1x8x32xf32> to vector<8x32xf32>
    %89 = arith.addf %86, %88 : vector<8x32xf32>
    %c0_51 = arith.constant 0 : index
    %c4 = arith.constant 4 : index
    %c0_52 = arith.constant 0 : index
    %90 = vector.load %arg8[%c0_51, %c4, %c0_52] : memref<4x7x128xf32, #tpu.memory_space<vmem>>, vector<1x1x32xf32>
    %91 = vector.shape_cast %90 : vector<1x1x32xf32> to vector<32xf32>
    %92 = vector.shape_cast %91 : vector<32xf32> to vector<1x32xf32>
    %93 = vector.broadcast %92 : vector<1x32xf32> to vector<8x32xf32>
    %94 = arith.addf %89, %93 : vector<8x32xf32>
    %95 = arith.addf %36, %94 : vector<8x32xf32>
    %c0_53 = arith.constant 0 : index
    %c2_54 = arith.constant 2 : index
    %c0_55 = arith.constant 0 : index
    %96 = vector.load %arg8[%c0_53, %c2_54, %c0_55] : memref<4x7x128xf32, #tpu.memory_space<vmem>>, vector<1x1x32xf32>
    %97 = vector.shape_cast %96 : vector<1x1x32xf32> to vector<32xf32>
    %c0_56 = arith.constant 0 : index
    %c3 = arith.constant 3 : index
    %c0_57 = arith.constant 0 : index
    %98 = vector.load %arg8[%c0_56, %c3, %c0_57] : memref<4x7x128xf32, #tpu.memory_space<vmem>>, vector<1x1x32xf32>
    %99 = vector.shape_cast %98 : vector<1x1x32xf32> to vector<32xf32>
    %cst_58 = arith.constant dense<0.000000e+00> : vector<8xf32>
    %100 = vector.multi_reduction <add>, %95, %cst_58 [1] : vector<8x32xf32> to vector<8xf32>
    %101 = vector.shape_cast %100 : vector<8xf32> to vector<8x1xf32>
    %cst_59 = arith.constant 3.200000e+01 : f32
    %102 = vector.broadcast %cst_59 : f32 to vector<8x1xf32>
    %103 = arith.divf %101, %102 : vector<8x1xf32>
    %104 = vector.broadcast %103 : vector<8x1xf32> to vector<8x32xf32>
    %105 = arith.subf %95, %104 : vector<8x32xf32>
    %106 = arith.mulf %105, %105 : vector<8x32xf32>
    %cst_60 = arith.constant dense<0.000000e+00> : vector<8xf32>
    %107 = vector.multi_reduction <add>, %106, %cst_60 [1] : vector<8x32xf32> to vector<8xf32>
    %108 = vector.shape_cast %107 : vector<8xf32> to vector<8x1xf32>
    %cst_61 = arith.constant 3.200000e+01 : f32
    %109 = vector.broadcast %cst_61 : f32 to vector<8x1xf32>
    %110 = arith.divf %108, %109 : vector<8x1xf32>
    %cst_62 = arith.constant 9.99999974E-6 : f32
    %111 = vector.broadcast %cst_62 : f32 to vector<8x1xf32>
    %112 = arith.addf %110, %111 : vector<8x1xf32>
    %113 = math.rsqrt %112 : vector<8x1xf32>
    %114 = vector.broadcast %113 : vector<8x1xf32> to vector<8x32xf32>
    %115 = arith.mulf %105, %114 : vector<8x32xf32>
    %116 = vector.shape_cast %97 : vector<32xf32> to vector<1x32xf32>
    %117 = vector.broadcast %116 : vector<1x32xf32> to vector<8x32xf32>
    %118 = arith.mulf %115, %117 : vector<8x32xf32>
    %119 = vector.shape_cast %99 : vector<32xf32> to vector<1x32xf32>
    %120 = vector.broadcast %119 : vector<1x32xf32> to vector<8x32xf32>
    %121 = arith.addf %118, %120 : vector<8x32xf32>
    %c0_63 = arith.constant 0 : index
    %c0_64 = arith.constant 0 : index
    %c0_65 = arith.constant 0 : index
    %122 = vector.load %arg6[%c0_63, %c0_64, %c0_65] : memref<4x128x32xf32, #tpu.memory_space<vmem>>, vector<1x128x32xf32>
    %123 = vector.shape_cast %122 : vector<1x128x32xf32> to vector<128x32xf32>
    %cst_66 = arith.constant dense<0.000000e+00> : vector<8x128xf32>
    %124 = tpu.matmul %121, %123, %cst_66 {dimension_numbers = #tpu.dot_dimension_numbers<[1], [1], [0], [0], [0, 0, 1, 0], [], []>} : vector<8x32xf32>, vector<128x32xf32>, vector<8x128xf32> -> vector<8x128xf32>
    %c0_67 = arith.constant 0 : index
    %c6 = arith.constant 6 : index
    %c0_68 = arith.constant 0 : index
    %125 = vector.load %arg8[%c0_67, %c6, %c0_68] : memref<4x7x128xf32, #tpu.memory_space<vmem>>, vector<1x1x128xf32>
    %126 = vector.shape_cast %125 : vector<1x1x128xf32> to vector<128xf32>
    %127 = vector.shape_cast %126 : vector<128xf32> to vector<1x128xf32>
    %128 = vector.broadcast %127 : vector<1x128xf32> to vector<8x128xf32>
    %129 = arith.addf %124, %128 : vector<8x128xf32>
    %cst_69 = arith.constant 5.000000e-01 : f32
    %130 = vector.broadcast %cst_69 : f32 to vector<8x128xf32>
    %131 = arith.mulf %130, %129 : vector<8x128xf32>
    %cst_70 = arith.constant 0.707106769 : f32
    %132 = vector.broadcast %cst_70 : f32 to vector<8x128xf32>
    %133 = arith.mulf %129, %132 : vector<8x128xf32>
    %134 = math.erf %133 : vector<8x128xf32>
    %cst_71 = arith.constant 1.000000e+00 : f32
    %135 = vector.broadcast %cst_71 : f32 to vector<8x128xf32>
    %136 = arith.addf %135, %134 : vector<8x128xf32>
    %137 = arith.mulf %131, %136 : vector<8x128xf32>
    %c0_72 = arith.constant 0 : index
    %c0_73 = arith.constant 0 : index
    %c0_74 = arith.constant 0 : index
    %138 = vector.load %arg7[%c0_72, %c0_73, %c0_74] : memref<4x32x128xf32, #tpu.memory_space<vmem>>, vector<1x32x128xf32>
    %139 = vector.shape_cast %138 : vector<1x32x128xf32> to vector<32x128xf32>
    %cst_75 = arith.constant dense<0.000000e+00> : vector<8x32xf32>
    %140 = tpu.matmul %137, %139, %cst_75 {dimension_numbers = #tpu.dot_dimension_numbers<[1], [1], [0], [0], [0, 0, 1, 0], [], []>} : vector<8x128xf32>, vector<32x128xf32>, vector<8x32xf32> -> vector<8x32xf32>
    %c0_76 = arith.constant 0 : index
    %c5 = arith.constant 5 : index
    %c0_77 = arith.constant 0 : index
    %141 = vector.load %arg8[%c0_76, %c5, %c0_77] : memref<4x7x128xf32, #tpu.memory_space<vmem>>, vector<1x1x32xf32>
    %142 = vector.shape_cast %141 : vector<1x1x32xf32> to vector<32xf32>
    %143 = vector.shape_cast %142 : vector<32xf32> to vector<1x32xf32>
    %144 = vector.broadcast %143 : vector<1x32xf32> to vector<8x32xf32>
    %145 = arith.addf %140, %144 : vector<8x32xf32>
    %146 = arith.addf %95, %145 : vector<8x32xf32>
    %147 = arith.addf %146, %1 : vector<8x32xf32>
    %c1_78 = arith.constant 1 : index
    %c0_79 = arith.constant 0 : index
    %c0_80 = arith.constant 0 : index
    %148 = vector.load %arg8[%c1_78, %c0_79, %c0_80] : memref<4x7x128xf32, #tpu.memory_space<vmem>>, vector<1x1x32xf32>
    %149 = vector.shape_cast %148 : vector<1x1x32xf32> to vector<32xf32>
    %c1_81 = arith.constant 1 : index
    %c1_82 = arith.constant 1 : index
    %c0_83 = arith.constant 0 : index
    %150 = vector.load %arg8[%c1_81, %c1_82, %c0_83] : memref<4x7x128xf32, #tpu.memory_space<vmem>>, vector<1x1x32xf32>
    %151 = vector.shape_cast %150 : vector<1x1x32xf32> to vector<32xf32>
    %cst_84 = arith.constant dense<0.000000e+00> : vector<8xf32>
    %152 = vector.multi_reduction <add>, %147, %cst_84 [1] : vector<8x32xf32> to vector<8xf32>
    %153 = vector.shape_cast %152 : vector<8xf32> to vector<8x1xf32>
    %cst_85 = arith.constant 3.200000e+01 : f32
    %154 = vector.broadcast %cst_85 : f32 to vector<8x1xf32>
    %155 = arith.divf %153, %154 : vector<8x1xf32>
    %156 = vector.broadcast %155 : vector<8x1xf32> to vector<8x32xf32>
    %157 = arith.subf %147, %156 : vector<8x32xf32>
    %158 = arith.mulf %157, %157 : vector<8x32xf32>
    %cst_86 = arith.constant dense<0.000000e+00> : vector<8xf32>
    %159 = vector.multi_reduction <add>, %158, %cst_86 [1] : vector<8x32xf32> to vector<8xf32>
    %160 = vector.shape_cast %159 : vector<8xf32> to vector<8x1xf32>
    %cst_87 = arith.constant 3.200000e+01 : f32
    %161 = vector.broadcast %cst_87 : f32 to vector<8x1xf32>
    %162 = arith.divf %160, %161 : vector<8x1xf32>
    %cst_88 = arith.constant 9.99999974E-6 : f32
    %163 = vector.broadcast %cst_88 : f32 to vector<8x1xf32>
    %164 = arith.addf %162, %163 : vector<8x1xf32>
    %165 = math.rsqrt %164 : vector<8x1xf32>
    %166 = vector.broadcast %165 : vector<8x1xf32> to vector<8x32xf32>
    %167 = arith.mulf %157, %166 : vector<8x32xf32>
    %168 = vector.shape_cast %149 : vector<32xf32> to vector<1x32xf32>
    %169 = vector.broadcast %168 : vector<1x32xf32> to vector<8x32xf32>
    %170 = arith.mulf %167, %169 : vector<8x32xf32>
    %171 = vector.shape_cast %151 : vector<32xf32> to vector<1x32xf32>
    %172 = vector.broadcast %171 : vector<1x32xf32> to vector<8x32xf32>
    %173 = arith.addf %170, %172 : vector<8x32xf32>
    %174 = vector.shape_cast %173 : vector<8x32xf32> to vector<1x8x32xf32>
    %175 = vector.shape_cast %174 : vector<1x8x32xf32> to vector<1x8x32xf32>
    %176 = vector.broadcast %175 : vector<1x8x32xf32> to vector<4x8x32xf32>
    %c3_89 = arith.constant 3 : index
    %c0_90 = arith.constant 0 : index
    %c0_91 = arith.constant 0 : index
    %c0_92 = arith.constant 0 : index
    %177 = vector.load %arg3[%c3_89, %c0_90, %c0_91, %c0_92] : memref<12x4x8x32xf32, #tpu.memory_space<vmem>>, vector<1x4x8x32xf32>
    %178 = vector.shape_cast %177 : vector<1x4x8x32xf32> to vector<4x8x32xf32>
    %cst_93 = arith.constant dense<0.000000e+00> : vector<4x8x8xf32>
    %179 = tpu.matmul %176, %178, %cst_93 {dimension_numbers = #tpu.dot_dimension_numbers<[2], [2], [1], [1], [0, 0, 0, 1, 1, 1], [0], [0]>} : vector<4x8x32xf32>, vector<4x8x32xf32>, vector<4x8x8xf32> -> vector<4x8x8xf32>
    %c3_94 = arith.constant 3 : index
    %c0_95 = arith.constant 0 : index
    %c0_96 = arith.constant 0 : index
    %c0_97 = arith.constant 0 : index
    %180 = vector.load %arg4[%c3_94, %c0_95, %c0_96, %c0_97] : memref<12x4x1x8xf32, #tpu.memory_space<vmem>>, vector<1x4x1x8xf32>
    %181 = vector.shape_cast %180 : vector<1x4x1x8xf32> to vector<4x1x8xf32>
    %182 = vector.broadcast %181 : vector<4x1x8xf32> to vector<4x8x8xf32>
    %183 = arith.addf %179, %182 : vector<4x8x8xf32>
    %c4_98 = arith.constant 4 : index
    %c0_99 = arith.constant 0 : index
    %c0_100 = arith.constant 0 : index
    %c0_101 = arith.constant 0 : index
    %184 = vector.load %arg3[%c4_98, %c0_99, %c0_100, %c0_101] : memref<12x4x8x32xf32, #tpu.memory_space<vmem>>, vector<1x4x8x32xf32>
    %185 = vector.shape_cast %184 : vector<1x4x8x32xf32> to vector<4x8x32xf32>
    %cst_102 = arith.constant dense<0.000000e+00> : vector<4x8x8xf32>
    %186 = tpu.matmul %176, %185, %cst_102 {dimension_numbers = #tpu.dot_dimension_numbers<[2], [2], [1], [1], [0, 0, 0, 1, 1, 1], [0], [0]>} : vector<4x8x32xf32>, vector<4x8x32xf32>, vector<4x8x8xf32> -> vector<4x8x8xf32>
    %c4_103 = arith.constant 4 : index
    %c0_104 = arith.constant 0 : index
    %c0_105 = arith.constant 0 : index
    %c0_106 = arith.constant 0 : index
    %187 = vector.load %arg4[%c4_103, %c0_104, %c0_105, %c0_106] : memref<12x4x1x8xf32, #tpu.memory_space<vmem>>, vector<1x4x1x8xf32>
    %188 = vector.shape_cast %187 : vector<1x4x1x8xf32> to vector<4x1x8xf32>
    %189 = vector.broadcast %188 : vector<4x1x8xf32> to vector<4x8x8xf32>
    %190 = arith.addf %186, %189 : vector<4x8x8xf32>
    %c5_107 = arith.constant 5 : index
    %c0_108 = arith.constant 0 : index
    %c0_109 = arith.constant 0 : index
    %c0_110 = arith.constant 0 : index
    %191 = vector.load %arg3[%c5_107, %c0_108, %c0_109, %c0_110] : memref<12x4x8x32xf32, #tpu.memory_space<vmem>>, vector<1x4x8x32xf32>
    %192 = vector.shape_cast %191 : vector<1x4x8x32xf32> to vector<4x8x32xf32>
    %cst_111 = arith.constant dense<0.000000e+00> : vector<4x8x8xf32>
    %193 = tpu.matmul %176, %192, %cst_111 {dimension_numbers = #tpu.dot_dimension_numbers<[2], [2], [1], [1], [0, 0, 0, 1, 1, 1], [0], [0]>} : vector<4x8x32xf32>, vector<4x8x32xf32>, vector<4x8x8xf32> -> vector<4x8x8xf32>
    %c5_112 = arith.constant 5 : index
    %c0_113 = arith.constant 0 : index
    %c0_114 = arith.constant 0 : index
    %c0_115 = arith.constant 0 : index
    %194 = vector.load %arg4[%c5_112, %c0_113, %c0_114, %c0_115] : memref<12x4x1x8xf32, #tpu.memory_space<vmem>>, vector<1x4x1x8xf32>
    %195 = vector.shape_cast %194 : vector<1x4x1x8xf32> to vector<4x1x8xf32>
    %196 = vector.broadcast %195 : vector<4x1x8xf32> to vector<4x8x8xf32>
    %197 = arith.addf %193, %196 : vector<4x8x8xf32>
    %cst_116 = arith.constant dense<0.000000e+00> : vector<4x8x8xf32>
    %198 = tpu.matmul %183, %190, %cst_116 {dimension_numbers = #tpu.dot_dimension_numbers<[2], [2], [1], [1], [0, 0, 0, 1, 1, 1], [0], [0]>} : vector<4x8x8xf32>, vector<4x8x8xf32>, vector<4x8x8xf32> -> vector<4x8x8xf32>
    %cst_117 = arith.constant 0.353553385 : f32
    %199 = vector.broadcast %cst_117 : f32 to vector<4x8x8xf32>
    %200 = arith.mulf %198, %199 : vector<4x8x8xf32>
    %cst_118 = arith.constant -1.000000e+30 : f32
    %201 = vector.broadcast %cst_118 : f32 to vector<4x8x8xf32>
    %202 = arith.select %9, %201, %200 : vector<4x8x8xi1>, vector<4x8x8xf32>
    %cst_119 = arith.constant dense<0xFF800000> : vector<4x8xf32>
    %203 = vector.multi_reduction <maximumf>, %202, %cst_119 [2] : vector<4x8x8xf32> to vector<4x8xf32>
    %204 = vector.shape_cast %203 : vector<4x8xf32> to vector<4x8x1xf32>
    %205 = vector.broadcast %204 : vector<4x8x1xf32> to vector<4x8x8xf32>
    %206 = arith.subf %202, %205 : vector<4x8x8xf32>
    %207 = math.exp %206 : vector<4x8x8xf32>
    %cst_120 = arith.constant dense<0.000000e+00> : vector<4x8xf32>
    %208 = vector.multi_reduction <add>, %207, %cst_120 [2] : vector<4x8x8xf32> to vector<4x8xf32>
    %209 = vector.shape_cast %208 : vector<4x8xf32> to vector<4x8x1xf32>
    %210 = vector.broadcast %209 : vector<4x8x1xf32> to vector<4x8x8xf32>
    %211 = arith.divf %207, %210 : vector<4x8x8xf32>
    %cst_121 = arith.constant dense<0.000000e+00> : vector<4x8x8xf32>
    %212 = tpu.matmul %211, %197, %cst_121 {dimension_numbers = #tpu.dot_dimension_numbers<[2], [1], [1], [2], [0, 0, 0, 1, 1, 2], [0], [0]>} : vector<4x8x8xf32>, vector<4x8x8xf32>, vector<4x8x8xf32> -> vector<4x8x8xf32>
    %c1_122 = arith.constant 1 : index
    %c0_123 = arith.constant 0 : index
    %c0_124 = arith.constant 0 : index
    %c0_125 = arith.constant 0 : index
    %213 = vector.load %arg5[%c1_122, %c0_123, %c0_124, %c0_125] : memref<4x4x8x32xf32, #tpu.memory_space<vmem>>, vector<1x4x8x32xf32>
    %214 = vector.shape_cast %213 : vector<1x4x8x32xf32> to vector<4x8x32xf32>
    %cst_126 = arith.constant dense<0.000000e+00> : vector<4x8x32xf32>
    %215 = tpu.matmul %212, %214, %cst_126 {dimension_numbers = #tpu.dot_dimension_numbers<[2], [1], [1], [2], [0, 0, 0, 1, 1, 2], [0], [0]>} : vector<4x8x8xf32>, vector<4x8x32xf32>, vector<4x8x32xf32> -> vector<4x8x32xf32>
    %216 = vector.extract_strided_slice %215 {offsets = [0, 0, 0], sizes = [1, 8, 32], strides = [1, 1, 1]} : vector<4x8x32xf32> to vector<1x8x32xf32>
    %217 = vector.shape_cast %216 : vector<1x8x32xf32> to vector<8x32xf32>
    %218 = vector.extract_strided_slice %215 {offsets = [1, 0, 0], sizes = [1, 8, 32], strides = [1, 1, 1]} : vector<4x8x32xf32> to vector<1x8x32xf32>
    %219 = vector.shape_cast %218 : vector<1x8x32xf32> to vector<8x32xf32>
    %220 = arith.addf %217, %219 : vector<8x32xf32>
    %221 = vector.extract_strided_slice %215 {offsets = [2, 0, 0], sizes = [1, 8, 32], strides = [1, 1, 1]} : vector<4x8x32xf32> to vector<1x8x32xf32>
    %222 = vector.shape_cast %221 : vector<1x8x32xf32> to vector<8x32xf32>
    %223 = arith.addf %220, %222 : vector<8x32xf32>
    %224 = vector.extract_strided_slice %215 {offsets = [3, 0, 0], sizes = [1, 8, 32], strides = [1, 1, 1]} : vector<4x8x32xf32> to vector<1x8x32xf32>
    %225 = vector.shape_cast %224 : vector<1x8x32xf32> to vector<8x32xf32>
    %226 = arith.addf %223, %225 : vector<8x32xf32>
    %c1_127 = arith.constant 1 : index
    %c4_128 = arith.constant 4 : index
    %c0_129 = arith.constant 0 : index
    %227 = vector.load %arg8[%c1_127, %c4_128, %c0_129] : memref<4x7x128xf32, #tpu.memory_space<vmem>>, vector<1x1x32xf32>
    %228 = vector.shape_cast %227 : vector<1x1x32xf32> to vector<32xf32>
    %229 = vector.shape_cast %228 : vector<32xf32> to vector<1x32xf32>
    %230 = vector.broadcast %229 : vector<1x32xf32> to vector<8x32xf32>
    %231 = arith.addf %226, %230 : vector<8x32xf32>
    %232 = arith.addf %173, %231 : vector<8x32xf32>
    %c1_130 = arith.constant 1 : index
    %c2_131 = arith.constant 2 : index
    %c0_132 = arith.constant 0 : index
    %233 = vector.load %arg8[%c1_130, %c2_131, %c0_132] : memref<4x7x128xf32, #tpu.memory_space<vmem>>, vector<1x1x32xf32>
    %234 = vector.shape_cast %233 : vector<1x1x32xf32> to vector<32xf32>
    %c1_133 = arith.constant 1 : index
    %c3_134 = arith.constant 3 : index
    %c0_135 = arith.constant 0 : index
    %235 = vector.load %arg8[%c1_133, %c3_134, %c0_135] : memref<4x7x128xf32, #tpu.memory_space<vmem>>, vector<1x1x32xf32>
    %236 = vector.shape_cast %235 : vector<1x1x32xf32> to vector<32xf32>
    %cst_136 = arith.constant dense<0.000000e+00> : vector<8xf32>
    %237 = vector.multi_reduction <add>, %232, %cst_136 [1] : vector<8x32xf32> to vector<8xf32>
    %238 = vector.shape_cast %237 : vector<8xf32> to vector<8x1xf32>
    %cst_137 = arith.constant 3.200000e+01 : f32
    %239 = vector.broadcast %cst_137 : f32 to vector<8x1xf32>
    %240 = arith.divf %238, %239 : vector<8x1xf32>
    %241 = vector.broadcast %240 : vector<8x1xf32> to vector<8x32xf32>
    %242 = arith.subf %232, %241 : vector<8x32xf32>
    %243 = arith.mulf %242, %242 : vector<8x32xf32>
    %cst_138 = arith.constant dense<0.000000e+00> : vector<8xf32>
    %244 = vector.multi_reduction <add>, %243, %cst_138 [1] : vector<8x32xf32> to vector<8xf32>
    %245 = vector.shape_cast %244 : vector<8xf32> to vector<8x1xf32>
    %cst_139 = arith.constant 3.200000e+01 : f32
    %246 = vector.broadcast %cst_139 : f32 to vector<8x1xf32>
    %247 = arith.divf %245, %246 : vector<8x1xf32>
    %cst_140 = arith.constant 9.99999974E-6 : f32
    %248 = vector.broadcast %cst_140 : f32 to vector<8x1xf32>
    %249 = arith.addf %247, %248 : vector<8x1xf32>
    %250 = math.rsqrt %249 : vector<8x1xf32>
    %251 = vector.broadcast %250 : vector<8x1xf32> to vector<8x32xf32>
    %252 = arith.mulf %242, %251 : vector<8x32xf32>
    %253 = vector.shape_cast %234 : vector<32xf32> to vector<1x32xf32>
    %254 = vector.broadcast %253 : vector<1x32xf32> to vector<8x32xf32>
    %255 = arith.mulf %252, %254 : vector<8x32xf32>
    %256 = vector.shape_cast %236 : vector<32xf32> to vector<1x32xf32>
    %257 = vector.broadcast %256 : vector<1x32xf32> to vector<8x32xf32>
    %258 = arith.addf %255, %257 : vector<8x32xf32>
    %c1_141 = arith.constant 1 : index
    %c0_142 = arith.constant 0 : index
    %c0_143 = arith.constant 0 : index
    %259 = vector.load %arg6[%c1_141, %c0_142, %c0_143] : memref<4x128x32xf32, #tpu.memory_space<vmem>>, vector<1x128x32xf32>
    %260 = vector.shape_cast %259 : vector<1x128x32xf32> to vector<128x32xf32>
    %cst_144 = arith.constant dense<0.000000e+00> : vector<8x128xf32>
    %261 = tpu.matmul %258, %260, %cst_144 {dimension_numbers = #tpu.dot_dimension_numbers<[1], [1], [0], [0], [0, 0, 1, 0], [], []>} : vector<8x32xf32>, vector<128x32xf32>, vector<8x128xf32> -> vector<8x128xf32>
    %c1_145 = arith.constant 1 : index
    %c6_146 = arith.constant 6 : index
    %c0_147 = arith.constant 0 : index
    %262 = vector.load %arg8[%c1_145, %c6_146, %c0_147] : memref<4x7x128xf32, #tpu.memory_space<vmem>>, vector<1x1x128xf32>
    %263 = vector.shape_cast %262 : vector<1x1x128xf32> to vector<128xf32>
    %264 = vector.shape_cast %263 : vector<128xf32> to vector<1x128xf32>
    %265 = vector.broadcast %264 : vector<1x128xf32> to vector<8x128xf32>
    %266 = arith.addf %261, %265 : vector<8x128xf32>
    %cst_148 = arith.constant 5.000000e-01 : f32
    %267 = vector.broadcast %cst_148 : f32 to vector<8x128xf32>
    %268 = arith.mulf %267, %266 : vector<8x128xf32>
    %cst_149 = arith.constant 0.707106769 : f32
    %269 = vector.broadcast %cst_149 : f32 to vector<8x128xf32>
    %270 = arith.mulf %266, %269 : vector<8x128xf32>
    %271 = math.erf %270 : vector<8x128xf32>
    %cst_150 = arith.constant 1.000000e+00 : f32
    %272 = vector.broadcast %cst_150 : f32 to vector<8x128xf32>
    %273 = arith.addf %272, %271 : vector<8x128xf32>
    %274 = arith.mulf %268, %273 : vector<8x128xf32>
    %c1_151 = arith.constant 1 : index
    %c0_152 = arith.constant 0 : index
    %c0_153 = arith.constant 0 : index
    %275 = vector.load %arg7[%c1_151, %c0_152, %c0_153] : memref<4x32x128xf32, #tpu.memory_space<vmem>>, vector<1x32x128xf32>
    %276 = vector.shape_cast %275 : vector<1x32x128xf32> to vector<32x128xf32>
    %cst_154 = arith.constant dense<0.000000e+00> : vector<8x32xf32>
    %277 = tpu.matmul %274, %276, %cst_154 {dimension_numbers = #tpu.dot_dimension_numbers<[1], [1], [0], [0], [0, 0, 1, 0], [], []>} : vector<8x128xf32>, vector<32x128xf32>, vector<8x32xf32> -> vector<8x32xf32>
    %c1_155 = arith.constant 1 : index
    %c5_156 = arith.constant 5 : index
    %c0_157 = arith.constant 0 : index
    %278 = vector.load %arg8[%c1_155, %c5_156, %c0_157] : memref<4x7x128xf32, #tpu.memory_space<vmem>>, vector<1x1x32xf32>
    %279 = vector.shape_cast %278 : vector<1x1x32xf32> to vector<32xf32>
    %280 = vector.shape_cast %279 : vector<32xf32> to vector<1x32xf32>
    %281 = vector.broadcast %280 : vector<1x32xf32> to vector<8x32xf32>
    %282 = arith.addf %277, %281 : vector<8x32xf32>
    %283 = arith.addf %232, %282 : vector<8x32xf32>
    %284 = arith.addf %283, %1 : vector<8x32xf32>
    %c2_158 = arith.constant 2 : index
    %c0_159 = arith.constant 0 : index
    %c0_160 = arith.constant 0 : index
    %285 = vector.load %arg8[%c2_158, %c0_159, %c0_160] : memref<4x7x128xf32, #tpu.memory_space<vmem>>, vector<1x1x32xf32>
    %286 = vector.shape_cast %285 : vector<1x1x32xf32> to vector<32xf32>
    %c2_161 = arith.constant 2 : index
    %c1_162 = arith.constant 1 : index
    %c0_163 = arith.constant 0 : index
    %287 = vector.load %arg8[%c2_161, %c1_162, %c0_163] : memref<4x7x128xf32, #tpu.memory_space<vmem>>, vector<1x1x32xf32>
    %288 = vector.shape_cast %287 : vector<1x1x32xf32> to vector<32xf32>
    %cst_164 = arith.constant dense<0.000000e+00> : vector<8xf32>
    %289 = vector.multi_reduction <add>, %284, %cst_164 [1] : vector<8x32xf32> to vector<8xf32>
    %290 = vector.shape_cast %289 : vector<8xf32> to vector<8x1xf32>
    %cst_165 = arith.constant 3.200000e+01 : f32
    %291 = vector.broadcast %cst_165 : f32 to vector<8x1xf32>
    %292 = arith.divf %290, %291 : vector<8x1xf32>
    %293 = vector.broadcast %292 : vector<8x1xf32> to vector<8x32xf32>
    %294 = arith.subf %284, %293 : vector<8x32xf32>
    %295 = arith.mulf %294, %294 : vector<8x32xf32>
    %cst_166 = arith.constant dense<0.000000e+00> : vector<8xf32>
    %296 = vector.multi_reduction <add>, %295, %cst_166 [1] : vector<8x32xf32> to vector<8xf32>
    %297 = vector.shape_cast %296 : vector<8xf32> to vector<8x1xf32>
    %cst_167 = arith.constant 3.200000e+01 : f32
    %298 = vector.broadcast %cst_167 : f32 to vector<8x1xf32>
    %299 = arith.divf %297, %298 : vector<8x1xf32>
    %cst_168 = arith.constant 9.99999974E-6 : f32
    %300 = vector.broadcast %cst_168 : f32 to vector<8x1xf32>
    %301 = arith.addf %299, %300 : vector<8x1xf32>
    %302 = math.rsqrt %301 : vector<8x1xf32>
    %303 = vector.broadcast %302 : vector<8x1xf32> to vector<8x32xf32>
    %304 = arith.mulf %294, %303 : vector<8x32xf32>
    %305 = vector.shape_cast %286 : vector<32xf32> to vector<1x32xf32>
    %306 = vector.broadcast %305 : vector<1x32xf32> to vector<8x32xf32>
    %307 = arith.mulf %304, %306 : vector<8x32xf32>
    %308 = vector.shape_cast %288 : vector<32xf32> to vector<1x32xf32>
    %309 = vector.broadcast %308 : vector<1x32xf32> to vector<8x32xf32>
    %310 = arith.addf %307, %309 : vector<8x32xf32>
    %311 = vector.shape_cast %310 : vector<8x32xf32> to vector<1x8x32xf32>
    %312 = vector.shape_cast %311 : vector<1x8x32xf32> to vector<1x8x32xf32>
    %313 = vector.broadcast %312 : vector<1x8x32xf32> to vector<4x8x32xf32>
    %c6_169 = arith.constant 6 : index
    %c0_170 = arith.constant 0 : index
    %c0_171 = arith.constant 0 : index
    %c0_172 = arith.constant 0 : index
    %314 = vector.load %arg3[%c6_169, %c0_170, %c0_171, %c0_172] : memref<12x4x8x32xf32, #tpu.memory_space<vmem>>, vector<1x4x8x32xf32>
    %315 = vector.shape_cast %314 : vector<1x4x8x32xf32> to vector<4x8x32xf32>
    %cst_173 = arith.constant dense<0.000000e+00> : vector<4x8x8xf32>
    %316 = tpu.matmul %313, %315, %cst_173 {dimension_numbers = #tpu.dot_dimension_numbers<[2], [2], [1], [1], [0, 0, 0, 1, 1, 1], [0], [0]>} : vector<4x8x32xf32>, vector<4x8x32xf32>, vector<4x8x8xf32> -> vector<4x8x8xf32>
    %c6_174 = arith.constant 6 : index
    %c0_175 = arith.constant 0 : index
    %c0_176 = arith.constant 0 : index
    %c0_177 = arith.constant 0 : index
    %317 = vector.load %arg4[%c6_174, %c0_175, %c0_176, %c0_177] : memref<12x4x1x8xf32, #tpu.memory_space<vmem>>, vector<1x4x1x8xf32>
    %318 = vector.shape_cast %317 : vector<1x4x1x8xf32> to vector<4x1x8xf32>
    %319 = vector.broadcast %318 : vector<4x1x8xf32> to vector<4x8x8xf32>
    %320 = arith.addf %316, %319 : vector<4x8x8xf32>
    %c7 = arith.constant 7 : index
    %c0_178 = arith.constant 0 : index
    %c0_179 = arith.constant 0 : index
    %c0_180 = arith.constant 0 : index
    %321 = vector.load %arg3[%c7, %c0_178, %c0_179, %c0_180] : memref<12x4x8x32xf32, #tpu.memory_space<vmem>>, vector<1x4x8x32xf32>
    %322 = vector.shape_cast %321 : vector<1x4x8x32xf32> to vector<4x8x32xf32>
    %cst_181 = arith.constant dense<0.000000e+00> : vector<4x8x8xf32>
    %323 = tpu.matmul %313, %322, %cst_181 {dimension_numbers = #tpu.dot_dimension_numbers<[2], [2], [1], [1], [0, 0, 0, 1, 1, 1], [0], [0]>} : vector<4x8x32xf32>, vector<4x8x32xf32>, vector<4x8x8xf32> -> vector<4x8x8xf32>
    %c7_182 = arith.constant 7 : index
    %c0_183 = arith.constant 0 : index
    %c0_184 = arith.constant 0 : index
    %c0_185 = arith.constant 0 : index
    %324 = vector.load %arg4[%c7_182, %c0_183, %c0_184, %c0_185] : memref<12x4x1x8xf32, #tpu.memory_space<vmem>>, vector<1x4x1x8xf32>
    %325 = vector.shape_cast %324 : vector<1x4x1x8xf32> to vector<4x1x8xf32>
    %326 = vector.broadcast %325 : vector<4x1x8xf32> to vector<4x8x8xf32>
    %327 = arith.addf %323, %326 : vector<4x8x8xf32>
    %c8 = arith.constant 8 : index
    %c0_186 = arith.constant 0 : index
    %c0_187 = arith.constant 0 : index
    %c0_188 = arith.constant 0 : index
    %328 = vector.load %arg3[%c8, %c0_186, %c0_187, %c0_188] : memref<12x4x8x32xf32, #tpu.memory_space<vmem>>, vector<1x4x8x32xf32>
    %329 = vector.shape_cast %328 : vector<1x4x8x32xf32> to vector<4x8x32xf32>
    %cst_189 = arith.constant dense<0.000000e+00> : vector<4x8x8xf32>
    %330 = tpu.matmul %313, %329, %cst_189 {dimension_numbers = #tpu.dot_dimension_numbers<[2], [2], [1], [1], [0, 0, 0, 1, 1, 1], [0], [0]>} : vector<4x8x32xf32>, vector<4x8x32xf32>, vector<4x8x8xf32> -> vector<4x8x8xf32>
    %c8_190 = arith.constant 8 : index
    %c0_191 = arith.constant 0 : index
    %c0_192 = arith.constant 0 : index
    %c0_193 = arith.constant 0 : index
    %331 = vector.load %arg4[%c8_190, %c0_191, %c0_192, %c0_193] : memref<12x4x1x8xf32, #tpu.memory_space<vmem>>, vector<1x4x1x8xf32>
    %332 = vector.shape_cast %331 : vector<1x4x1x8xf32> to vector<4x1x8xf32>
    %333 = vector.broadcast %332 : vector<4x1x8xf32> to vector<4x8x8xf32>
    %334 = arith.addf %330, %333 : vector<4x8x8xf32>
    %cst_194 = arith.constant dense<0.000000e+00> : vector<4x8x8xf32>
    %335 = tpu.matmul %320, %327, %cst_194 {dimension_numbers = #tpu.dot_dimension_numbers<[2], [2], [1], [1], [0, 0, 0, 1, 1, 1], [0], [0]>} : vector<4x8x8xf32>, vector<4x8x8xf32>, vector<4x8x8xf32> -> vector<4x8x8xf32>
    %cst_195 = arith.constant 0.353553385 : f32
    %336 = vector.broadcast %cst_195 : f32 to vector<4x8x8xf32>
    %337 = arith.mulf %335, %336 : vector<4x8x8xf32>
    %cst_196 = arith.constant -1.000000e+30 : f32
    %338 = vector.broadcast %cst_196 : f32 to vector<4x8x8xf32>
    %339 = arith.select %9, %338, %337 : vector<4x8x8xi1>, vector<4x8x8xf32>
    %cst_197 = arith.constant dense<0xFF800000> : vector<4x8xf32>
    %340 = vector.multi_reduction <maximumf>, %339, %cst_197 [2] : vector<4x8x8xf32> to vector<4x8xf32>
    %341 = vector.shape_cast %340 : vector<4x8xf32> to vector<4x8x1xf32>
    %342 = vector.broadcast %341 : vector<4x8x1xf32> to vector<4x8x8xf32>
    %343 = arith.subf %339, %342 : vector<4x8x8xf32>
    %344 = math.exp %343 : vector<4x8x8xf32>
    %cst_198 = arith.constant dense<0.000000e+00> : vector<4x8xf32>
    %345 = vector.multi_reduction <add>, %344, %cst_198 [2] : vector<4x8x8xf32> to vector<4x8xf32>
    %346 = vector.shape_cast %345 : vector<4x8xf32> to vector<4x8x1xf32>
    %347 = vector.broadcast %346 : vector<4x8x1xf32> to vector<4x8x8xf32>
    %348 = arith.divf %344, %347 : vector<4x8x8xf32>
    %cst_199 = arith.constant dense<0.000000e+00> : vector<4x8x8xf32>
    %349 = tpu.matmul %348, %334, %cst_199 {dimension_numbers = #tpu.dot_dimension_numbers<[2], [1], [1], [2], [0, 0, 0, 1, 1, 2], [0], [0]>} : vector<4x8x8xf32>, vector<4x8x8xf32>, vector<4x8x8xf32> -> vector<4x8x8xf32>
    %c2_200 = arith.constant 2 : index
    %c0_201 = arith.constant 0 : index
    %c0_202 = arith.constant 0 : index
    %c0_203 = arith.constant 0 : index
    %350 = vector.load %arg5[%c2_200, %c0_201, %c0_202, %c0_203] : memref<4x4x8x32xf32, #tpu.memory_space<vmem>>, vector<1x4x8x32xf32>
    %351 = vector.shape_cast %350 : vector<1x4x8x32xf32> to vector<4x8x32xf32>
    %cst_204 = arith.constant dense<0.000000e+00> : vector<4x8x32xf32>
    %352 = tpu.matmul %349, %351, %cst_204 {dimension_numbers = #tpu.dot_dimension_numbers<[2], [1], [1], [2], [0, 0, 0, 1, 1, 2], [0], [0]>} : vector<4x8x8xf32>, vector<4x8x32xf32>, vector<4x8x32xf32> -> vector<4x8x32xf32>
    %353 = vector.extract_strided_slice %352 {offsets = [0, 0, 0], sizes = [1, 8, 32], strides = [1, 1, 1]} : vector<4x8x32xf32> to vector<1x8x32xf32>
    %354 = vector.shape_cast %353 : vector<1x8x32xf32> to vector<8x32xf32>
    %355 = vector.extract_strided_slice %352 {offsets = [1, 0, 0], sizes = [1, 8, 32], strides = [1, 1, 1]} : vector<4x8x32xf32> to vector<1x8x32xf32>
    %356 = vector.shape_cast %355 : vector<1x8x32xf32> to vector<8x32xf32>
    %357 = arith.addf %354, %356 : vector<8x32xf32>
    %358 = vector.extract_strided_slice %352 {offsets = [2, 0, 0], sizes = [1, 8, 32], strides = [1, 1, 1]} : vector<4x8x32xf32> to vector<1x8x32xf32>
    %359 = vector.shape_cast %358 : vector<1x8x32xf32> to vector<8x32xf32>
    %360 = arith.addf %357, %359 : vector<8x32xf32>
    %361 = vector.extract_strided_slice %352 {offsets = [3, 0, 0], sizes = [1, 8, 32], strides = [1, 1, 1]} : vector<4x8x32xf32> to vector<1x8x32xf32>
    %362 = vector.shape_cast %361 : vector<1x8x32xf32> to vector<8x32xf32>
    %363 = arith.addf %360, %362 : vector<8x32xf32>
    %c2_205 = arith.constant 2 : index
    %c4_206 = arith.constant 4 : index
    %c0_207 = arith.constant 0 : index
    %364 = vector.load %arg8[%c2_205, %c4_206, %c0_207] : memref<4x7x128xf32, #tpu.memory_space<vmem>>, vector<1x1x32xf32>
    %365 = vector.shape_cast %364 : vector<1x1x32xf32> to vector<32xf32>
    %366 = vector.shape_cast %365 : vector<32xf32> to vector<1x32xf32>
    %367 = vector.broadcast %366 : vector<1x32xf32> to vector<8x32xf32>
    %368 = arith.addf %363, %367 : vector<8x32xf32>
    %369 = arith.addf %310, %368 : vector<8x32xf32>
    %c2_208 = arith.constant 2 : index
    %c2_209 = arith.constant 2 : index
    %c0_210 = arith.constant 0 : index
    %370 = vector.load %arg8[%c2_208, %c2_209, %c0_210] : memref<4x7x128xf32, #tpu.memory_space<vmem>>, vector<1x1x32xf32>
    %371 = vector.shape_cast %370 : vector<1x1x32xf32> to vector<32xf32>
    %c2_211 = arith.constant 2 : index
    %c3_212 = arith.constant 3 : index
    %c0_213 = arith.constant 0 : index
    %372 = vector.load %arg8[%c2_211, %c3_212, %c0_213] : memref<4x7x128xf32, #tpu.memory_space<vmem>>, vector<1x1x32xf32>
    %373 = vector.shape_cast %372 : vector<1x1x32xf32> to vector<32xf32>
    %cst_214 = arith.constant dense<0.000000e+00> : vector<8xf32>
    %374 = vector.multi_reduction <add>, %369, %cst_214 [1] : vector<8x32xf32> to vector<8xf32>
    %375 = vector.shape_cast %374 : vector<8xf32> to vector<8x1xf32>
    %cst_215 = arith.constant 3.200000e+01 : f32
    %376 = vector.broadcast %cst_215 : f32 to vector<8x1xf32>
    %377 = arith.divf %375, %376 : vector<8x1xf32>
    %378 = vector.broadcast %377 : vector<8x1xf32> to vector<8x32xf32>
    %379 = arith.subf %369, %378 : vector<8x32xf32>
    %380 = arith.mulf %379, %379 : vector<8x32xf32>
    %cst_216 = arith.constant dense<0.000000e+00> : vector<8xf32>
    %381 = vector.multi_reduction <add>, %380, %cst_216 [1] : vector<8x32xf32> to vector<8xf32>
    %382 = vector.shape_cast %381 : vector<8xf32> to vector<8x1xf32>
    %cst_217 = arith.constant 3.200000e+01 : f32
    %383 = vector.broadcast %cst_217 : f32 to vector<8x1xf32>
    %384 = arith.divf %382, %383 : vector<8x1xf32>
    %cst_218 = arith.constant 9.99999974E-6 : f32
    %385 = vector.broadcast %cst_218 : f32 to vector<8x1xf32>
    %386 = arith.addf %384, %385 : vector<8x1xf32>
    %387 = math.rsqrt %386 : vector<8x1xf32>
    %388 = vector.broadcast %387 : vector<8x1xf32> to vector<8x32xf32>
    %389 = arith.mulf %379, %388 : vector<8x32xf32>
    %390 = vector.shape_cast %371 : vector<32xf32> to vector<1x32xf32>
    %391 = vector.broadcast %390 : vector<1x32xf32> to vector<8x32xf32>
    %392 = arith.mulf %389, %391 : vector<8x32xf32>
    %393 = vector.shape_cast %373 : vector<32xf32> to vector<1x32xf32>
    %394 = vector.broadcast %393 : vector<1x32xf32> to vector<8x32xf32>
    %395 = arith.addf %392, %394 : vector<8x32xf32>
    %c2_219 = arith.constant 2 : index
    %c0_220 = arith.constant 0 : index
    %c0_221 = arith.constant 0 : index
    %396 = vector.load %arg6[%c2_219, %c0_220, %c0_221] : memref<4x128x32xf32, #tpu.memory_space<vmem>>, vector<1x128x32xf32>
    %397 = vector.shape_cast %396 : vector<1x128x32xf32> to vector<128x32xf32>
    %cst_222 = arith.constant dense<0.000000e+00> : vector<8x128xf32>
    %398 = tpu.matmul %395, %397, %cst_222 {dimension_numbers = #tpu.dot_dimension_numbers<[1], [1], [0], [0], [0, 0, 1, 0], [], []>} : vector<8x32xf32>, vector<128x32xf32>, vector<8x128xf32> -> vector<8x128xf32>
    %c2_223 = arith.constant 2 : index
    %c6_224 = arith.constant 6 : index
    %c0_225 = arith.constant 0 : index
    %399 = vector.load %arg8[%c2_223, %c6_224, %c0_225] : memref<4x7x128xf32, #tpu.memory_space<vmem>>, vector<1x1x128xf32>
    %400 = vector.shape_cast %399 : vector<1x1x128xf32> to vector<128xf32>
    %401 = vector.shape_cast %400 : vector<128xf32> to vector<1x128xf32>
    %402 = vector.broadcast %401 : vector<1x128xf32> to vector<8x128xf32>
    %403 = arith.addf %398, %402 : vector<8x128xf32>
    %cst_226 = arith.constant 5.000000e-01 : f32
    %404 = vector.broadcast %cst_226 : f32 to vector<8x128xf32>
    %405 = arith.mulf %404, %403 : vector<8x128xf32>
    %cst_227 = arith.constant 0.707106769 : f32
    %406 = vector.broadcast %cst_227 : f32 to vector<8x128xf32>
    %407 = arith.mulf %403, %406 : vector<8x128xf32>
    %408 = math.erf %407 : vector<8x128xf32>
    %cst_228 = arith.constant 1.000000e+00 : f32
    %409 = vector.broadcast %cst_228 : f32 to vector<8x128xf32>
    %410 = arith.addf %409, %408 : vector<8x128xf32>
    %411 = arith.mulf %405, %410 : vector<8x128xf32>
    %c2_229 = arith.constant 2 : index
    %c0_230 = arith.constant 0 : index
    %c0_231 = arith.constant 0 : index
    %412 = vector.load %arg7[%c2_229, %c0_230, %c0_231] : memref<4x32x128xf32, #tpu.memory_space<vmem>>, vector<1x32x128xf32>
    %413 = vector.shape_cast %412 : vector<1x32x128xf32> to vector<32x128xf32>
    %cst_232 = arith.constant dense<0.000000e+00> : vector<8x32xf32>
    %414 = tpu.matmul %411, %413, %cst_232 {dimension_numbers = #tpu.dot_dimension_numbers<[1], [1], [0], [0], [0, 0, 1, 0], [], []>} : vector<8x128xf32>, vector<32x128xf32>, vector<8x32xf32> -> vector<8x32xf32>
    %c2_233 = arith.constant 2 : index
    %c5_234 = arith.constant 5 : index
    %c0_235 = arith.constant 0 : index
    %415 = vector.load %arg8[%c2_233, %c5_234, %c0_235] : memref<4x7x128xf32, #tpu.memory_space<vmem>>, vector<1x1x32xf32>
    %416 = vector.shape_cast %415 : vector<1x1x32xf32> to vector<32xf32>
    %417 = vector.shape_cast %416 : vector<32xf32> to vector<1x32xf32>
    %418 = vector.broadcast %417 : vector<1x32xf32> to vector<8x32xf32>
    %419 = arith.addf %414, %418 : vector<8x32xf32>
    %420 = arith.addf %369, %419 : vector<8x32xf32>
    %421 = arith.addf %420, %1 : vector<8x32xf32>
    %c3_236 = arith.constant 3 : index
    %c0_237 = arith.constant 0 : index
    %c0_238 = arith.constant 0 : index
    %422 = vector.load %arg8[%c3_236, %c0_237, %c0_238] : memref<4x7x128xf32, #tpu.memory_space<vmem>>, vector<1x1x32xf32>
    %423 = vector.shape_cast %422 : vector<1x1x32xf32> to vector<32xf32>
    %c3_239 = arith.constant 3 : index
    %c1_240 = arith.constant 1 : index
    %c0_241 = arith.constant 0 : index
    %424 = vector.load %arg8[%c3_239, %c1_240, %c0_241] : memref<4x7x128xf32, #tpu.memory_space<vmem>>, vector<1x1x32xf32>
    %425 = vector.shape_cast %424 : vector<1x1x32xf32> to vector<32xf32>
    %cst_242 = arith.constant dense<0.000000e+00> : vector<8xf32>
    %426 = vector.multi_reduction <add>, %421, %cst_242 [1] : vector<8x32xf32> to vector<8xf32>
    %427 = vector.shape_cast %426 : vector<8xf32> to vector<8x1xf32>
    %cst_243 = arith.constant 3.200000e+01 : f32
    %428 = vector.broadcast %cst_243 : f32 to vector<8x1xf32>
    %429 = arith.divf %427, %428 : vector<8x1xf32>
    %430 = vector.broadcast %429 : vector<8x1xf32> to vector<8x32xf32>
    %431 = arith.subf %421, %430 : vector<8x32xf32>
    %432 = arith.mulf %431, %431 : vector<8x32xf32>
    %cst_244 = arith.constant dense<0.000000e+00> : vector<8xf32>
    %433 = vector.multi_reduction <add>, %432, %cst_244 [1] : vector<8x32xf32> to vector<8xf32>
    %434 = vector.shape_cast %433 : vector<8xf32> to vector<8x1xf32>
    %cst_245 = arith.constant 3.200000e+01 : f32
    %435 = vector.broadcast %cst_245 : f32 to vector<8x1xf32>
    %436 = arith.divf %434, %435 : vector<8x1xf32>
    %cst_246 = arith.constant 9.99999974E-6 : f32
    %437 = vector.broadcast %cst_246 : f32 to vector<8x1xf32>
    %438 = arith.addf %436, %437 : vector<8x1xf32>
    %439 = math.rsqrt %438 : vector<8x1xf32>
    %440 = vector.broadcast %439 : vector<8x1xf32> to vector<8x32xf32>
    %441 = arith.mulf %431, %440 : vector<8x32xf32>
    %442 = vector.shape_cast %423 : vector<32xf32> to vector<1x32xf32>
    %443 = vector.broadcast %442 : vector<1x32xf32> to vector<8x32xf32>
    %444 = arith.mulf %441, %443 : vector<8x32xf32>
    %445 = vector.shape_cast %425 : vector<32xf32> to vector<1x32xf32>
    %446 = vector.broadcast %445 : vector<1x32xf32> to vector<8x32xf32>
    %447 = arith.addf %444, %446 : vector<8x32xf32>
    %448 = vector.shape_cast %447 : vector<8x32xf32> to vector<1x8x32xf32>
    %449 = vector.shape_cast %448 : vector<1x8x32xf32> to vector<1x8x32xf32>
    %450 = vector.broadcast %449 : vector<1x8x32xf32> to vector<4x8x32xf32>
    %c9 = arith.constant 9 : index
    %c0_247 = arith.constant 0 : index
    %c0_248 = arith.constant 0 : index
    %c0_249 = arith.constant 0 : index
    %451 = vector.load %arg3[%c9, %c0_247, %c0_248, %c0_249] : memref<12x4x8x32xf32, #tpu.memory_space<vmem>>, vector<1x4x8x32xf32>
    %452 = vector.shape_cast %451 : vector<1x4x8x32xf32> to vector<4x8x32xf32>
    %cst_250 = arith.constant dense<0.000000e+00> : vector<4x8x8xf32>
    %453 = tpu.matmul %450, %452, %cst_250 {dimension_numbers = #tpu.dot_dimension_numbers<[2], [2], [1], [1], [0, 0, 0, 1, 1, 1], [0], [0]>} : vector<4x8x32xf32>, vector<4x8x32xf32>, vector<4x8x8xf32> -> vector<4x8x8xf32>
    %c9_251 = arith.constant 9 : index
    %c0_252 = arith.constant 0 : index
    %c0_253 = arith.constant 0 : index
    %c0_254 = arith.constant 0 : index
    %454 = vector.load %arg4[%c9_251, %c0_252, %c0_253, %c0_254] : memref<12x4x1x8xf32, #tpu.memory_space<vmem>>, vector<1x4x1x8xf32>
    %455 = vector.shape_cast %454 : vector<1x4x1x8xf32> to vector<4x1x8xf32>
    %456 = vector.broadcast %455 : vector<4x1x8xf32> to vector<4x8x8xf32>
    %457 = arith.addf %453, %456 : vector<4x8x8xf32>
    %c10 = arith.constant 10 : index
    %c0_255 = arith.constant 0 : index
    %c0_256 = arith.constant 0 : index
    %c0_257 = arith.constant 0 : index
    %458 = vector.load %arg3[%c10, %c0_255, %c0_256, %c0_257] : memref<12x4x8x32xf32, #tpu.memory_space<vmem>>, vector<1x4x8x32xf32>
    %459 = vector.shape_cast %458 : vector<1x4x8x32xf32> to vector<4x8x32xf32>
    %cst_258 = arith.constant dense<0.000000e+00> : vector<4x8x8xf32>
    %460 = tpu.matmul %450, %459, %cst_258 {dimension_numbers = #tpu.dot_dimension_numbers<[2], [2], [1], [1], [0, 0, 0, 1, 1, 1], [0], [0]>} : vector<4x8x32xf32>, vector<4x8x32xf32>, vector<4x8x8xf32> -> vector<4x8x8xf32>
    %c10_259 = arith.constant 10 : index
    %c0_260 = arith.constant 0 : index
    %c0_261 = arith.constant 0 : index
    %c0_262 = arith.constant 0 : index
    %461 = vector.load %arg4[%c10_259, %c0_260, %c0_261, %c0_262] : memref<12x4x1x8xf32, #tpu.memory_space<vmem>>, vector<1x4x1x8xf32>
    %462 = vector.shape_cast %461 : vector<1x4x1x8xf32> to vector<4x1x8xf32>
    %463 = vector.broadcast %462 : vector<4x1x8xf32> to vector<4x8x8xf32>
    %464 = arith.addf %460, %463 : vector<4x8x8xf32>
    %c11 = arith.constant 11 : index
    %c0_263 = arith.constant 0 : index
    %c0_264 = arith.constant 0 : index
    %c0_265 = arith.constant 0 : index
    %465 = vector.load %arg3[%c11, %c0_263, %c0_264, %c0_265] : memref<12x4x8x32xf32, #tpu.memory_space<vmem>>, vector<1x4x8x32xf32>
    %466 = vector.shape_cast %465 : vector<1x4x8x32xf32> to vector<4x8x32xf32>
    %cst_266 = arith.constant dense<0.000000e+00> : vector<4x8x8xf32>
    %467 = tpu.matmul %450, %466, %cst_266 {dimension_numbers = #tpu.dot_dimension_numbers<[2], [2], [1], [1], [0, 0, 0, 1, 1, 1], [0], [0]>} : vector<4x8x32xf32>, vector<4x8x32xf32>, vector<4x8x8xf32> -> vector<4x8x8xf32>
    %c11_267 = arith.constant 11 : index
    %c0_268 = arith.constant 0 : index
    %c0_269 = arith.constant 0 : index
    %c0_270 = arith.constant 0 : index
    %468 = vector.load %arg4[%c11_267, %c0_268, %c0_269, %c0_270] : memref<12x4x1x8xf32, #tpu.memory_space<vmem>>, vector<1x4x1x8xf32>
    %469 = vector.shape_cast %468 : vector<1x4x1x8xf32> to vector<4x1x8xf32>
    %470 = vector.broadcast %469 : vector<4x1x8xf32> to vector<4x8x8xf32>
    %471 = arith.addf %467, %470 : vector<4x8x8xf32>
    %cst_271 = arith.constant dense<0.000000e+00> : vector<4x8x8xf32>
    %472 = tpu.matmul %457, %464, %cst_271 {dimension_numbers = #tpu.dot_dimension_numbers<[2], [2], [1], [1], [0, 0, 0, 1, 1, 1], [0], [0]>} : vector<4x8x8xf32>, vector<4x8x8xf32>, vector<4x8x8xf32> -> vector<4x8x8xf32>
    %cst_272 = arith.constant 0.353553385 : f32
    %473 = vector.broadcast %cst_272 : f32 to vector<4x8x8xf32>
    %474 = arith.mulf %472, %473 : vector<4x8x8xf32>
    %cst_273 = arith.constant -1.000000e+30 : f32
    %475 = vector.broadcast %cst_273 : f32 to vector<4x8x8xf32>
    %476 = arith.select %9, %475, %474 : vector<4x8x8xi1>, vector<4x8x8xf32>
    %cst_274 = arith.constant dense<0xFF800000> : vector<4x8xf32>
    %477 = vector.multi_reduction <maximumf>, %476, %cst_274 [2] : vector<4x8x8xf32> to vector<4x8xf32>
    %478 = vector.shape_cast %477 : vector<4x8xf32> to vector<4x8x1xf32>
    %479 = vector.broadcast %478 : vector<4x8x1xf32> to vector<4x8x8xf32>
    %480 = arith.subf %476, %479 : vector<4x8x8xf32>
    %481 = math.exp %480 : vector<4x8x8xf32>
    %cst_275 = arith.constant dense<0.000000e+00> : vector<4x8xf32>
    %482 = vector.multi_reduction <add>, %481, %cst_275 [2] : vector<4x8x8xf32> to vector<4x8xf32>
    %483 = vector.shape_cast %482 : vector<4x8xf32> to vector<4x8x1xf32>
    %484 = vector.broadcast %483 : vector<4x8x1xf32> to vector<4x8x8xf32>
    %485 = arith.divf %481, %484 : vector<4x8x8xf32>
    %cst_276 = arith.constant dense<0.000000e+00> : vector<4x8x8xf32>
    %486 = tpu.matmul %485, %471, %cst_276 {dimension_numbers = #tpu.dot_dimension_numbers<[2], [1], [1], [2], [0, 0, 0, 1, 1, 2], [0], [0]>} : vector<4x8x8xf32>, vector<4x8x8xf32>, vector<4x8x8xf32> -> vector<4x8x8xf32>
    %c3_277 = arith.constant 3 : index
    %c0_278 = arith.constant 0 : index
    %c0_279 = arith.constant 0 : index
    %c0_280 = arith.constant 0 : index
    %487 = vector.load %arg5[%c3_277, %c0_278, %c0_279, %c0_280] : memref<4x4x8x32xf32, #tpu.memory_space<vmem>>, vector<1x4x8x32xf32>
    %488 = vector.shape_cast %487 : vector<1x4x8x32xf32> to vector<4x8x32xf32>
    %cst_281 = arith.constant dense<0.000000e+00> : vector<4x8x32xf32>
    %489 = tpu.matmul %486, %488, %cst_281 {dimension_numbers = #tpu.dot_dimension_numbers<[2], [1], [1], [2], [0, 0, 0, 1, 1, 2], [0], [0]>} : vector<4x8x8xf32>, vector<4x8x32xf32>, vector<4x8x32xf32> -> vector<4x8x32xf32>
    %490 = vector.extract_strided_slice %489 {offsets = [0, 0, 0], sizes = [1, 8, 32], strides = [1, 1, 1]} : vector<4x8x32xf32> to vector<1x8x32xf32>
    %491 = vector.shape_cast %490 : vector<1x8x32xf32> to vector<8x32xf32>
    %492 = vector.extract_strided_slice %489 {offsets = [1, 0, 0], sizes = [1, 8, 32], strides = [1, 1, 1]} : vector<4x8x32xf32> to vector<1x8x32xf32>
    %493 = vector.shape_cast %492 : vector<1x8x32xf32> to vector<8x32xf32>
    %494 = arith.addf %491, %493 : vector<8x32xf32>
    %495 = vector.extract_strided_slice %489 {offsets = [2, 0, 0], sizes = [1, 8, 32], strides = [1, 1, 1]} : vector<4x8x32xf32> to vector<1x8x32xf32>
    %496 = vector.shape_cast %495 : vector<1x8x32xf32> to vector<8x32xf32>
    %497 = arith.addf %494, %496 : vector<8x32xf32>
    %498 = vector.extract_strided_slice %489 {offsets = [3, 0, 0], sizes = [1, 8, 32], strides = [1, 1, 1]} : vector<4x8x32xf32> to vector<1x8x32xf32>
    %499 = vector.shape_cast %498 : vector<1x8x32xf32> to vector<8x32xf32>
    %500 = arith.addf %497, %499 : vector<8x32xf32>
    %c3_282 = arith.constant 3 : index
    %c4_283 = arith.constant 4 : index
    %c0_284 = arith.constant 0 : index
    %501 = vector.load %arg8[%c3_282, %c4_283, %c0_284] : memref<4x7x128xf32, #tpu.memory_space<vmem>>, vector<1x1x32xf32>
    %502 = vector.shape_cast %501 : vector<1x1x32xf32> to vector<32xf32>
    %503 = vector.shape_cast %502 : vector<32xf32> to vector<1x32xf32>
    %504 = vector.broadcast %503 : vector<1x32xf32> to vector<8x32xf32>
    %505 = arith.addf %500, %504 : vector<8x32xf32>
    %506 = arith.addf %447, %505 : vector<8x32xf32>
    %c3_285 = arith.constant 3 : index
    %c2_286 = arith.constant 2 : index
    %c0_287 = arith.constant 0 : index
    %507 = vector.load %arg8[%c3_285, %c2_286, %c0_287] : memref<4x7x128xf32, #tpu.memory_space<vmem>>, vector<1x1x32xf32>
    %508 = vector.shape_cast %507 : vector<1x1x32xf32> to vector<32xf32>
    %c3_288 = arith.constant 3 : index
    %c3_289 = arith.constant 3 : index
    %c0_290 = arith.constant 0 : index
    %509 = vector.load %arg8[%c3_288, %c3_289, %c0_290] : memref<4x7x128xf32, #tpu.memory_space<vmem>>, vector<1x1x32xf32>
    %510 = vector.shape_cast %509 : vector<1x1x32xf32> to vector<32xf32>
    %cst_291 = arith.constant dense<0.000000e+00> : vector<8xf32>
    %511 = vector.multi_reduction <add>, %506, %cst_291 [1] : vector<8x32xf32> to vector<8xf32>
    %512 = vector.shape_cast %511 : vector<8xf32> to vector<8x1xf32>
    %cst_292 = arith.constant 3.200000e+01 : f32
    %513 = vector.broadcast %cst_292 : f32 to vector<8x1xf32>
    %514 = arith.divf %512, %513 : vector<8x1xf32>
    %515 = vector.broadcast %514 : vector<8x1xf32> to vector<8x32xf32>
    %516 = arith.subf %506, %515 : vector<8x32xf32>
    %517 = arith.mulf %516, %516 : vector<8x32xf32>
    %cst_293 = arith.constant dense<0.000000e+00> : vector<8xf32>
    %518 = vector.multi_reduction <add>, %517, %cst_293 [1] : vector<8x32xf32> to vector<8xf32>
    %519 = vector.shape_cast %518 : vector<8xf32> to vector<8x1xf32>
    %cst_294 = arith.constant 3.200000e+01 : f32
    %520 = vector.broadcast %cst_294 : f32 to vector<8x1xf32>
    %521 = arith.divf %519, %520 : vector<8x1xf32>
    %cst_295 = arith.constant 9.99999974E-6 : f32
    %522 = vector.broadcast %cst_295 : f32 to vector<8x1xf32>
    %523 = arith.addf %521, %522 : vector<8x1xf32>
    %524 = math.rsqrt %523 : vector<8x1xf32>
    %525 = vector.broadcast %524 : vector<8x1xf32> to vector<8x32xf32>
    %526 = arith.mulf %516, %525 : vector<8x32xf32>
    %527 = vector.shape_cast %508 : vector<32xf32> to vector<1x32xf32>
    %528 = vector.broadcast %527 : vector<1x32xf32> to vector<8x32xf32>
    %529 = arith.mulf %526, %528 : vector<8x32xf32>
    %530 = vector.shape_cast %510 : vector<32xf32> to vector<1x32xf32>
    %531 = vector.broadcast %530 : vector<1x32xf32> to vector<8x32xf32>
    %532 = arith.addf %529, %531 : vector<8x32xf32>
    %c3_296 = arith.constant 3 : index
    %c0_297 = arith.constant 0 : index
    %c0_298 = arith.constant 0 : index
    %533 = vector.load %arg6[%c3_296, %c0_297, %c0_298] : memref<4x128x32xf32, #tpu.memory_space<vmem>>, vector<1x128x32xf32>
    %534 = vector.shape_cast %533 : vector<1x128x32xf32> to vector<128x32xf32>
    %cst_299 = arith.constant dense<0.000000e+00> : vector<8x128xf32>
    %535 = tpu.matmul %532, %534, %cst_299 {dimension_numbers = #tpu.dot_dimension_numbers<[1], [1], [0], [0], [0, 0, 1, 0], [], []>} : vector<8x32xf32>, vector<128x32xf32>, vector<8x128xf32> -> vector<8x128xf32>
    %c3_300 = arith.constant 3 : index
    %c6_301 = arith.constant 6 : index
    %c0_302 = arith.constant 0 : index
    %536 = vector.load %arg8[%c3_300, %c6_301, %c0_302] : memref<4x7x128xf32, #tpu.memory_space<vmem>>, vector<1x1x128xf32>
    %537 = vector.shape_cast %536 : vector<1x1x128xf32> to vector<128xf32>
    %538 = vector.shape_cast %537 : vector<128xf32> to vector<1x128xf32>
    %539 = vector.broadcast %538 : vector<1x128xf32> to vector<8x128xf32>
    %540 = arith.addf %535, %539 : vector<8x128xf32>
    %cst_303 = arith.constant 5.000000e-01 : f32
    %541 = vector.broadcast %cst_303 : f32 to vector<8x128xf32>
    %542 = arith.mulf %541, %540 : vector<8x128xf32>
    %cst_304 = arith.constant 0.707106769 : f32
    %543 = vector.broadcast %cst_304 : f32 to vector<8x128xf32>
    %544 = arith.mulf %540, %543 : vector<8x128xf32>
    %545 = math.erf %544 : vector<8x128xf32>
    %cst_305 = arith.constant 1.000000e+00 : f32
    %546 = vector.broadcast %cst_305 : f32 to vector<8x128xf32>
    %547 = arith.addf %546, %545 : vector<8x128xf32>
    %548 = arith.mulf %542, %547 : vector<8x128xf32>
    %c3_306 = arith.constant 3 : index
    %c0_307 = arith.constant 0 : index
    %c0_308 = arith.constant 0 : index
    %549 = vector.load %arg7[%c3_306, %c0_307, %c0_308] : memref<4x32x128xf32, #tpu.memory_space<vmem>>, vector<1x32x128xf32>
    %550 = vector.shape_cast %549 : vector<1x32x128xf32> to vector<32x128xf32>
    %cst_309 = arith.constant dense<0.000000e+00> : vector<8x32xf32>
    %551 = tpu.matmul %548, %550, %cst_309 {dimension_numbers = #tpu.dot_dimension_numbers<[1], [1], [0], [0], [0, 0, 1, 0], [], []>} : vector<8x128xf32>, vector<32x128xf32>, vector<8x32xf32> -> vector<8x32xf32>
    %c3_310 = arith.constant 3 : index
    %c5_311 = arith.constant 5 : index
    %c0_312 = arith.constant 0 : index
    %552 = vector.load %arg8[%c3_310, %c5_311, %c0_312] : memref<4x7x128xf32, #tpu.memory_space<vmem>>, vector<1x1x32xf32>
    %553 = vector.shape_cast %552 : vector<1x1x32xf32> to vector<32xf32>
    %554 = vector.shape_cast %553 : vector<32xf32> to vector<1x32xf32>
    %555 = vector.broadcast %554 : vector<1x32xf32> to vector<8x32xf32>
    %556 = arith.addf %551, %555 : vector<8x32xf32>
    %557 = arith.addf %506, %556 : vector<8x32xf32>
    %c0_313 = arith.constant 0 : index
    %c0_314 = arith.constant 0 : index
    %c0_315 = arith.constant 0 : index
    %558 = vector.load %arg10[%c0_313, %c0_314, %c0_315] : memref<1x8x32xf32, #tpu.memory_space<vmem>>, vector<1x8x32xf32>
    %559 = vector.shape_cast %558 : vector<1x8x32xf32> to vector<8x32xf32>
    %560 = vector.shape_cast %557 : vector<8x32xf32> to vector<1x8x32xf32>
    tpu.vector_store %arg10[%c0_313, %c0_314, %c0_315], %560 {strides = array<i32>} : memref<1x8x32xf32, #tpu.memory_space<vmem>>, vector<1x8x32xf32>,
    %c0_316 = arith.constant 0 : index
    %c0_317 = arith.constant 0 : index
    %561 = vector.load %arg9[%c0_316, %c0_317] : memref<2x32xf32, #tpu.memory_space<vmem>>, vector<1x32xf32>
    %562 = vector.shape_cast %561 : vector<1x32xf32> to vector<32xf32>
    %c1_318 = arith.constant 1 : index
    %c0_319 = arith.constant 0 : index
    %563 = vector.load %arg9[%c1_318, %c0_319] : memref<2x32xf32, #tpu.memory_space<vmem>>, vector<1x32xf32>
    %564 = vector.shape_cast %563 : vector<1x32xf32> to vector<32xf32>
    %cst_320 = arith.constant dense<0.000000e+00> : vector<8xf32>
    %565 = vector.multi_reduction <add>, %557, %cst_320 [1] : vector<8x32xf32> to vector<8xf32>
    %566 = vector.shape_cast %565 : vector<8xf32> to vector<8x1xf32>
    %cst_321 = arith.constant 3.200000e+01 : f32
    %567 = vector.broadcast %cst_321 : f32 to vector<8x1xf32>
    %568 = arith.divf %566, %567 : vector<8x1xf32>
    %569 = vector.broadcast %568 : vector<8x1xf32> to vector<8x32xf32>
    %570 = arith.subf %557, %569 : vector<8x32xf32>
    %571 = arith.mulf %570, %570 : vector<8x32xf32>
    %cst_322 = arith.constant dense<0.000000e+00> : vector<8xf32>
    %572 = vector.multi_reduction <add>, %571, %cst_322 [1] : vector<8x32xf32> to vector<8xf32>
    %573 = vector.shape_cast %572 : vector<8xf32> to vector<8x1xf32>
    %cst_323 = arith.constant 3.200000e+01 : f32
    %574 = vector.broadcast %cst_323 : f32 to vector<8x1xf32>
    %575 = arith.divf %573, %574 : vector<8x1xf32>
    %cst_324 = arith.constant 9.99999974E-6 : f32
    %576 = vector.broadcast %cst_324 : f32 to vector<8x1xf32>
    %577 = arith.addf %575, %576 : vector<8x1xf32>
    %578 = math.rsqrt %577 : vector<8x1xf32>
    %579 = vector.broadcast %578 : vector<8x1xf32> to vector<8x32xf32>
    %580 = arith.mulf %570, %579 : vector<8x32xf32>
    %581 = vector.shape_cast %562 : vector<32xf32> to vector<1x32xf32>
    %582 = vector.broadcast %581 : vector<1x32xf32> to vector<8x32xf32>
    %583 = arith.mulf %580, %582 : vector<8x32xf32>
    %584 = vector.shape_cast %564 : vector<32xf32> to vector<1x32xf32>
    %585 = vector.broadcast %584 : vector<1x32xf32> to vector<8x32xf32>
    %586 = arith.addf %583, %585 : vector<8x32xf32>
    %c0_325 = arith.constant 0 : index
    %c0_326 = arith.constant 0 : index
    %c0_327 = arith.constant 0 : index
    %587 = vector.load %arg11[%c0_325, %c0_326, %c0_327] : memref<1x8x32xf32, #tpu.memory_space<vmem>>, vector<1x8x32xf32>
    %588 = vector.shape_cast %587 : vector<1x8x32xf32> to vector<8x32xf32>
    %589 = vector.shape_cast %586 : vector<8x32xf32> to vector<1x8x32xf32>
    tpu.vector_store %arg11[%c0_325, %c0_326, %c0_327], %589 {strides = array<i32>} : memref<1x8x32xf32, #tpu.memory_space<vmem>>, vector<1x8x32xf32>,
    return
  }
  func.func @transform_0(%arg0: i32) -> (i32, i32, i32) {
    %c0_i32 = arith.constant 0 : i32
    %c0_i32_0 = arith.constant 0 : i32
    %c0_i32_1 = arith.constant 0 : i32
    return %arg0, %c0_i32, %c0_i32_0 : i32, i32, i32
  }
  func.func @transform_1(%arg0: i32) -> (i32, i32, i32) {
    %c0_i32 = arith.constant 0 : i32
    %c0_i32_0 = arith.constant 0 : i32
    %c0_i32_1 = arith.constant 0 : i32
    return %arg0, %c0_i32, %c0_i32_0 : i32, i32, i32
  }
  func.func @transform_2(%arg0: i32) -> (i32, i32, i32, i32) {
    %c0_i32 = arith.constant 0 : i32
    %c0_i32_0 = arith.constant 0 : i32
    %c0_i32_1 = arith.constant 0 : i32
    %c0_i32_2 = arith.constant 0 : i32
    %c0_i32_3 = arith.constant 0 : i32
    return %c0_i32, %c0_i32_0, %c0_i32_1, %c0_i32_2 : i32, i32, i32, i32
  }
  func.func @transform_3(%arg0: i32) -> (i32, i32, i32, i32) {
    %c0_i32 = arith.constant 0 : i32
    %c0_i32_0 = arith.constant 0 : i32
    %c0_i32_1 = arith.constant 0 : i32
    %c0_i32_2 = arith.constant 0 : i32
    %c0_i32_3 = arith.constant 0 : i32
    return %c0_i32, %c0_i32_0, %c0_i32_1, %c0_i32_2 : i32, i32, i32, i32
  }
  func.func @transform_4(%arg0: i32) -> (i32, i32, i32, i32) {
    %c0_i32 = arith.constant 0 : i32
    %c0_i32_0 = arith.constant 0 : i32
    %c0_i32_1 = arith.constant 0 : i32
    %c0_i32_2 = arith.constant 0 : i32
    %c0_i32_3 = arith.constant 0 : i32
    return %c0_i32, %c0_i32_0, %c0_i32_1, %c0_i32_2 : i32, i32, i32, i32
  }
  func.func @transform_5(%arg0: i32) -> (i32, i32, i32) {
    %c0_i32 = arith.constant 0 : i32
    %c0_i32_0 = arith.constant 0 : i32
    %c0_i32_1 = arith.constant 0 : i32
    %c0_i32_2 = arith.constant 0 : i32
    return %c0_i32, %c0_i32_0, %c0_i32_1 : i32, i32, i32
  }
  func.func @transform_6(%arg0: i32) -> (i32, i32, i32) {
    %c0_i32 = arith.constant 0 : i32
    %c0_i32_0 = arith.constant 0 : i32
    %c0_i32_1 = arith.constant 0 : i32
    %c0_i32_2 = arith.constant 0 : i32
    return %c0_i32, %c0_i32_0, %c0_i32_1 : i32, i32, i32
  }
  func.func @transform_7(%arg0: i32) -> (i32, i32, i32) {
    %c0_i32 = arith.constant 0 : i32
    %c0_i32_0 = arith.constant 0 : i32
    %c0_i32_1 = arith.constant 0 : i32
    %c0_i32_2 = arith.constant 0 : i32
    return %c0_i32, %c0_i32_0, %c0_i32_1 : i32, i32, i32
  }
  func.func @transform_8(%arg0: i32) -> (i32, i32) {
    %c0_i32 = arith.constant 0 : i32
    %c0_i32_0 = arith.constant 0 : i32
    %c0_i32_1 = arith.constant 0 : i32
    return %c0_i32, %c0_i32_0 : i32, i32
  }
  func.func @transform_9(%arg0: i32) -> (i32, i32, i32) {
    %c0_i32 = arith.constant 0 : i32
    %c0_i32_0 = arith.constant 0 : i32
    %c0_i32_1 = arith.constant 0 : i32
    return %arg0, %c0_i32, %c0_i32_0 : i32, i32, i32
  }
  func.func @transform_10(%arg0: i32) -> (i32, i32, i32) {
    %c0_i32 = arith.constant 0 : i32
    %c0_i32_0 = arith.constant 0 : i32
    %c0_i32_1 = arith.constant 0 : i32
    return %arg0, %c0_i32, %c0_i32_0 : i32, i32, i32
  }
}

</mosaic_0001>

<llo_original>
// kernel: mul.5
$region0: #{mul.5}
  #allocation2 [shape = 's32[1]{0}', space=sflag, size = 0x4, scoped, tag = 'scoped memory for mul.5']
  %s0 = inlined_call_operand.hbm [shape: f32[32], index: 0, kind: input, shape index: {}]
  %s1 = inlined_call_operand.vmem [shape: f32[1,2,32], index: 1, kind: output, shape index: {}]
  $region1: #{mul.5} parent=0
    #allocation0 [shape = 'u8[512]{0}', space=vmem, size = 0x400, scoped, tag = 'operand span for operand 0']
    #allocation1 [shape = 's32[1]{0}', space=sflag, size = 0x4, scoped, tag = 'scoped memory for mul.5']
    %2 = vsyncpa [#allocation1], 0
    // Predicated region
    $region2: #{mul.5} parent=1 // pred_check
      _
    $region3: #{mul.5} parent=1 // pred_check_branch
      %4 = sbr.rel (0) target = $region5
    $region4: #{mul.5} parent=1 // pred_region
      %6 = vsyncadd [#allocation1], 0
      %s8 = sshll.u32 %s0, 4
      %s9 = int_to_ptr.hbm [resolvable:$true] %s8
      %s10 = sshll.u32 [#allocation0], 4
      %s11 = int_to_ptr.vmem [resolvable:$true] %s10
      %13 = dma.hbm_to_vmem [thread:$0]  %s9, 16, %s11, [#allocation1]
    $region5: #{mul.5} parent=1 // pred_fallthru
      _
    // Predicated region
    $region6: #{mul.5} parent=1 // pred_check
      _
    $region7: #{mul.5} parent=1 // pred_check_branch
      %15 = sbr.rel (0) target = $region9
    $region8: #{mul.5} parent=1 // pred_region
      %17 = dma.done [#allocation1], 16
    $region9: #{mul.5} parent=1 // pred_fallthru
      _
    %v18 = vld [vmem:[#allocation0] ss:$0 sm:$0xff]
    %19 = vst [vmem:[%s1] sm:$0x1] %v18
    %s20 = scalar_lea.vmem %s1, 1
    %21 = vst [vmem:[%s20] sm:$0x1] %v18
    %22 = vsyncpa [#allocation1], 1

// kernel: gpt_extractor_forward.1
$region0: #{gpt_extractor_forward.1}
  #allocation0 [shape = 'u32[]', space=smem, size = 0x4, offset = 0x4, fixed_abs, tag = 'smem constant byte address 0x4 - core index']
  #allocation1 [shape = 'u32[72,128]{1,0:T(1,128)}', space=vmem, size = 0x9000, scoped, tag = 'internal scratch']
  %s0 = inlined_call_operand.vmem [shape: f32[2,8,32], index: 0, kind: input, shape index: {}]
  %s1 = inlined_call_operand.vmem [shape: f32[2,8,32], index: 1, kind: input, shape index: {}]
  %s2 = inlined_call_operand.vmem [shape: f32[12,4,8,32], index: 2, kind: input, shape index: {}]
  %s3 = inlined_call_operand.vmem [shape: f32[12,4,1,8], index: 3, kind: input, shape index: {}]
  %s4 = inlined_call_operand.vmem [shape: f32[4,4,8,32], index: 4, kind: input, shape index: {}]
  %s5 = inlined_call_operand.vmem [shape: f32[4,128,32], index: 5, kind: input, shape index: {}]
  %s6 = inlined_call_operand.vmem [shape: f32[4,32,128], index: 6, kind: input, shape index: {}]
  %s7 = inlined_call_operand.vmem [shape: f32[4,7,128], index: 7, kind: input, shape index: {}]
  %s8 = inlined_call_operand.vmem [shape: f32[2,32], index: 8, kind: input, shape index: {}]
  %s9 = inlined_call_operand.vmem [shape: f32[2,8,32], index: 9, kind: output, shape index: {0}]
  %s10 = inlined_call_operand.hbm [shape: f32[2,8,32], index: 10, kind: output, shape index: {1}]
  %11 = xla_tuple %s9, %s10
  %s12 = sld [smem:[#allocation0]]
  $region77: #{gpt_extractor_forward.1} parent=0
    _
  %s14 = ssub.s32 1, %s12
  %s15 = scalar_select 0, %s14, %s12
  $region1: #{gpt_extractor_forward.1} parent=0
    #allocation2 [shape = 'u8[8192]{0}', space=vmem, size = 0x2000, scoped, tag = 'output window, operand 1']
    #allocation3 [shape = 's32[2]{0}', space=sflag, size = 0x8, scoped, tag = 'scoped memory for gpt_extractor_forward.1']
    %16 = vsyncpa [#allocation3], 0
    %s17 = scalar_lea.sflag [#allocation3], 1
    %18 = vsyncpa %s17, 0
    loop: start=0, step=1, limit=4
    $region2: #{gpt_extractor_forward.1} parent=1 // loop_pre_header
      _
    $region3: #{gpt_extractor_forward.1} parent=1 // loop_header
      %s20 = sphi 0, %s24
      %p21 = scmp.ge.s32.totalorder %s20, 4
      %s30 = sphi 0, %s32
      %s33 = sphi 0, %s30
      %s34 = sphi 0, %s33
      %s50 = sphi 0, %s34
      %s56 = sphi 0, %s58
      %s59 = sphi 0, %s56
      %s60 = sphi 0, %s59
      %s76 = sphi 0, %s60
      %s80 = sphi 0, %s80
      %s82 = sphi 0, %s80
      %s83 = sphi 0, %s82
      %s97 = sphi 0, %s83
      %s101 = sphi 0, %s101
      %s103 = sphi 0, %s101
      %s104 = sphi 0, %s103
      %s118 = sphi 0, %s104
      %s122 = sphi 0, %s122
      %s124 = sphi 0, %s122
      %s125 = sphi 0, %s124
      %s139 = sphi 0, %s125
      %s143 = sphi 0, %s143
      %s145 = sphi 0, %s143
      %s146 = sphi 0, %s145
      %s160 = sphi 0, %s146
      %s164 = sphi 0, %s164
      %s166 = sphi 0, %s164
      %s167 = sphi 0, %s166
      %s181 = sphi 0, %s167
      %s185 = sphi 0, %s185
      %s187 = sphi 0, %s185
      %s188 = sphi 0, %s187
      %s202 = sphi 0, %s188
      %s206 = sphi 0, %s206
      %s208 = sphi 0, %s206
      %s209 = sphi 0, %s208
      %s223 = sphi 0, %s209
      %s229 = sphi 0, %s231
      %s232 = sphi 0, %s229
      %s233 = sphi 0, %s232
      %s249 = sphi 0, %s233
      %s255 = sphi 0, %s257
      %s258 = sphi 0, %s255
      %s259 = sphi 0, %s258
      %s275 = sphi 0, %s259
    $region4: #{gpt_extractor_forward.1} parent=1 // loop_header_branch
      %23 = sbr.rel (%p21) target = $region8
    $region5: #{gpt_extractor_forward.1} parent=1 // loop_body
      %s25 = ssub.s32 %s20, 1
      %s26 = ssub.s32 %s20, 2
      %s27 = sadd.s32 %s20, 1
      %s28 = ssub.s32 %s20, %s27
      %p29 = scmp.eq.s32.totalorder %s28, 0
      %s31 = sadd.s32 %s30, 1
      %s32 = scalar_select %p29, %s30, %s31
      %p35 = pneg %p29
      %p36 = scmp.eq.s32.totalorder %s20, 1
      %p37 = por %p35, %p36
      %p38 = scmp.ne.s32.totalorder %s30, %s33
      %p39 = scmp.eq.s32.totalorder %s20, 0
      %p40 = por %p38, %p39
      %p41 = scmp.ne.s32.totalorder %s30, %s33
      %p42 = scmp.eq.s32.totalorder %s25, 1
      %p43 = por %p41, %p42
      %p44 = scmp.ne.s32.totalorder %s33, %s34
      %p45 = scmp.eq.s32.totalorder %s25, 0
      %p46 = por %p44, %p45
      %p47 = scmp.ne.s32.totalorder %s33, %s34
      %p48 = scmp.eq.s32.totalorder %s26, 1
      %p49 = por %p47, %p48
      %p51 = scmp.ne.s32.totalorder %s34, %s50
      %p52 = scmp.eq.s32.totalorder %s26, 0
      %p53 = por %p51, %p52
      %s54 = ssub.s32 %s20, %s27
      %p55 = scmp.eq.s32.totalorder %s54, 0
      %s57 = sadd.s32 %s56, 1
      %s58 = scalar_select %p55, %s56, %s57
      %p61 = pneg %p55
      %p62 = scmp.eq.s32.totalorder %s20, 1
      %p63 = por %p61, %p62
      %p64 = scmp.ne.s32.totalorder %s56, %s59
      %p65 = scmp.eq.s32.totalorder %s20, 0
      %p66 = por %p64, %p65
      %p67 = scmp.ne.s32.totalorder %s56, %s59
      %p68 = scmp.eq.s32.totalorder %s25, 1
      %p69 = por %p67, %p68
      %p70 = scmp.ne.s32.totalorder %s59, %s60
      %p71 = scmp.eq.s32.totalorder %s25, 0
      %p72 = por %p70, %p71
      %p73 = scmp.ne.s32.totalorder %s59, %s60
      %p74 = scmp.eq.s32.totalorder %s26, 1
      %p75 = por %p73, %p74
      %p77 = scmp.ne.s32.totalorder %s60, %s76
      %p78 = scmp.eq.s32.totalorder %s26, 0
      %p79 = por %p77, %p78
      %s81 = sadd.s32 %s80, 1
      %p84 = scmp.eq.s32.totalorder %s20, 1
      %p85 = scmp.ne.s32.totalorder %s80, %s82
      %p86 = scmp.eq.s32.totalorder %s20, 0
      %p87 = por %p85, %p86
      %p88 = scmp.ne.s32.totalorder %s80, %s82
      %p89 = scmp.eq.s32.totalorder %s25, 1
      %p90 = por %p88, %p89
      %p91 = scmp.ne.s32.totalorder %s82, %s83
      %p92 = scmp.eq.s32.totalorder %s25, 0
      %p93 = por %p91, %p92
      %p94 = scmp.ne.s32.totalorder %s82, %s83
      %p95 = scmp.eq.s32.totalorder %s26, 1
      %p96 = por %p94, %p95
      %p98 = scmp.ne.s32.totalorder %s83, %s97
      %p99 = scmp.eq.s32.totalorder %s26, 0
      %p100 = por %p98, %p99
      %s102 = sadd.s32 %s101, 1
      %p105 = scmp.eq.s32.totalorder %s20, 1
      %p106 = scmp.ne.s32.totalorder %s101, %s103
      %p107 = scmp.eq.s32.totalorder %s20, 0
      %p108 = por %p106, %p107
      %p109 = scmp.ne.s32.totalorder %s101, %s103
      %p110 = scmp.eq.s32.totalorder %s25, 1
      %p111 = por %p109, %p110
      %p112 = scmp.ne.s32.totalorder %s103, %s104
      %p113 = scmp.eq.s32.totalorder %s25, 0
      %p114 = por %p112, %p113
      %p115 = scmp.ne.s32.totalorder %s103, %s104
      %p116 = scmp.eq.s32.totalorder %s26, 1
      %p117 = por %p115, %p116
      %p119 = scmp.ne.s32.totalorder %s104, %s118
      %p120 = scmp.eq.s32.totalorder %s26, 0
      %p121 = por %p119, %p120
      %s123 = sadd.s32 %s122, 1
      %p126 = scmp.eq.s32.totalorder %s20, 1
      %p127 = scmp.ne.s32.totalorder %s122, %s124
      %p128 = scmp.eq.s32.totalorder %s20, 0
      %p129 = por %p127, %p128
      %p130 = scmp.ne.s32.totalorder %s122, %s124
      %p131 = scmp.eq.s32.totalorder %s25, 1
      %p132 = por %p130, %p131
      %p133 = scmp.ne.s32.totalorder %s124, %s125
      %p134 = scmp.eq.s32.totalorder %s25, 0
      %p135 = por %p133, %p134
      %p136 = scmp.ne.s32.totalorder %s124, %s125
      %p137 = scmp.eq.s32.totalorder %s26, 1
      %p138 = por %p136, %p137
      %p140 = scmp.ne.s32.totalorder %s125, %s139
      %p141 = scmp.eq.s32.totalorder %s26, 0
      %p142 = por %p140, %p141
      %s144 = sadd.s32 %s143, 1
      %p147 = scmp.eq.s32.totalorder %s20, 1
      %p148 = scmp.ne.s32.totalorder %s143, %s145
      %p149 = scmp.eq.s32.totalorder %s20, 0
      %p150 = por %p148, %p149
      %p151 = scmp.ne.s32.totalorder %s143, %s145
      %p152 = scmp.eq.s32.totalorder %s25, 1
      %p153 = por %p151, %p152
      %p154 = scmp.ne.s32.totalorder %s145, %s146
      %p155 = scmp.eq.s32.totalorder %s25, 0
      %p156 = por %p154, %p155
      %p157 = scmp.ne.s32.totalorder %s145, %s146
      %p158 = scmp.eq.s32.totalorder %s26, 1
      %p159 = por %p157, %p158
      %p161 = scmp.ne.s32.totalorder %s146, %s160
      %p162 = scmp.eq.s32.totalorder %s26, 0
      %p163 = por %p161, %p162
      %s165 = sadd.s32 %s164, 1
      %p168 = scmp.eq.s32.totalorder %s20, 1
      %p169 = scmp.ne.s32.totalorder %s164, %s166
      %p170 = scmp.eq.s32.totalorder %s20, 0
      %p171 = por %p169, %p170
      %p172 = scmp.ne.s32.totalorder %s164, %s166
      %p173 = scmp.eq.s32.totalorder %s25, 1
      %p174 = por %p172, %p173
      %p175 = scmp.ne.s32.totalorder %s166, %s167
      %p176 = scmp.eq.s32.totalorder %s25, 0
      %p177 = por %p175, %p176
      %p178 = scmp.ne.s32.totalorder %s166, %s167
      %p179 = scmp.eq.s32.totalorder %s26, 1
      %p180 = por %p178, %p179
      %p182 = scmp.ne.s32.totalorder %s167, %s181
      %p183 = scmp.eq.s32.totalorder %s26, 0
      %p184 = por %p182, %p183
      %s186 = sadd.s32 %s185, 1
      %p189 = scmp.eq.s32.totalorder %s20, 1
      %p190 = scmp.ne.s32.totalorder %s185, %s187
      %p191 = scmp.eq.s32.totalorder %s20, 0
      %p192 = por %p190, %p191
      %p193 = scmp.ne.s32.totalorder %s185, %s187
      %p194 = scmp.eq.s32.totalorder %s25, 1
      %p195 = por %p193, %p194
      %p196 = scmp.ne.s32.totalorder %s187, %s188
      %p197 = scmp.eq.s32.totalorder %s25, 0
      %p198 = por %p196, %p197
      %p199 = scmp.ne.s32.totalorder %s187, %s188
      %p200 = scmp.eq.s32.totalorder %s26, 1
      %p201 = por %p199, %p200
      %p203 = scmp.ne.s32.totalorder %s188, %s202
      %p204 = scmp.eq.s32.totalorder %s26, 0
      %p205 = por %p203, %p204
      %s207 = sadd.s32 %s206, 1
      %p210 = scmp.eq.s32.totalorder %s20, 1
      %p211 = scmp.ne.s32.totalorder %s206, %s208
      %p212 = scmp.eq.s32.totalorder %s20, 0
      %p213 = por %p211, %p212
      %p214 = scmp.ne.s32.totalorder %s206, %s208
      %p215 = scmp.eq.s32.totalorder %s25, 1
      %p216 = por %p214, %p215
      %p217 = scmp.ne.s32.totalorder %s208, %s209
      %p218 = scmp.eq.s32.totalorder %s25, 0
      %p219 = por %p217, %p218
      %p220 = scmp.ne.s32.totalorder %s208, %s209
      %p221 = scmp.eq.s32.totalorder %s26, 1
      %p222 = por %p220, %p221
      %p224 = scmp.ne.s32.totalorder %s209, %s223
      %p225 = scmp.eq.s32.totalorder %s26, 0
      %p226 = por %p224, %p225
      %s227 = ssub.s32 %s20, %s27
      %p228 = scmp.eq.s32.totalorder %s227, 0
      %s230 = sadd.s32 %s229, 1
      %s231 = scalar_select %p228, %s229, %s230
      %p234 = pneg %p228
      %p235 = scmp.eq.s32.totalorder %s20, 1
      %p236 = por %p234, %p235
      %p237 = scmp.ne.s32.totalorder %s229, %s232
      %p238 = scmp.eq.s32.totalorder %s20, 0
      %p239 = por %p237, %p238
      %p240 = scmp.ne.s32.totalorder %s229, %s232
      %p241 = scmp.eq.s32.totalorder %s25, 1
      %p242 = por %p240, %p241
      %p243 = scmp.ne.s32.totalorder %s232, %s233
      %p244 = scmp.eq.s32.totalorder %s25, 0
      %p245 = por %p243, %p244
      %p246 = scmp.ne.s32.totalorder %s232, %s233
      %p247 = scmp.eq.s32.totalorder %s26, 1
      %p248 = por %p246, %p247
      %p250 = scmp.ne.s32.totalorder %s233, %s249
      %p251 = scmp.eq.s32.totalorder %s26, 0
      %p252 = por %p250, %p251
      %s253 = ssub.s32 %s20, %s27
      %p254 = scmp.eq.s32.totalorder %s253, 0
      %s256 = sadd.s32 %s255, 1
      %s257 = scalar_select %p254, %s255, %s256
      %p260 = pneg %p254
      %p261 = scmp.eq.s32.totalorder %s20, 1
      %p262 = por %p260, %p261
      %p263 = scmp.ne.s32.totalorder %s255, %s258
      %p264 = scmp.eq.s32.totalorder %s20, 0
      %p265 = por %p263, %p264
      %p266 = scmp.ne.s32.totalorder %s255, %s258
      %p267 = scmp.eq.s32.totalorder %s25, 1
      %p268 = por %p266, %p267
      %p269 = scmp.ne.s32.totalorder %s258, %s259
      %p270 = scmp.eq.s32.totalorder %s25, 0
      %p271 = por %p269, %p270
      %p272 = scmp.ne.s32.totalorder %s258, %s259
      %p273 = scmp.eq.s32.totalorder %s26, 1
      %p274 = por %p272, %p273
      %p276 = scmp.ne.s32.totalorder %s259, %s275
      %p277 = scmp.eq.s32.totalorder %s26, 0
      %p278 = por %p276, %p277
      %p279 = scmp.le.s32.totalorder 1, %s20
      %p280 = scmp.lt.s32.totalorder %s20, 3
      %p281 = pnand %p279, %p280
      %p282 = pneg %p281
      // Predicated region
      $region9: #{gpt_extractor_forward.1} parent=5 // pred_check
        _
      $region10: #{gpt_extractor_forward.1} parent=5 // pred_check_branch
        %284 = sbr.rel (%p281) target = $region12
      $region11: #{gpt_extractor_forward.1} parent=5 // pred_region
        %s285 = ssub.s32 %s20, 1
        // Predicated region
        $region13: #{gpt_extractor_forward.1} parent=11 // pred_check
          %p286 = pneg %p93
        $region14: #{gpt_extractor_forward.1} parent=11 // pred_check_branch
          %288 = sbr.rel (%p286) target = $region16
        $region15: #{gpt_extractor_forward.1} parent=11 // pred_region
          _
        $region16: #{gpt_extractor_forward.1} parent=11 // pred_fallthru
          _
        // Predicated region
        $region17: #{gpt_extractor_forward.1} parent=11 // pred_check
          %p289 = pneg %p114
        $region18: #{gpt_extractor_forward.1} parent=11 // pred_check_branch
          %291 = sbr.rel (%p289) target = $region20
        $region19: #{gpt_extractor_forward.1} parent=11 // pred_region
          _
        $region20: #{gpt_extractor_forward.1} parent=11 // pred_fallthru
          _
        // Predicated region
        $region21: #{gpt_extractor_forward.1} parent=11 // pred_check
          %p292 = pneg %p135
        $region22: #{gpt_extractor_forward.1} parent=11 // pred_check_branch
          %294 = sbr.rel (%p292) target = $region24
        $region23: #{gpt_extractor_forward.1} parent=11 // pred_region
          _
        $region24: #{gpt_extractor_forward.1} parent=11 // pred_fallthru
          _
        // Predicated region
        $region25: #{gpt_extractor_forward.1} parent=11 // pred_check
          %p295 = pneg %p156
        $region26: #{gpt_extractor_forward.1} parent=11 // pred_check_branch
          %297 = sbr.rel (%p295) target = $region28
        $region27: #{gpt_extractor_forward.1} parent=11 // pred_region
          _
        $region28: #{gpt_extractor_forward.1} parent=11 // pred_fallthru
          _
        // Predicated region
        $region29: #{gpt_extractor_forward.1} parent=11 // pred_check
          %p298 = pneg %p177
        $region30: #{gpt_extractor_forward.1} parent=11 // pred_check_branch
          %300 = sbr.rel (%p298) target = $region32
        $region31: #{gpt_extractor_forward.1} parent=11 // pred_region
          _
        $region32: #{gpt_extractor_forward.1} parent=11 // pred_fallthru
          _
        // Predicated region
        $region33: #{gpt_extractor_forward.1} parent=11 // pred_check
          %p301 = pneg %p198
        $region34: #{gpt_extractor_forward.1} parent=11 // pred_check_branch
          %303 = sbr.rel (%p301) target = $region36
        $region35: #{gpt_extractor_forward.1} parent=11 // pred_region
          _
        $region36: #{gpt_extractor_forward.1} parent=11 // pred_fallthru
          _
        // Predicated region
        $region37: #{gpt_extractor_forward.1} parent=11 // pred_check
          %p304 = pneg %p219
        $region38: #{gpt_extractor_forward.1} parent=11 // pred_check_branch
          %306 = sbr.rel (%p304) target = $region40
        $region39: #{gpt_extractor_forward.1} parent=11 // pred_region
          _
        $region40: #{gpt_extractor_forward.1} parent=11 // pred_fallthru
          _
      $region12: #{gpt_extractor_forward.1} parent=5 // pred_fallthru
        _
      %p307 = scmp.lt.s32.totalorder %s20, 2
      // Predicated region
      $region41: #{gpt_extractor_forward.1} parent=5 // pred_check
        %p308 = pneg %p307
      $region42: #{gpt_extractor_forward.1} parent=5 // pred_check_branch
        %310 = sbr.rel (%p308) target = $region44
      $region43: #{gpt_extractor_forward.1} parent=5 // pred_region
        // Predicated region
        $region45: #{gpt_extractor_forward.1} parent=43 // pred_check
          %p311 = pneg %p40
        $region46: #{gpt_extractor_forward.1} parent=43 // pred_check_branch
          %313 = sbr.rel (%p311) target = $region48
        $region47: #{gpt_extractor_forward.1} parent=43 // pred_region
          %p314 = scmp.lt.s32.totalorder %s20, 1
          %s315 = scalar_select %p314, %s20, 1
          %s316 = smul.addr %s315, 8
          %s317 = scalar_lea.vmem %s0, %s316
        $region48: #{gpt_extractor_forward.1} parent=43 // pred_fallthru
          _
        // Predicated region
        $region49: #{gpt_extractor_forward.1} parent=43 // pred_check
          %p318 = pneg %p66
        $region50: #{gpt_extractor_forward.1} parent=43 // pred_check_branch
          %320 = sbr.rel (%p318) target = $region52
        $region51: #{gpt_extractor_forward.1} parent=43 // pred_region
          %p321 = scmp.lt.s32.totalorder %s20, 1
          %s322 = scalar_select %p321, %s20, 1
          %s323 = smul.addr %s322, 8
          %s324 = scalar_lea.vmem %s1, %s323
        $region52: #{gpt_extractor_forward.1} parent=43 // pred_fallthru
          _
      $region44: #{gpt_extractor_forward.1} parent=5 // pred_fallthru
        _
      %p325 = scmp.le.s32.totalorder 1, %s20
      %p326 = scmp.lt.s32.totalorder %s20, 3
      %p327 = pnand %p325, %p326
      %p328 = pneg %p327
      // Predicated region
      $region53: #{gpt_extractor_forward.1} parent=5 // pred_check
        _
      $region54: #{gpt_extractor_forward.1} parent=5 // pred_check_branch
        %330 = sbr.rel (%p327) target = $region56
      $region55: #{gpt_extractor_forward.1} parent=5 // pred_region
        %s331 = ssub.s32 %s20, 1
        %p332 = scmp.lt.s32.totalorder %s25, 1
        %s333 = scalar_select %p332, %s25, 1
        %s334 = smul.addr %s333, 8
        %s335 = scalar_lea.vmem %s0, %s334
        %p336 = pneg %p46
        %p337 = pneg %p43
        %p338 = scmp.lt.s32.totalorder %s25, 1
        %s339 = scalar_select %p338, %s25, 1
        %s340 = smul.addr %s339, 8
        %s341 = scalar_lea.vmem %s1, %s340
        %p342 = pneg %p72
        %p343 = pneg %p69
        %p344 = pneg %p93
        %p345 = pneg %p90
        %p346 = pneg %p114
        %p347 = pneg %p111
        %p348 = pneg %p135
        %p349 = pneg %p132
        %p350 = pneg %p156
        %p351 = pneg %p153
        %p352 = pneg %p177
        %p353 = pneg %p174
        %p354 = pneg %p198
        %p355 = pneg %p195
        %p356 = pneg %p219
        %p357 = pneg %p216
        %p358 = pneg %p245
        %p359 = pneg %p242
        %p360 = scmp.lt.s32.totalorder %s25, 1
        %s361 = scalar_select %p360, %s25, 1
        %s362 = smul.addr %s361, 8
        %s363 = scalar_lea.vmem %s9, %s362
        %p364 = pneg %p271
        %p365 = pneg %p268
        %s366 = sand.u32 %s258, 1
        %s367 = scalar_lea.sflag [#allocation3], %s366
        %s368 = sand.u32 %s258, 1
        %s369 = smul.addr %s368, 8
        %s370 = scalar_lea.vmem [#allocation2], %s369
        %p371 = scmp.lt.s32.totalorder %s25, 1
        %s372 = scalar_select %p371, %s25, 1
        %s373 = smul.addr %s372, 8
        %s374 = scalar_lea.vmem %s0, %s373
        %p375 = scmp.lt.s32.totalorder %s25, 1
        %s376 = scalar_select %p375, %s25, 1
        %s377 = smul.addr %s376, 8
        %s378 = scalar_lea.vmem %s1, %s377
        %p379 = scmp.lt.s32.totalorder %s25, 1
        %s380 = scalar_select %p379, %s25, 1
        %s381 = smul.addr %s380, 8
        %s382 = scalar_lea.vmem %s9, %s381
        %v383 = vld [vmem:[%s378] sm:$0xff]
        %v384 = vld [vmem:[%s374] sm:$0xff]
        %v385 = vlaneseq
        %v386 = vshrl.u32 %v385, 7
        %v387 = vlaneseq
        %v388 = vand.u32 %v387, 127
        %vm389 = vcmp.gt.s32.totalorder %v388, %v386
        %v390 = vsel %vm389, 1, 0
        %vm391 = vcmp.eq.s32.totalorder %v390, 1
        %v392 = vadd.f32 %v384, %v383
        %v393 = vld [vmem:[%s7] sm:$0x1]
        %v394 = vld [vmem:[%s7 + $0x1] sm:$0x1]
        %vm395 = vcmask 261120
        %v396 = vsel %vm395, %v392, 0.0
        %397 = vadd.xlane.f32.xlu0 %v396
        %v398 = vpop.xlane.xlu0 %397
        %v399 = vrcp.pop 32.0
        %v400 = vmul.f32 32.0, %v399
        %v401 = vsub.f32 1.0, %v400
        %v402 = vmul.f32 %v399, %v401
        %v403 = vadd.f32 %v399, %v402
        %vm404 = vweird.f32 %v399
        %v405 = vsel %vm404, %v399, %v403
        %v406 = vmul.f32 %v398, %v405
        %v407 = vsub.f32 %v392, %v406
        %v408 = vmul.f32 %v407, %v407
        %v409 = vsel %vm395, %v408, 0.0
        %410 = vadd.xlane.f32.xlu0 %v409
        %v411 = vpop.xlane.xlu0 %410
        %v412 = vmul.f32 %v411, %v405
        %v413 = vadd.f32 %v412, 1e-05
        %v414 = vrsqrt.pop %v413
        %v415 = vmul.f32 %v414, %v413
        %v416 = vmul.f32 %v415, %v414
        %v417 = vmul.f32 0.5, %v416
        %v418 = vsub.f32 1.5, %v417
        %v419 = vmul.f32 %v414, %v418
        %vm420 = vweird.f32 %v413
        %vm421 = vweird.f32 %v414
        %vm422 = vmor %vm420, %vm421
        %v423 = vsel %vm422, %v414, %v419
        %v424 = vmul.f32 %v407, %v423
        %v425 = vperm.slane %v393, 0
        %v426 = vmul.f32 %v424, %v425
        %v427 = vperm.slane %v394, 0
        %v428 = vadd.f32 %v426, %v427
        %v429 = vld [vmem:[%s2] sm:$0xff]
        %v430 = vld [vmem:[%s2 + $0x8] sm:$0xff]
        %v431 = vld [vmem:[%s2 + $0x10] sm:$0xff]
        %v432 = vld [vmem:[%s2 + $0x18] sm:$0xff]
        %v433 = vld [vmem:[%s3] sm:$0x1]
        %v434 = vld [vmem:[%s3 + $0x1] sm:$0x1]
        %v435 = vld [vmem:[%s3 + $0x2] sm:$0x1]
        %v436 = vld [vmem:[%s3 + $0x3] sm:$0x1]
        %v441 = vperm.slane %v433, 0
        %v442 = vperm.slane %v434, 0
        %v443 = vperm.slane %v435, 0
        %v444 = vperm.slane %v436, 0
        %v450 = vsel %vm395, %v428, 0
        %v453 = vsel %vm395, %v429, 0
        %455 = vmatpush.xpose.msra.mxu0 0.0
        %456 = vmatpush.xpose.msra.mxu0 0.0
        %457 = vmatpush.xpose.msra.mxu0 0.0
        %458 = vmatpush.xpose.msra.mxu0 0.0
        %459 = vmatpush.xpose.msra.mxu0 0.0
        %460 = vmatpush.xpose.msra.mxu0 0.0
        %461 = vmatpush.xpose.msra.mxu0 0.0
        %462 = vmatpush.xpose.msra.mxu0 0.0
        %463 = vmatpush.xpose.msra.mxu0 0.0
        %464 = vmatpush.xpose.msra.mxu0 0.0
        %465 = vmatpush.xpose.msra.mxu0 0.0
        %466 = vmatpush.xpose.msra.mxu0 0.0
        %467 = vmatpush.xpose.msra.mxu0 0.0
        %468 = vmatpush.xpose.msra.mxu0 0.0
        %469 = vmatpush.xpose.msra.mxu0 0.0
        %470 = vmatpush.xpose.msra.mxu0 %v453
        %471 = vmatmul.f32.gmra.mxu0 %v450
        %v472 = vpop.f32.mrf.mxu0
        %v473 = vadd.f32 %v441, %v472
        %474 = vdwg.mxu0
        %v476 = vsel %vm395, %v430, 0
        %478 = vmatpush.xpose.msra.mxu0 0.0
        %479 = vmatpush.xpose.msra.mxu0 0.0
        %480 = vmatpush.xpose.msra.mxu0 0.0
        %481 = vmatpush.xpose.msra.mxu0 0.0
        %482 = vmatpush.xpose.msra.mxu0 0.0
        %483 = vmatpush.xpose.msra.mxu0 0.0
        %484 = vmatpush.xpose.msra.mxu0 0.0
        %485 = vmatpush.xpose.msra.mxu0 0.0
        %486 = vmatpush.xpose.msra.mxu0 0.0
        %487 = vmatpush.xpose.msra.mxu0 0.0
        %488 = vmatpush.xpose.msra.mxu0 0.0
        %489 = vmatpush.xpose.msra.mxu0 0.0
        %490 = vmatpush.xpose.msra.mxu0 0.0
        %491 = vmatpush.xpose.msra.mxu0 0.0
        %492 = vmatpush.xpose.msra.mxu0 0.0
        %493 = vmatpush.xpose.msra.mxu0 %v476
        %494 = vmatmul.f32.gmra.mxu0 %v450
        %v495 = vpop.f32.mrf.mxu0
        %v496 = vadd.f32 %v442, %v495
        %497 = vdwg.mxu0
        %v499 = vsel %vm395, %v431, 0
        %501 = vmatpush.xpose.msra.mxu0 0.0
        %502 = vmatpush.xpose.msra.mxu0 0.0
        %503 = vmatpush.xpose.msra.mxu0 0.0
        %504 = vmatpush.xpose.msra.mxu0 0.0
        %505 = vmatpush.xpose.msra.mxu0 0.0
        %506 = vmatpush.xpose.msra.mxu0 0.0
        %507 = vmatpush.xpose.msra.mxu0 0.0
        %508 = vmatpush.xpose.msra.mxu0 0.0
        %509 = vmatpush.xpose.msra.mxu0 0.0
        %510 = vmatpush.xpose.msra.mxu0 0.0
        %511 = vmatpush.xpose.msra.mxu0 0.0
        %512 = vmatpush.xpose.msra.mxu0 0.0
        %513 = vmatpush.xpose.msra.mxu0 0.0
        %514 = vmatpush.xpose.msra.mxu0 0.0
        %515 = vmatpush.xpose.msra.mxu0 0.0
        %516 = vmatpush.xpose.msra.mxu0 %v499
        %517 = vmatmul.f32.gmra.mxu0 %v450
        %v518 = vpop.f32.mrf.mxu0
        %v519 = vadd.f32 %v443, %v518
        %520 = vdwg.mxu0
        %v522 = vsel %vm395, %v432, 0
        %524 = vmatpush.xpose.msra.mxu0 0.0
        %525 = vmatpush.xpose.msra.mxu0 0.0
        %526 = vmatpush.xpose.msra.mxu0 0.0
        %527 = vmatpush.xpose.msra.mxu0 0.0
        %528 = vmatpush.xpose.msra.mxu0 0.0
        %529 = vmatpush.xpose.msra.mxu0 0.0
        %530 = vmatpush.xpose.msra.mxu0 0.0
        %531 = vmatpush.xpose.msra.mxu0 0.0
        %532 = vmatpush.xpose.msra.mxu0 0.0
        %533 = vmatpush.xpose.msra.mxu0 0.0
        %534 = vmatpush.xpose.msra.mxu0 0.0
        %535 = vmatpush.xpose.msra.mxu0 0.0
        %536 = vmatpush.xpose.msra.mxu0 0.0
        %537 = vmatpush.xpose.msra.mxu0 0.0
        %538 = vmatpush.xpose.msra.mxu0 0.0
        %539 = vmatpush.xpose.msra.mxu0 %v522
        %540 = vmatmul.f32.gmra.mxu0 %v450
        %v541 = vpop.f32.mrf.mxu0
        %v542 = vadd.f32 %v444, %v541
        %543 = vdwg.mxu0
        %s544 = scalar_lea.vmem %s2, 32
        %v545 = vld [vmem:[%s544] sm:$0xff]
        %v546 = vld [vmem:[%s544 + $0x8] sm:$0xff]
        %v547 = vld [vmem:[%s544 + $0x10] sm:$0xff]
        %v548 = vld [vmem:[%s544 + $0x18] sm:$0xff]
        %s549 = scalar_lea.vmem %s3, 4
        %v550 = vld [vmem:[%s549] sm:$0x1]
        %v551 = vld [vmem:[%s549 + $0x1] sm:$0x1]
        %v552 = vld [vmem:[%s549 + $0x2] sm:$0x1]
        %v553 = vld [vmem:[%s549 + $0x3] sm:$0x1]
        %v558 = vperm.slane %v550, 0
        %v559 = vperm.slane %v551, 0
        %v560 = vperm.slane %v552, 0
        %v561 = vperm.slane %v553, 0
        %v567 = vsel %vm395, %v545, 0
        %569 = vmatpush.xpose.msra.mxu0 0.0
        %570 = vmatpush.xpose.msra.mxu0 0.0
        %571 = vmatpush.xpose.msra.mxu0 0.0
        %572 = vmatpush.xpose.msra.mxu0 0.0
        %573 = vmatpush.xpose.msra.mxu0 0.0
        %574 = vmatpush.xpose.msra.mxu0 0.0
        %575 = vmatpush.xpose.msra.mxu0 0.0
        %576 = vmatpush.xpose.msra.mxu0 0.0
        %577 = vmatpush.xpose.msra.mxu0 0.0
        %578 = vmatpush.xpose.msra.mxu0 0.0
        %579 = vmatpush.xpose.msra.mxu0 0.0
        %580 = vmatpush.xpose.msra.mxu0 0.0
        %581 = vmatpush.xpose.msra.mxu0 0.0
        %582 = vmatpush.xpose.msra.mxu0 0.0
        %583 = vmatpush.xpose.msra.mxu0 0.0
        %584 = vmatpush.xpose.msra.mxu0 %v567
        %585 = vmatmul.f32.gmra.mxu0 %v450
        %v586 = vpop.f32.mrf.mxu0
        %v587 = vadd.f32 %v558, %v586
        %588 = vdwg.mxu0
        %v590 = vsel %vm395, %v546, 0
        %592 = vmatpush.xpose.msra.mxu0 0.0
        %593 = vmatpush.xpose.msra.mxu0 0.0
        %594 = vmatpush.xpose.msra.mxu0 0.0
        %595 = vmatpush.xpose.msra.mxu0 0.0
        %596 = vmatpush.xpose.msra.mxu0 0.0
        %597 = vmatpush.xpose.msra.mxu0 0.0
        %598 = vmatpush.xpose.msra.mxu0 0.0
        %599 = vmatpush.xpose.msra.mxu0 0.0
        %600 = vmatpush.xpose.msra.mxu0 0.0
        %601 = vmatpush.xpose.msra.mxu0 0.0
        %602 = vmatpush.xpose.msra.mxu0 0.0
        %603 = vmatpush.xpose.msra.mxu0 0.0
        %604 = vmatpush.xpose.msra.mxu0 0.0
        %605 = vmatpush.xpose.msra.mxu0 0.0
        %606 = vmatpush.xpose.msra.mxu0 0.0
        %607 = vmatpush.xpose.msra.mxu0 %v590
        %608 = vmatmul.f32.gmra.mxu0 %v450
        %v609 = vpop.f32.mrf.mxu0
        %v610 = vadd.f32 %v559, %v609
        %611 = vdwg.mxu0
        %v613 = vsel %vm395, %v547, 0
        %615 = vmatpush.xpose.msra.mxu0 0.0
        %616 = vmatpush.xpose.msra.mxu0 0.0
        %617 = vmatpush.xpose.msra.mxu0 0.0
        %618 = vmatpush.xpose.msra.mxu0 0.0
        %619 = vmatpush.xpose.msra.mxu0 0.0
        %620 = vmatpush.xpose.msra.mxu0 0.0
        %621 = vmatpush.xpose.msra.mxu0 0.0
        %622 = vmatpush.xpose.msra.mxu0 0.0
        %623 = vmatpush.xpose.msra.mxu0 0.0
        %624 = vmatpush.xpose.msra.mxu0 0.0
        %625 = vmatpush.xpose.msra.mxu0 0.0
        %626 = vmatpush.xpose.msra.mxu0 0.0
        %627 = vmatpush.xpose.msra.mxu0 0.0
        %628 = vmatpush.xpose.msra.mxu0 0.0
        %629 = vmatpush.xpose.msra.mxu0 0.0
        %630 = vmatpush.xpose.msra.mxu0 %v613
        %631 = vmatmul.f32.gmra.mxu0 %v450
        %v632 = vpop.f32.mrf.mxu0
        %v633 = vadd.f32 %v560, %v632
        %634 = vdwg.mxu0
        %v636 = vsel %vm395, %v548, 0
        %638 = vmatpush.xpose.msra.mxu0 0.0
        %639 = vmatpush.xpose.msra.mxu0 0.0
        %640 = vmatpush.xpose.msra.mxu0 0.0
        %641 = vmatpush.xpose.msra.mxu0 0.0
        %642 = vmatpush.xpose.msra.mxu0 0.0
        %643 = vmatpush.xpose.msra.mxu0 0.0
        %644 = vmatpush.xpose.msra.mxu0 0.0
        %645 = vmatpush.xpose.msra.mxu0 0.0
        %646 = vmatpush.xpose.msra.mxu0 0.0
        %647 = vmatpush.xpose.msra.mxu0 0.0
        %648 = vmatpush.xpose.msra.mxu0 0.0
        %649 = vmatpush.xpose.msra.mxu0 0.0
        %650 = vmatpush.xpose.msra.mxu0 0.0
        %651 = vmatpush.xpose.msra.mxu0 0.0
        %652 = vmatpush.xpose.msra.mxu0 0.0
        %653 = vmatpush.xpose.msra.mxu0 %v636
        %654 = vmatmul.f32.gmra.mxu0 %v450
        %v655 = vpop.f32.mrf.mxu0
        %v656 = vadd.f32 %v561, %v655
        %657 = vdwg.mxu0
        %s658 = scalar_lea.vmem %s2, 64
        %v659 = vld [vmem:[%s658] sm:$0xff]
        %v660 = vld [vmem:[%s658 + $0x8] sm:$0xff]
        %v661 = vld [vmem:[%s658 + $0x10] sm:$0xff]
        %v662 = vld [vmem:[%s658 + $0x18] sm:$0xff]
        %s663 = scalar_lea.vmem %s3, 8
        %v664 = vld [vmem:[%s663] sm:$0x1]
        %v665 = vld [vmem:[%s663 + $0x1] sm:$0x1]
        %v666 = vld [vmem:[%s663 + $0x2] sm:$0x1]
        %v667 = vld [vmem:[%s663 + $0x3] sm:$0x1]
        %v672 = vperm.slane %v664, 0
        %v673 = vperm.slane %v665, 0
        %v674 = vperm.slane %v666, 0
        %v675 = vperm.slane %v667, 0
        %v681 = vsel %vm395, %v659, 0
        %683 = vmatpush.xpose.msra.mxu0 0.0
        %684 = vmatpush.xpose.msra.mxu0 0.0
        %685 = vmatpush.xpose.msra.mxu0 0.0
        %686 = vmatpush.xpose.msra.mxu0 0.0
        %687 = vmatpush.xpose.msra.mxu0 0.0
        %688 = vmatpush.xpose.msra.mxu0 0.0
        %689 = vmatpush.xpose.msra.mxu0 0.0
        %690 = vmatpush.xpose.msra.mxu0 0.0
        %691 = vmatpush.xpose.msra.mxu0 0.0
        %692 = vmatpush.xpose.msra.mxu0 0.0
        %693 = vmatpush.xpose.msra.mxu0 0.0
        %694 = vmatpush.xpose.msra.mxu0 0.0
        %695 = vmatpush.xpose.msra.mxu0 0.0
        %696 = vmatpush.xpose.msra.mxu0 0.0
        %697 = vmatpush.xpose.msra.mxu0 0.0
        %698 = vmatpush.xpose.msra.mxu0 %v681
        %699 = vmatmul.f32.gmra.mxu0 %v450
        %v700 = vpop.f32.mrf.mxu0
        %v701 = vadd.f32 %v672, %v700
        %702 = vdwg.mxu0
        %v704 = vsel %vm395, %v660, 0
        %706 = vmatpush.xpose.msra.mxu0 0.0
        %707 = vmatpush.xpose.msra.mxu0 0.0
        %708 = vmatpush.xpose.msra.mxu0 0.0
        %709 = vmatpush.xpose.msra.mxu0 0.0
        %710 = vmatpush.xpose.msra.mxu0 0.0
        %711 = vmatpush.xpose.msra.mxu0 0.0
        %712 = vmatpush.xpose.msra.mxu0 0.0
        %713 = vmatpush.xpose.msra.mxu0 0.0
        %714 = vmatpush.xpose.msra.mxu0 0.0
        %715 = vmatpush.xpose.msra.mxu0 0.0
        %716 = vmatpush.xpose.msra.mxu0 0.0
        %717 = vmatpush.xpose.msra.mxu0 0.0
        %718 = vmatpush.xpose.msra.mxu0 0.0
        %719 = vmatpush.xpose.msra.mxu0 0.0
        %720 = vmatpush.xpose.msra.mxu0 0.0
        %721 = vmatpush.xpose.msra.mxu0 %v704
        %722 = vmatmul.f32.gmra.mxu0 %v450
        %v723 = vpop.f32.mrf.mxu0
        %v724 = vadd.f32 %v673, %v723
        %725 = vdwg.mxu0
        %v727 = vsel %vm395, %v661, 0
        %729 = vmatpush.xpose.msra.mxu0 0.0
        %730 = vmatpush.xpose.msra.mxu0 0.0
        %731 = vmatpush.xpose.msra.mxu0 0.0
        %732 = vmatpush.xpose.msra.mxu0 0.0
        %733 = vmatpush.xpose.msra.mxu0 0.0
        %734 = vmatpush.xpose.msra.mxu0 0.0
        %735 = vmatpush.xpose.msra.mxu0 0.0
        %736 = vmatpush.xpose.msra.mxu0 0.0
        %737 = vmatpush.xpose.msra.mxu0 0.0
        %738 = vmatpush.xpose.msra.mxu0 0.0
        %739 = vmatpush.xpose.msra.mxu0 0.0
        %740 = vmatpush.xpose.msra.mxu0 0.0
        %741 = vmatpush.xpose.msra.mxu0 0.0
        %742 = vmatpush.xpose.msra.mxu0 0.0
        %743 = vmatpush.xpose.msra.mxu0 0.0
        %744 = vmatpush.xpose.msra.mxu0 %v727
        %745 = vmatmul.f32.gmra.mxu0 %v450
        %v746 = vpop.f32.mrf.mxu0
        %v747 = vadd.f32 %v674, %v746
        %748 = vdwg.mxu0
        %v750 = vsel %vm395, %v662, 0
        %752 = vmatpush.xpose.msra.mxu0 0.0
        %753 = vmatpush.xpose.msra.mxu0 0.0
        %754 = vmatpush.xpose.msra.mxu0 0.0
        %755 = vmatpush.xpose.msra.mxu0 0.0
        %756 = vmatpush.xpose.msra.mxu0 0.0
        %757 = vmatpush.xpose.msra.mxu0 0.0
        %758 = vmatpush.xpose.msra.mxu0 0.0
        %759 = vmatpush.xpose.msra.mxu0 0.0
        %760 = vmatpush.xpose.msra.mxu0 0.0
        %761 = vmatpush.xpose.msra.mxu0 0.0
        %762 = vmatpush.xpose.msra.mxu0 0.0
        %763 = vmatpush.xpose.msra.mxu0 0.0
        %764 = vmatpush.xpose.msra.mxu0 0.0
        %765 = vmatpush.xpose.msra.mxu0 0.0
        %766 = vmatpush.xpose.msra.mxu0 0.0
        %767 = vmatpush.xpose.msra.mxu0 %v750
        %768 = vmatmul.f32.gmra.mxu0 %v450
        %v769 = vpop.f32.mrf.mxu0
        %v770 = vadd.f32 %v675, %v769
        %771 = vdwg.mxu0
        %vm772 = vcmask 64512
        %v774 = vsel %vm772, %v473, 0
        %v777 = vsel %vm772, %v587, 0
        %779 = vmatpush.xpose.msra.mxu0 0.0
        %780 = vmatpush.xpose.msra.mxu0 0.0
        %781 = vmatpush.xpose.msra.mxu0 0.0
        %782 = vmatpush.xpose.msra.mxu0 0.0
        %783 = vmatpush.xpose.msra.mxu0 0.0
        %784 = vmatpush.xpose.msra.mxu0 0.0
        %785 = vmatpush.xpose.msra.mxu0 0.0
        %786 = vmatpush.xpose.msra.mxu0 0.0
        %787 = vmatpush.xpose.msra.mxu0 0.0
        %788 = vmatpush.xpose.msra.mxu0 0.0
        %789 = vmatpush.xpose.msra.mxu0 0.0
        %790 = vmatpush.xpose.msra.mxu0 0.0
        %791 = vmatpush.xpose.msra.mxu0 0.0
        %792 = vmatpush.xpose.msra.mxu0 0.0
        %793 = vmatpush.xpose.msra.mxu0 0.0
        %794 = vmatpush.xpose.msra.mxu0 %v777
        %795 = vmatmul.f32.gmra.mxu0 %v774
        %v796 = vpop.f32.mrf.mxu0
        %v797 = vadd.f32 0.0, %v796
        %798 = vdwg.mxu0
        %v800 = vsel %vm772, %v496, 0
        %v803 = vsel %vm772, %v610, 0
        %805 = vmatpush.xpose.msra.mxu0 0.0
        %806 = vmatpush.xpose.msra.mxu0 0.0
        %807 = vmatpush.xpose.msra.mxu0 0.0
        %808 = vmatpush.xpose.msra.mxu0 0.0
        %809 = vmatpush.xpose.msra.mxu0 0.0
        %810 = vmatpush.xpose.msra.mxu0 0.0
        %811 = vmatpush.xpose.msra.mxu0 0.0
        %812 = vmatpush.xpose.msra.mxu0 0.0
        %813 = vmatpush.xpose.msra.mxu0 0.0
        %814 = vmatpush.xpose.msra.mxu0 0.0
        %815 = vmatpush.xpose.msra.mxu0 0.0
        %816 = vmatpush.xpose.msra.mxu0 0.0
        %817 = vmatpush.xpose.msra.mxu0 0.0
        %818 = vmatpush.xpose.msra.mxu0 0.0
        %819 = vmatpush.xpose.msra.mxu0 0.0
        %820 = vmatpush.xpose.msra.mxu0 %v803
        %821 = vmatmul.f32.gmra.mxu0 %v800
        %v822 = vpop.f32.mrf.mxu0
        %v823 = vadd.f32 0.0, %v822
        %824 = vdwg.mxu0
        %v826 = vsel %vm772, %v519, 0
        %v829 = vsel %vm772, %v633, 0
        %831 = vmatpush.xpose.msra.mxu0 0.0
        %832 = vmatpush.xpose.msra.mxu0 0.0
        %833 = vmatpush.xpose.msra.mxu0 0.0
        %834 = vmatpush.xpose.msra.mxu0 0.0
        %835 = vmatpush.xpose.msra.mxu0 0.0
        %836 = vmatpush.xpose.msra.mxu0 0.0
        %837 = vmatpush.xpose.msra.mxu0 0.0
        %838 = vmatpush.xpose.msra.mxu0 0.0
        %839 = vmatpush.xpose.msra.mxu0 0.0
        %840 = vmatpush.xpose.msra.mxu0 0.0
        %841 = vmatpush.xpose.msra.mxu0 0.0
        %842 = vmatpush.xpose.msra.mxu0 0.0
        %843 = vmatpush.xpose.msra.mxu0 0.0
        %844 = vmatpush.xpose.msra.mxu0 0.0
        %845 = vmatpush.xpose.msra.mxu0 0.0
        %846 = vmatpush.xpose.msra.mxu0 %v829
        %847 = vmatmul.f32.gmra.mxu0 %v826
        %v848 = vpop.f32.mrf.mxu0
        %v849 = vadd.f32 0.0, %v848
        %850 = vdwg.mxu0
        %v852 = vsel %vm772, %v542, 0
        %v855 = vsel %vm772, %v656, 0
        %857 = vmatpush.xpose.msra.mxu0 0.0
        %858 = vmatpush.xpose.msra.mxu0 0.0
        %859 = vmatpush.xpose.msra.mxu0 0.0
        %860 = vmatpush.xpose.msra.mxu0 0.0
        %861 = vmatpush.xpose.msra.mxu0 0.0
        %862 = vmatpush.xpose.msra.mxu0 0.0
        %863 = vmatpush.xpose.msra.mxu0 0.0
        %864 = vmatpush.xpose.msra.mxu0 0.0
        %865 = vmatpush.xpose.msra.mxu0 0.0
        %866 = vmatpush.xpose.msra.mxu0 0.0
        %867 = vmatpush.xpose.msra.mxu0 0.0
        %868 = vmatpush.xpose.msra.mxu0 0.0
        %869 = vmatpush.xpose.msra.mxu0 0.0
        %870 = vmatpush.xpose.msra.mxu0 0.0
        %871 = vmatpush.xpose.msra.mxu0 0.0
        %872 = vmatpush.xpose.msra.mxu0 %v855
        %873 = vmatmul.f32.gmra.mxu0 %v852
        %v874 = vpop.f32.mrf.mxu0
        %v875 = vadd.f32 0.0, %v874
        %876 = vdwg.mxu0
        %v877 = vmul.f32 %v797, 0.35355338
        %v878 = vmul.f32 %v823, 0.35355338
        %v879 = vmul.f32 %v849, 0.35355338
        %v880 = vmul.f32 %v875, 0.35355338
        %v881 = vsel %vm391, -1e+30, %v877
        %v882 = vsel %vm391, -1e+30, %v878
        %v883 = vsel %vm391, -1e+30, %v879
        %v884 = vsel %vm391, -1e+30, %v880
        %v885 = vsel %vm772, %v881, -inf
        %886 = vmax.xlane.f32.xlu0 %v885
        %v887 = vpop.xlane.xlu0 %886
        %v888 = vsel %vm772, %v882, -inf
        %889 = vmax.xlane.f32.xlu0 %v888
        %v890 = vpop.xlane.xlu0 %889
        %v891 = vsel %vm772, %v883, -inf
        %892 = vmax.xlane.f32.xlu0 %v891
        %v893 = vpop.xlane.xlu0 %892
        %v894 = vsel %vm772, %v884, -inf
        %895 = vmax.xlane.f32.xlu0 %v894
        %v896 = vpop.xlane.xlu0 %895
        %v897 = vsub.f32 %v881, %v887
        %v898 = vsub.f32 %v882, %v890
        %v899 = vsub.f32 %v883, %v893
        %v900 = vsub.f32 %v884, %v896
        %v901 = vmul.f32 %v897, 1.442695
        %v902 = vpow.pop %v901
        %v903 = vmul.f32 %v898, 1.442695
        %v904 = vpow.pop %v903
        %v905 = vmul.f32 %v899, 1.442695
        %v906 = vpow.pop %v905
        %v907 = vmul.f32 %v900, 1.442695
        %v908 = vpow.pop %v907
        %v909 = vsel %vm772, %v902, 0.0
        %910 = vadd.xlane.f32.xlu0 %v909
        %v911 = vpop.xlane.xlu0 %910
        %v912 = vsel %vm772, %v904, 0.0
        %913 = vadd.xlane.f32.xlu0 %v912
        %v914 = vpop.xlane.xlu0 %913
        %v915 = vsel %vm772, %v906, 0.0
        %916 = vadd.xlane.f32.xlu0 %v915
        %v917 = vpop.xlane.xlu0 %916
        %v918 = vsel %vm772, %v908, 0.0
        %919 = vadd.xlane.f32.xlu0 %v918
        %v920 = vpop.xlane.xlu0 %919
        %v921 = vrcp.pop %v911
        %v922 = vmul.f32 %v911, %v921
        %v923 = vsub.f32 1.0, %v922
        %v924 = vmul.f32 %v921, %v923
        %v925 = vadd.f32 %v921, %v924
        %vm926 = vweird.f32 %v911
        %vm927 = vweird.f32 %v921
        %vm928 = vmor %vm926, %vm927
        %v929 = vsel %vm928, %v921, %v925
        %v930 = vand.u32 2147483647, %v911
        %vm931 = vcmp.eq.f32.partialorder %v930, 8.507059e+37
        %v932 = vand.u32 %v911, 2147483648
        %v933 = vor.u32 1.1754944e-38, %v932
        %v934 = vsel %vm931, %v933, %v929
        %v935 = vmul.f32 %v902, %v934
        %v936 = vrcp.pop %v914
        %v937 = vmul.f32 %v914, %v936
        %v938 = vsub.f32 1.0, %v937
        %v939 = vmul.f32 %v936, %v938
        %v940 = vadd.f32 %v936, %v939
        %vm941 = vweird.f32 %v914
        %vm942 = vweird.f32 %v936
        %vm943 = vmor %vm941, %vm942
        %v944 = vsel %vm943, %v936, %v940
        %v945 = vand.u32 2147483647, %v914
        %vm946 = vcmp.eq.f32.partialorder %v945, 8.507059e+37
        %v947 = vand.u32 %v914, 2147483648
        %v948 = vor.u32 1.1754944e-38, %v947
        %v949 = vsel %vm946, %v948, %v944
        %v950 = vmul.f32 %v904, %v949
        %v951 = vrcp.pop %v917
        %v952 = vmul.f32 %v917, %v951
        %v953 = vsub.f32 1.0, %v952
        %v954 = vmul.f32 %v951, %v953
        %v955 = vadd.f32 %v951, %v954
        %vm956 = vweird.f32 %v917
        %vm957 = vweird.f32 %v951
        %vm958 = vmor %vm956, %vm957
        %v959 = vsel %vm958, %v951, %v955
        %v960 = vand.u32 2147483647, %v917
        %vm961 = vcmp.eq.f32.partialorder %v960, 8.507059e+37
        %v962 = vand.u32 %v917, 2147483648
        %v963 = vor.u32 1.1754944e-38, %v962
        %v964 = vsel %vm961, %v963, %v959
        %v965 = vmul.f32 %v906, %v964
        %v966 = vrcp.pop %v920
        %v967 = vmul.f32 %v920, %v966
        %v968 = vsub.f32 1.0, %v967
        %v969 = vmul.f32 %v966, %v968
        %v970 = vadd.f32 %v966, %v969
        %vm971 = vweird.f32 %v920
        %vm972 = vweird.f32 %v966
        %vm973 = vmor %vm971, %vm972
        %v974 = vsel %vm973, %v966, %v970
        %v975 = vand.u32 2147483647, %v920
        %vm976 = vcmp.eq.f32.partialorder %v975, 8.507059e+37
        %v977 = vand.u32 %v920, 2147483648
        %v978 = vor.u32 1.1754944e-38, %v977
        %v979 = vsel %vm976, %v978, %v974
        %v980 = vmul.f32 %v908, %v979
        %v982 = vsel %vm772, %v935, 0
        %984 = vmatpush.msra.mxu0 0.0
        %985 = vmatpush.msra.mxu0 0.0
        %986 = vmatpush.msra.mxu0 0.0
        %987 = vmatpush.msra.mxu0 0.0
        %988 = vmatpush.msra.mxu0 0.0
        %989 = vmatpush.msra.mxu0 0.0
        %990 = vmatpush.msra.mxu0 0.0
        %991 = vmatpush.msra.mxu0 0.0
        %992 = vmatpush.msra.mxu0 0.0
        %993 = vmatpush.msra.mxu0 0.0
        %994 = vmatpush.msra.mxu0 0.0
        %995 = vmatpush.msra.mxu0 0.0
        %996 = vmatpush.msra.mxu0 0.0
        %997 = vmatpush.msra.mxu0 0.0
        %998 = vmatpush.msra.mxu0 0.0
        %999 = vmatpush.msra.mxu0 %v701
        %1000 = vmatmul.f32.gmra.mxu0 %v982
        %v1001 = vpop.f32.mrf.mxu0
        %v1002 = vadd.f32 0.0, %v1001
        %1003 = vdwg.mxu0
        %v1005 = vsel %vm772, %v950, 0
        %1007 = vmatpush.msra.mxu0 0.0
        %1008 = vmatpush.msra.mxu0 0.0
        %1009 = vmatpush.msra.mxu0 0.0
        %1010 = vmatpush.msra.mxu0 0.0
        %1011 = vmatpush.msra.mxu0 0.0
        %1012 = vmatpush.msra.mxu0 0.0
        %1013 = vmatpush.msra.mxu0 0.0
        %1014 = vmatpush.msra.mxu0 0.0
        %1015 = vmatpush.msra.mxu0 0.0
        %1016 = vmatpush.msra.mxu0 0.0
        %1017 = vmatpush.msra.mxu0 0.0
        %1018 = vmatpush.msra.mxu0 0.0
        %1019 = vmatpush.msra.mxu0 0.0
        %1020 = vmatpush.msra.mxu0 0.0
        %1021 = vmatpush.msra.mxu0 0.0
        %1022 = vmatpush.msra.mxu0 %v724
        %1023 = vmatmul.f32.gmra.mxu0 %v1005
        %v1024 = vpop.f32.mrf.mxu0
        %v1025 = vadd.f32 0.0, %v1024
        %1026 = vdwg.mxu0
        %v1028 = vsel %vm772, %v965, 0
        %1030 = vmatpush.msra.mxu0 0.0
        %1031 = vmatpush.msra.mxu0 0.0
        %1032 = vmatpush.msra.mxu0 0.0
        %1033 = vmatpush.msra.mxu0 0.0
        %1034 = vmatpush.msra.mxu0 0.0
        %1035 = vmatpush.msra.mxu0 0.0
        %1036 = vmatpush.msra.mxu0 0.0
        %1037 = vmatpush.msra.mxu0 0.0
        %1038 = vmatpush.msra.mxu0 0.0
        %1039 = vmatpush.msra.mxu0 0.0
        %1040 = vmatpush.msra.mxu0 0.0
        %1041 = vmatpush.msra.mxu0 0.0
        %1042 = vmatpush.msra.mxu0 0.0
        %1043 = vmatpush.msra.mxu0 0.0
        %1044 = vmatpush.msra.mxu0 0.0
        %1045 = vmatpush.msra.mxu0 %v747
        %1046 = vmatmul.f32.gmra.mxu0 %v1028
        %v1047 = vpop.f32.mrf.mxu0
        %v1048 = vadd.f32 0.0, %v1047
        %1049 = vdwg.mxu0
        %v1051 = vsel %vm772, %v980, 0
        %1053 = vmatpush.msra.mxu0 0.0
        %1054 = vmatpush.msra.mxu0 0.0
        %1055 = vmatpush.msra.mxu0 0.0
        %1056 = vmatpush.msra.mxu0 0.0
        %1057 = vmatpush.msra.mxu0 0.0
        %1058 = vmatpush.msra.mxu0 0.0
        %1059 = vmatpush.msra.mxu0 0.0
        %1060 = vmatpush.msra.mxu0 0.0
        %1061 = vmatpush.msra.mxu0 0.0
        %1062 = vmatpush.msra.mxu0 0.0
        %1063 = vmatpush.msra.mxu0 0.0
        %1064 = vmatpush.msra.mxu0 0.0
        %1065 = vmatpush.msra.mxu0 0.0
        %1066 = vmatpush.msra.mxu0 0.0
        %1067 = vmatpush.msra.mxu0 0.0
        %1068 = vmatpush.msra.mxu0 %v770
        %1069 = vmatmul.f32.gmra.mxu0 %v1051
        %v1070 = vpop.f32.mrf.mxu0
        %v1071 = vadd.f32 0.0, %v1070
        %1072 = vdwg.mxu0
        %v1073 = vld [vmem:[%s4] sm:$0xff]
        %v1074 = vld [vmem:[%s4 + $0x8] sm:$0xff]
        %v1075 = vld [vmem:[%s4 + $0x10] sm:$0xff]
        %v1076 = vld [vmem:[%s4 + $0x18] sm:$0xff]
        %v1078 = vsel %vm772, %v1002, 0
        %1080 = vmatpush.msra.mxu0 0.0
        %1081 = vmatpush.msra.mxu0 0.0
        %1082 = vmatpush.msra.mxu0 0.0
        %1083 = vmatpush.msra.mxu0 0.0
        %1084 = vmatpush.msra.mxu0 0.0
        %1085 = vmatpush.msra.mxu0 0.0
        %1086 = vmatpush.msra.mxu0 0.0
        %1087 = vmatpush.msra.mxu0 0.0
        %1088 = vmatpush.msra.mxu0 0.0
        %1089 = vmatpush.msra.mxu0 0.0
        %1090 = vmatpush.msra.mxu0 0.0
        %1091 = vmatpush.msra.mxu0 0.0
        %1092 = vmatpush.msra.mxu0 0.0
        %1093 = vmatpush.msra.mxu0 0.0
        %1094 = vmatpush.msra.mxu0 0.0
        %1095 = vmatpush.msra.mxu0 %v1073
        %1096 = vmatmul.f32.gmra.mxu0 %v1078
        %v1097 = vpop.f32.mrf.mxu0
        %v1098 = vadd.f32 0.0, %v1097
        %1099 = vdwg.mxu0
        %v1101 = vsel %vm772, %v1025, 0
        %1103 = vmatpush.msra.mxu0 0.0
        %1104 = vmatpush.msra.mxu0 0.0
        %1105 = vmatpush.msra.mxu0 0.0
        %1106 = vmatpush.msra.mxu0 0.0
        %1107 = vmatpush.msra.mxu0 0.0
        %1108 = vmatpush.msra.mxu0 0.0
        %1109 = vmatpush.msra.mxu0 0.0
        %1110 = vmatpush.msra.mxu0 0.0
        %1111 = vmatpush.msra.mxu0 0.0
        %1112 = vmatpush.msra.mxu0 0.0
        %1113 = vmatpush.msra.mxu0 0.0
        %1114 = vmatpush.msra.mxu0 0.0
        %1115 = vmatpush.msra.mxu0 0.0
        %1116 = vmatpush.msra.mxu0 0.0
        %1117 = vmatpush.msra.mxu0 0.0
        %1118 = vmatpush.msra.mxu0 %v1074
        %1119 = vmatmul.f32.gmra.mxu0 %v1101
        %v1120 = vpop.f32.mrf.mxu0
        %v1121 = vadd.f32 0.0, %v1120
        %1122 = vdwg.mxu0
        %v1124 = vsel %vm772, %v1048, 0
        %1126 = vmatpush.msra.mxu0 0.0
        %1127 = vmatpush.msra.mxu0 0.0
        %1128 = vmatpush.msra.mxu0 0.0
        %1129 = vmatpush.msra.mxu0 0.0
        %1130 = vmatpush.msra.mxu0 0.0
        %1131 = vmatpush.msra.mxu0 0.0
        %1132 = vmatpush.msra.mxu0 0.0
        %1133 = vmatpush.msra.mxu0 0.0
        %1134 = vmatpush.msra.mxu0 0.0
        %1135 = vmatpush.msra.mxu0 0.0
        %1136 = vmatpush.msra.mxu0 0.0
        %1137 = vmatpush.msra.mxu0 0.0
        %1138 = vmatpush.msra.mxu0 0.0
        %1139 = vmatpush.msra.mxu0 0.0
        %1140 = vmatpush.msra.mxu0 0.0
        %1141 = vmatpush.msra.mxu0 %v1075
        %1142 = vmatmul.f32.gmra.mxu0 %v1124
        %v1143 = vpop.f32.mrf.mxu0
        %v1144 = vadd.f32 0.0, %v1143
        %1145 = vdwg.mxu0
        %v1147 = vsel %vm772, %v1071, 0
        %1149 = vmatpush.msra.mxu0 0.0
        %1150 = vmatpush.msra.mxu0 0.0
        %1151 = vmatpush.msra.mxu0 0.0
        %1152 = vmatpush.msra.mxu0 0.0
        %1153 = vmatpush.msra.mxu0 0.0
        %1154 = vmatpush.msra.mxu0 0.0
        %1155 = vmatpush.msra.mxu0 0.0
        %1156 = vmatpush.msra.mxu0 0.0
        %1157 = vmatpush.msra.mxu0 0.0
        %1158 = vmatpush.msra.mxu0 0.0
        %1159 = vmatpush.msra.mxu0 0.0
        %1160 = vmatpush.msra.mxu0 0.0
        %1161 = vmatpush.msra.mxu0 0.0
        %1162 = vmatpush.msra.mxu0 0.0
        %1163 = vmatpush.msra.mxu0 0.0
        %1164 = vmatpush.msra.mxu0 %v1076
        %1165 = vmatmul.f32.gmra.mxu0 %v1147
        %v1166 = vpop.f32.mrf.mxu0
        %v1167 = vadd.f32 0.0, %v1166
        %1168 = vdwg.mxu0
        %v1169 = vadd.f32 %v1098, %v1121
        %v1170 = vadd.f32 %v1169, %v1144
        %v1171 = vadd.f32 %v1170, %v1167
        %v1172 = vld [vmem:[%s7 + $0x4] sm:$0x1]
        %v1173 = vperm.slane %v1172, 0
        %v1174 = vadd.f32 %v1171, %v1173
        %v1175 = vadd.f32 %v428, %v1174
        %v1176 = vld [vmem:[%s7 + $0x2] sm:$0x1]
        %v1177 = vld [vmem:[%s7 + $0x3] sm:$0x1]
        %v1178 = vsel %vm395, %v1175, 0.0
        %1179 = vadd.xlane.f32.xlu0 %v1178
        %v1180 = vpop.xlane.xlu0 %1179
        %v1181 = vmul.f32 %v1180, %v405
        %v1182 = vsub.f32 %v1175, %v1181
        %v1183 = vmul.f32 %v1182, %v1182
        %v1184 = vsel %vm395, %v1183, 0.0
        %1185 = vadd.xlane.f32.xlu0 %v1184
        %v1186 = vpop.xlane.xlu0 %1185
        %v1187 = vmul.f32 %v1186, %v405
        %v1188 = vadd.f32 %v1187, 1e-05
        %v1189 = vrsqrt.pop %v1188
        %v1190 = vmul.f32 %v1189, %v1188
        %v1191 = vmul.f32 %v1190, %v1189
        %v1192 = vmul.f32 0.5, %v1191
        %v1193 = vsub.f32 1.5, %v1192
        %v1194 = vmul.f32 %v1189, %v1193
        %vm1195 = vweird.f32 %v1188
        %vm1196 = vweird.f32 %v1189
        %vm1197 = vmor %vm1195, %vm1196
        %v1198 = vsel %vm1197, %v1189, %v1194
        %v1199 = vmul.f32 %v1182, %v1198
        %v1200 = vperm.slane %v1176, 0
        %v1201 = vmul.f32 %v1199, %v1200
        %v1202 = vperm.slane %v1177, 0
        %v1203 = vadd.f32 %v1201, %v1202
        %v1204 = vld [vmem:[%s5] sm:$0xff]
        %v1205 = vld [vmem:[%s5 + $0x8] sm:$0xff]
        %v1206 = vld [vmem:[%s5 + $0x10] sm:$0xff]
        %v1207 = vld [vmem:[%s5 + $0x18] sm:$0xff]
        %v1208 = vld [vmem:[%s5 + $0x20] sm:$0xff]
        %v1209 = vld [vmem:[%s5 + $0x28] sm:$0xff]
        %v1210 = vld [vmem:[%s5 + $0x30] sm:$0xff]
        %v1211 = vld [vmem:[%s5 + $0x38] sm:$0xff]
        %v1212 = vld [vmem:[%s5 + $0x40] sm:$0xff]
        %v1213 = vld [vmem:[%s5 + $0x48] sm:$0xff]
        %v1214 = vld [vmem:[%s5 + $0x50] sm:$0xff]
        %v1215 = vld [vmem:[%s5 + $0x58] sm:$0xff]
        %v1216 = vld [vmem:[%s5 + $0x60] sm:$0xff]
        %v1217 = vld [vmem:[%s5 + $0x68] sm:$0xff]
        %v1218 = vld [vmem:[%s5 + $0x70] sm:$0xff]
        %v1219 = vld [vmem:[%s5 + $0x78] sm:$0xff]
        %v1220 = vld [vmem:[%s7 + $0x6] sm:$0x1]
        %v1221 = vperm.slane %v1220, 0
        %v1223 = vsel %vm395, %v1203, 0
        %v1226 = vsel %vm395, %v1204, 0
        %v1229 = vsel %vm395, %v1205, 0
        %v1232 = vsel %vm395, %v1206, 0
        %v1235 = vsel %vm395, %v1207, 0
        %v1238 = vsel %vm395, %v1208, 0
        %v1241 = vsel %vm395, %v1209, 0
        %v1244 = vsel %vm395, %v1210, 0
        %v1247 = vsel %vm395, %v1211, 0
        %v1250 = vsel %vm395, %v1212, 0
        %v1253 = vsel %vm395, %v1213, 0
        %v1256 = vsel %vm395, %v1214, 0
        %v1259 = vsel %vm395, %v1215, 0
        %v1262 = vsel %vm395, %v1216, 0
        %v1265 = vsel %vm395, %v1217, 0
        %v1268 = vsel %vm395, %v1218, 0
        %v1271 = vsel %vm395, %v1219, 0
        %1273 = vmatpush.xpose.msra.mxu0 %v1271
        %1274 = vmatpush.xpose.msra.mxu0 %v1268
        %1275 = vmatpush.xpose.msra.mxu0 %v1265
        %1276 = vmatpush.xpose.msra.mxu0 %v1262
        %1277 = vmatpush.xpose.msra.mxu0 %v1259
        %1278 = vmatpush.xpose.msra.mxu0 %v1256
        %1279 = vmatpush.xpose.msra.mxu0 %v1253
        %1280 = vmatpush.xpose.msra.mxu0 %v1250
        %1281 = vmatpush.xpose.msra.mxu0 %v1247
        %1282 = vmatpush.xpose.msra.mxu0 %v1244
        %1283 = vmatpush.xpose.msra.mxu0 %v1241
        %1284 = vmatpush.xpose.msra.mxu0 %v1238
        %1285 = vmatpush.xpose.msra.mxu0 %v1235
        %1286 = vmatpush.xpose.msra.mxu0 %v1232
        %1287 = vmatpush.xpose.msra.mxu0 %v1229
        %1288 = vmatpush.xpose.msra.mxu0 %v1226
        %1289 = vmatmul.f32.gmra.mxu0 %v1223
        %v1290 = vpop.f32.mrf.mxu0
        %v1291 = vadd.f32 %v1221, %v1290
        %1292 = vdwg.mxu0
        %v1293 = vmul.f32 %v1291, 0.5
        %v1294 = vmul.f32 %v1291, 0.70710677
        %v1295 = vmul.f32 %v1294, %v1294
        %v1296 = vmin.f32 16.0, %v1295
        %v1297 = vmul.f32 %v1296, 2.1237322e-06
        %v1298 = vadd.f32 %v1297, 0.00028619796
        %v1299 = vmul.f32 %v1296, %v1298
        %v1300 = vadd.f32 %v1299, 0.0036580483
        %v1301 = vmul.f32 %v1296, %v1300
        %v1302 = vadd.f32 %v1301, 0.05243302
        %v1303 = vmul.f32 %v1296, %v1302
        %v1304 = vadd.f32 %v1303, 0.18741608
        %v1305 = vmul.f32 %v1296, %v1304
        %v1306 = vadd.f32 %v1305, 1.1283791
        %v1307 = vmul.f32 %v1294, %v1306
        %v1308 = vmul.f32 %v1296, 3.8918573e-05
        %v1309 = vadd.f32 %v1308, 0.001143296
        %v1310 = vmul.f32 %v1296, %v1309
        %v1311 = vadd.f32 %v1310, 0.014752088
        %v1312 = vmul.f32 %v1296, %v1311
        %v1313 = vadd.f32 %v1312, 0.112945676
        %v1314 = vmul.f32 %v1296, %v1313
        %v1315 = vadd.f32 %v1314, 0.4994258
        %v1316 = vmul.f32 %v1296, %v1315
        %v1317 = vadd.f32 %v1316, 1.0
        %v1318 = vrcp.pop %v1317
        %v1319 = vmul.f32 %v1317, %v1318
        %v1320 = vsub.f32 1.0, %v1319
        %v1321 = vmul.f32 %v1318, %v1320
        %v1322 = vadd.f32 %v1318, %v1321
        %vm1323 = vweird.f32 %v1317
        %vm1324 = vweird.f32 %v1318
        %vm1325 = vmor %vm1323, %vm1324
        %v1326 = vsel %vm1325, %v1318, %v1322
        %v1327 = vand.u32 2147483647, %v1317
        %vm1328 = vcmp.eq.f32.partialorder %v1327, 8.507059e+37
        %v1329 = vand.u32 %v1317, 2147483648
        %v1330 = vor.u32 1.1754944e-38, %v1329
        %v1331 = vsel %vm1328, %v1330, %v1326
        %v1332 = vmul.f32 %v1307, %v1331
        %v1333 = vmin.f32 %v1332, 1.0
        %v1334 = vmax.f32 %v1333, -1.0
        %v1335 = vadd.f32 %v1334, 1.0
        %v1336 = vmul.f32 %v1293, %v1335
        %v1337 = vld [vmem:[%s6] sm:$0xff]
        %v1338 = vld [vmem:[%s6 + $0x8] sm:$0xff]
        %v1339 = vld [vmem:[%s6 + $0x10] sm:$0xff]
        %v1340 = vld [vmem:[%s6 + $0x18] sm:$0xff]
        %v1341 = vld [vmem:[%s7 + $0x5] sm:$0x1]
        %v1342 = vperm.slane %v1341, 0
        %1343 = vmatpush.xpose.msra.mxu0 0.0
        %1344 = vmatpush.xpose.msra.mxu0 0.0
        %1345 = vmatpush.xpose.msra.mxu0 0.0
        %1346 = vmatpush.xpose.msra.mxu0 0.0
        %1347 = vmatpush.xpose.msra.mxu0 0.0
        %1348 = vmatpush.xpose.msra.mxu0 0.0
        %1349 = vmatpush.xpose.msra.mxu0 0.0
        %1350 = vmatpush.xpose.msra.mxu0 0.0
        %1351 = vmatpush.xpose.msra.mxu0 0.0
        %1352 = vmatpush.xpose.msra.mxu0 0.0
        %1353 = vmatpush.xpose.msra.mxu0 0.0
        %1354 = vmatpush.xpose.msra.mxu0 0.0
        %1355 = vmatpush.xpose.msra.mxu0 %v1340
        %1356 = vmatpush.xpose.msra.mxu0 %v1339
        %1357 = vmatpush.xpose.msra.mxu0 %v1338
        %1358 = vmatpush.xpose.msra.mxu0 %v1337
        %1359 = vmatmul.f32.gmra.mxu0 %v1336
        %v1360 = vpop.f32.mrf.mxu0
        %v1361 = vadd.f32 %v1342, %v1360
        %1362 = vdwg.mxu0
        %v1363 = vadd.f32 %v1175, %v1361
        %v1364 = vadd.f32 %v1363, %v383
        %s1365 = scalar_lea.vmem %s7, 8
        %v1366 = vld [vmem:[%s1365] sm:$0x1]
        %v1367 = vld [vmem:[%s1365 + $0x1] sm:$0x1]
        %v1368 = vsel %vm395, %v1364, 0.0
        %1369 = vadd.xlane.f32.xlu0 %v1368
        %v1370 = vpop.xlane.xlu0 %1369
        %v1371 = vmul.f32 %v1370, %v405
        %v1372 = vsub.f32 %v1364, %v1371
        %v1373 = vmul.f32 %v1372, %v1372
        %v1374 = vsel %vm395, %v1373, 0.0
        %1375 = vadd.xlane.f32.xlu0 %v1374
        %v1376 = vpop.xlane.xlu0 %1375
        %v1377 = vmul.f32 %v1376, %v405
        %v1378 = vadd.f32 %v1377, 1e-05
        %v1379 = vrsqrt.pop %v1378
        %v1380 = vmul.f32 %v1379, %v1378
        %v1381 = vmul.f32 %v1380, %v1379
        %v1382 = vmul.f32 0.5, %v1381
        %v1383 = vsub.f32 1.5, %v1382
        %v1384 = vmul.f32 %v1379, %v1383
        %vm1385 = vweird.f32 %v1378
        %vm1386 = vweird.f32 %v1379
        %vm1387 = vmor %vm1385, %vm1386
        %v1388 = vsel %vm1387, %v1379, %v1384
        %v1389 = vmul.f32 %v1372, %v1388
        %v1390 = vperm.slane %v1366, 0
        %v1391 = vmul.f32 %v1389, %v1390
        %v1392 = vperm.slane %v1367, 0
        %v1393 = vadd.f32 %v1391, %v1392
        %s1394 = scalar_lea.vmem %s2, 96
        %v1395 = vld [vmem:[%s1394] sm:$0xff]
        %v1396 = vld [vmem:[%s1394 + $0x8] sm:$0xff]
        %v1397 = vld [vmem:[%s1394 + $0x10] sm:$0xff]
        %v1398 = vld [vmem:[%s1394 + $0x18] sm:$0xff]
        %s1399 = scalar_lea.vmem %s3, 12
        %v1400 = vld [vmem:[%s1399] sm:$0x1]
        %v1401 = vld [vmem:[%s1399 + $0x1] sm:$0x1]
        %v1402 = vld [vmem:[%s1399 + $0x2] sm:$0x1]
        %v1403 = vld [vmem:[%s1399 + $0x3] sm:$0x1]
        %v1408 = vperm.slane %v1400, 0
        %v1409 = vperm.slane %v1401, 0
        %v1410 = vperm.slane %v1402, 0
        %v1411 = vperm.slane %v1403, 0
        %v1417 = vsel %vm395, %v1393, 0
        %v1420 = vsel %vm395, %v1395, 0
        %1422 = vmatpush.xpose.msra.mxu0 0.0
        %1423 = vmatpush.xpose.msra.mxu0 0.0
        %1424 = vmatpush.xpose.msra.mxu0 0.0
        %1425 = vmatpush.xpose.msra.mxu0 0.0
        %1426 = vmatpush.xpose.msra.mxu0 0.0
        %1427 = vmatpush.xpose.msra.mxu0 0.0
        %1428 = vmatpush.xpose.msra.mxu0 0.0
        %1429 = vmatpush.xpose.msra.mxu0 0.0
        %1430 = vmatpush.xpose.msra.mxu0 0.0
        %1431 = vmatpush.xpose.msra.mxu0 0.0
        %1432 = vmatpush.xpose.msra.mxu0 0.0
        %1433 = vmatpush.xpose.msra.mxu0 0.0
        %1434 = vmatpush.xpose.msra.mxu0 0.0
        %1435 = vmatpush.xpose.msra.mxu0 0.0
        %1436 = vmatpush.xpose.msra.mxu0 0.0
        %1437 = vmatpush.xpose.msra.mxu0 %v1420
        %1438 = vmatmul.f32.gmra.mxu0 %v1417
        %v1439 = vpop.f32.mrf.mxu0
        %v1440 = vadd.f32 %v1408, %v1439
        %1441 = vdwg.mxu0
        %v1443 = vsel %vm395, %v1396, 0
        %1445 = vmatpush.xpose.msra.mxu0 0.0
        %1446 = vmatpush.xpose.msra.mxu0 0.0
        %1447 = vmatpush.xpose.msra.mxu0 0.0
        %1448 = vmatpush.xpose.msra.mxu0 0.0
        %1449 = vmatpush.xpose.msra.mxu0 0.0
        %1450 = vmatpush.xpose.msra.mxu0 0.0
        %1451 = vmatpush.xpose.msra.mxu0 0.0
        %1452 = vmatpush.xpose.msra.mxu0 0.0
        %1453 = vmatpush.xpose.msra.mxu0 0.0
        %1454 = vmatpush.xpose.msra.mxu0 0.0
        %1455 = vmatpush.xpose.msra.mxu0 0.0
        %1456 = vmatpush.xpose.msra.mxu0 0.0
        %1457 = vmatpush.xpose.msra.mxu0 0.0
        %1458 = vmatpush.xpose.msra.mxu0 0.0
        %1459 = vmatpush.xpose.msra.mxu0 0.0
        %1460 = vmatpush.xpose.msra.mxu0 %v1443
        %1461 = vmatmul.f32.gmra.mxu0 %v1417
        %v1462 = vpop.f32.mrf.mxu0
        %v1463 = vadd.f32 %v1409, %v1462
        %1464 = vdwg.mxu0
        %v1466 = vsel %vm395, %v1397, 0
        %1468 = vmatpush.xpose.msra.mxu0 0.0
        %1469 = vmatpush.xpose.msra.mxu0 0.0
        %1470 = vmatpush.xpose.msra.mxu0 0.0
        %1471 = vmatpush.xpose.msra.mxu0 0.0
        %1472 = vmatpush.xpose.msra.mxu0 0.0
        %1473 = vmatpush.xpose.msra.mxu0 0.0
        %1474 = vmatpush.xpose.msra.mxu0 0.0
        %1475 = vmatpush.xpose.msra.mxu0 0.0
        %1476 = vmatpush.xpose.msra.mxu0 0.0
        %1477 = vmatpush.xpose.msra.mxu0 0.0
        %1478 = vmatpush.xpose.msra.mxu0 0.0
        %1479 = vmatpush.xpose.msra.mxu0 0.0
        %1480 = vmatpush.xpose.msra.mxu0 0.0
        %1481 = vmatpush.xpose.msra.mxu0 0.0
        %1482 = vmatpush.xpose.msra.mxu0 0.0
        %1483 = vmatpush.xpose.msra.mxu0 %v1466
        %1484 = vmatmul.f32.gmra.mxu0 %v1417
        %v1485 = vpop.f32.mrf.mxu0
        %v1486 = vadd.f32 %v1410, %v1485
        %1487 = vdwg.mxu0
        %v1489 = vsel %vm395, %v1398, 0
        %1491 = vmatpush.xpose.msra.mxu0 0.0
        %1492 = vmatpush.xpose.msra.mxu0 0.0
        %1493 = vmatpush.xpose.msra.mxu0 0.0
        %1494 = vmatpush.xpose.msra.mxu0 0.0
        %1495 = vmatpush.xpose.msra.mxu0 0.0
        %1496 = vmatpush.xpose.msra.mxu0 0.0
        %1497 = vmatpush.xpose.msra.mxu0 0.0
        %1498 = vmatpush.xpose.msra.mxu0 0.0
        %1499 = vmatpush.xpose.msra.mxu0 0.0
        %1500 = vmatpush.xpose.msra.mxu0 0.0
        %1501 = vmatpush.xpose.msra.mxu0 0.0
        %1502 = vmatpush.xpose.msra.mxu0 0.0
        %1503 = vmatpush.xpose.msra.mxu0 0.0
        %1504 = vmatpush.xpose.msra.mxu0 0.0
        %1505 = vmatpush.xpose.msra.mxu0 0.0
        %1506 = vmatpush.xpose.msra.mxu0 %v1489
        %1507 = vmatmul.f32.gmra.mxu0 %v1417
        %v1508 = vpop.f32.mrf.mxu0
        %v1509 = vadd.f32 %v1411, %v1508
        %1510 = vdwg.mxu0
        %s1511 = scalar_lea.vmem %s2, 128
        %v1512 = vld [vmem:[%s1511] sm:$0xff]
        %v1513 = vld [vmem:[%s1511 + $0x8] sm:$0xff]
        %v1514 = vld [vmem:[%s1511 + $0x10] sm:$0xff]
        %v1515 = vld [vmem:[%s1511 + $0x18] sm:$0xff]
        %s1516 = scalar_lea.vmem %s3, 16
        %v1517 = vld [vmem:[%s1516] sm:$0x1]
        %v1518 = vld [vmem:[%s1516 + $0x1] sm:$0x1]
        %v1519 = vld [vmem:[%s1516 + $0x2] sm:$0x1]
        %v1520 = vld [vmem:[%s1516 + $0x3] sm:$0x1]
        %v1525 = vperm.slane %v1517, 0
        %v1526 = vperm.slane %v1518, 0
        %v1527 = vperm.slane %v1519, 0
        %v1528 = vperm.slane %v1520, 0
        %v1534 = vsel %vm395, %v1512, 0
        %1536 = vmatpush.xpose.msra.mxu0 0.0
        %1537 = vmatpush.xpose.msra.mxu0 0.0
        %1538 = vmatpush.xpose.msra.mxu0 0.0
        %1539 = vmatpush.xpose.msra.mxu0 0.0
        %1540 = vmatpush.xpose.msra.mxu0 0.0
        %1541 = vmatpush.xpose.msra.mxu0 0.0
        %1542 = vmatpush.xpose.msra.mxu0 0.0
        %1543 = vmatpush.xpose.msra.mxu0 0.0
        %1544 = vmatpush.xpose.msra.mxu0 0.0
        %1545 = vmatpush.xpose.msra.mxu0 0.0
        %1546 = vmatpush.xpose.msra.mxu0 0.0
        %1547 = vmatpush.xpose.msra.mxu0 0.0
        %1548 = vmatpush.xpose.msra.mxu0 0.0
        %1549 = vmatpush.xpose.msra.mxu0 0.0
        %1550 = vmatpush.xpose.msra.mxu0 0.0
        %1551 = vmatpush.xpose.msra.mxu0 %v1534
        %1552 = vmatmul.f32.gmra.mxu0 %v1417
        %v1553 = vpop.f32.mrf.mxu0
        %v1554 = vadd.f32 %v1525, %v1553
        %1555 = vdwg.mxu0
        %v1557 = vsel %vm395, %v1513, 0
        %1559 = vmatpush.xpose.msra.mxu0 0.0
        %1560 = vmatpush.xpose.msra.mxu0 0.0
        %1561 = vmatpush.xpose.msra.mxu0 0.0
        %1562 = vmatpush.xpose.msra.mxu0 0.0
        %1563 = vmatpush.xpose.msra.mxu0 0.0
        %1564 = vmatpush.xpose.msra.mxu0 0.0
        %1565 = vmatpush.xpose.msra.mxu0 0.0
        %1566 = vmatpush.xpose.msra.mxu0 0.0
        %1567 = vmatpush.xpose.msra.mxu0 0.0
        %1568 = vmatpush.xpose.msra.mxu0 0.0
        %1569 = vmatpush.xpose.msra.mxu0 0.0
        %1570 = vmatpush.xpose.msra.mxu0 0.0
        %1571 = vmatpush.xpose.msra.mxu0 0.0
        %1572 = vmatpush.xpose.msra.mxu0 0.0
        %1573 = vmatpush.xpose.msra.mxu0 0.0
        %1574 = vmatpush.xpose.msra.mxu0 %v1557
        %1575 = vmatmul.f32.gmra.mxu0 %v1417
        %v1576 = vpop.f32.mrf.mxu0
        %v1577 = vadd.f32 %v1526, %v1576
        %1578 = vdwg.mxu0
        %v1580 = vsel %vm395, %v1514, 0
        %1582 = vmatpush.xpose.msra.mxu0 0.0
        %1583 = vmatpush.xpose.msra.mxu0 0.0
        %1584 = vmatpush.xpose.msra.mxu0 0.0
        %1585 = vmatpush.xpose.msra.mxu0 0.0
        %1586 = vmatpush.xpose.msra.mxu0 0.0
        %1587 = vmatpush.xpose.msra.mxu0 0.0
        %1588 = vmatpush.xpose.msra.mxu0 0.0
        %1589 = vmatpush.xpose.msra.mxu0 0.0
        %1590 = vmatpush.xpose.msra.mxu0 0.0
        %1591 = vmatpush.xpose.msra.mxu0 0.0
        %1592 = vmatpush.xpose.msra.mxu0 0.0
        %1593 = vmatpush.xpose.msra.mxu0 0.0
        %1594 = vmatpush.xpose.msra.mxu0 0.0
        %1595 = vmatpush.xpose.msra.mxu0 0.0
        %1596 = vmatpush.xpose.msra.mxu0 0.0
        %1597 = vmatpush.xpose.msra.mxu0 %v1580
        %1598 = vmatmul.f32.gmra.mxu0 %v1417
        %v1599 = vpop.f32.mrf.mxu0
        %v1600 = vadd.f32 %v1527, %v1599
        %1601 = vdwg.mxu0
        %v1603 = vsel %vm395, %v1515, 0
        %1605 = vmatpush.xpose.msra.mxu0 0.0
        %1606 = vmatpush.xpose.msra.mxu0 0.0
        %1607 = vmatpush.xpose.msra.mxu0 0.0
        %1608 = vmatpush.xpose.msra.mxu0 0.0
        %1609 = vmatpush.xpose.msra.mxu0 0.0
        %1610 = vmatpush.xpose.msra.mxu0 0.0
        %1611 = vmatpush.xpose.msra.mxu0 0.0
        %1612 = vmatpush.xpose.msra.mxu0 0.0
        %1613 = vmatpush.xpose.msra.mxu0 0.0
        %1614 = vmatpush.xpose.msra.mxu0 0.0
        %1615 = vmatpush.xpose.msra.mxu0 0.0
        %1616 = vmatpush.xpose.msra.mxu0 0.0
        %1617 = vmatpush.xpose.msra.mxu0 0.0
        %1618 = vmatpush.xpose.msra.mxu0 0.0
        %1619 = vmatpush.xpose.msra.mxu0 0.0
        %1620 = vmatpush.xpose.msra.mxu0 %v1603
        %1621 = vmatmul.f32.gmra.mxu0 %v1417
        %v1622 = vpop.f32.mrf.mxu0
        %v1623 = vadd.f32 %v1528, %v1622
        %1624 = vdwg.mxu0
        %s1625 = scalar_lea.vmem %s2, 160
        %v1626 = vld [vmem:[%s1625] sm:$0xff]
        %v1627 = vld [vmem:[%s1625 + $0x8] sm:$0xff]
        %v1628 = vld [vmem:[%s1625 + $0x10] sm:$0xff]
        %v1629 = vld [vmem:[%s1625 + $0x18] sm:$0xff]
        %s1630 = scalar_lea.vmem %s3, 20
        %v1631 = vld [vmem:[%s1630] sm:$0x1]
        %v1632 = vld [vmem:[%s1630 + $0x1] sm:$0x1]
        %v1633 = vld [vmem:[%s1630 + $0x2] sm:$0x1]
        %v1634 = vld [vmem:[%s1630 + $0x3] sm:$0x1]
        %v1639 = vperm.slane %v1631, 0
        %v1640 = vperm.slane %v1632, 0
        %v1641 = vperm.slane %v1633, 0
        %v1642 = vperm.slane %v1634, 0
        %v1648 = vsel %vm395, %v1626, 0
        %1650 = vmatpush.xpose.msra.mxu0 0.0
        %1651 = vmatpush.xpose.msra.mxu0 0.0
        %1652 = vmatpush.xpose.msra.mxu0 0.0
        %1653 = vmatpush.xpose.msra.mxu0 0.0
        %1654 = vmatpush.xpose.msra.mxu0 0.0
        %1655 = vmatpush.xpose.msra.mxu0 0.0
        %1656 = vmatpush.xpose.msra.mxu0 0.0
        %1657 = vmatpush.xpose.msra.mxu0 0.0
        %1658 = vmatpush.xpose.msra.mxu0 0.0
        %1659 = vmatpush.xpose.msra.mxu0 0.0
        %1660 = vmatpush.xpose.msra.mxu0 0.0
        %1661 = vmatpush.xpose.msra.mxu0 0.0
        %1662 = vmatpush.xpose.msra.mxu0 0.0
        %1663 = vmatpush.xpose.msra.mxu0 0.0
        %1664 = vmatpush.xpose.msra.mxu0 0.0
        %1665 = vmatpush.xpose.msra.mxu0 %v1648
        %1666 = vmatmul.f32.gmra.mxu0 %v1417
        %v1667 = vpop.f32.mrf.mxu0
        %v1668 = vadd.f32 %v1639, %v1667
        %1669 = vdwg.mxu0
        %v1671 = vsel %vm395, %v1627, 0
        %1673 = vmatpush.xpose.msra.mxu0 0.0
        %1674 = vmatpush.xpose.msra.mxu0 0.0
        %1675 = vmatpush.xpose.msra.mxu0 0.0
        %1676 = vmatpush.xpose.msra.mxu0 0.0
        %1677 = vmatpush.xpose.msra.mxu0 0.0
        %1678 = vmatpush.xpose.msra.mxu0 0.0
        %1679 = vmatpush.xpose.msra.mxu0 0.0
        %1680 = vmatpush.xpose.msra.mxu0 0.0
        %1681 = vmatpush.xpose.msra.mxu0 0.0
        %1682 = vmatpush.xpose.msra.mxu0 0.0
        %1683 = vmatpush.xpose.msra.mxu0 0.0
        %1684 = vmatpush.xpose.msra.mxu0 0.0
        %1685 = vmatpush.xpose.msra.mxu0 0.0
        %1686 = vmatpush.xpose.msra.mxu0 0.0
        %1687 = vmatpush.xpose.msra.mxu0 0.0
        %1688 = vmatpush.xpose.msra.mxu0 %v1671
        %1689 = vmatmul.f32.gmra.mxu0 %v1417
        %v1690 = vpop.f32.mrf.mxu0
        %v1691 = vadd.f32 %v1640, %v1690
        %1692 = vdwg.mxu0
        %v1694 = vsel %vm395, %v1628, 0
        %1696 = vmatpush.xpose.msra.mxu0 0.0
        %1697 = vmatpush.xpose.msra.mxu0 0.0
        %1698 = vmatpush.xpose.msra.mxu0 0.0
        %1699 = vmatpush.xpose.msra.mxu0 0.0
        %1700 = vmatpush.xpose.msra.mxu0 0.0
        %1701 = vmatpush.xpose.msra.mxu0 0.0
        %1702 = vmatpush.xpose.msra.mxu0 0.0
        %1703 = vmatpush.xpose.msra.mxu0 0.0
        %1704 = vmatpush.xpose.msra.mxu0 0.0
        %1705 = vmatpush.xpose.msra.mxu0 0.0
        %1706 = vmatpush.xpose.msra.mxu0 0.0
        %1707 = vmatpush.xpose.msra.mxu0 0.0
        %1708 = vmatpush.xpose.msra.mxu0 0.0
        %1709 = vmatpush.xpose.msra.mxu0 0.0
        %1710 = vmatpush.xpose.msra.mxu0 0.0
        %1711 = vmatpush.xpose.msra.mxu0 %v1694
        %1712 = vmatmul.f32.gmra.mxu0 %v1417
        %v1713 = vpop.f32.mrf.mxu0
        %v1714 = vadd.f32 %v1641, %v1713
        %1715 = vdwg.mxu0
        %v1717 = vsel %vm395, %v1629, 0
        %1719 = vmatpush.xpose.msra.mxu0 0.0
        %1720 = vmatpush.xpose.msra.mxu0 0.0
        %1721 = vmatpush.xpose.msra.mxu0 0.0
        %1722 = vmatpush.xpose.msra.mxu0 0.0
        %1723 = vmatpush.xpose.msra.mxu0 0.0
        %1724 = vmatpush.xpose.msra.mxu0 0.0
        %1725 = vmatpush.xpose.msra.mxu0 0.0
        %1726 = vmatpush.xpose.msra.mxu0 0.0
        %1727 = vmatpush.xpose.msra.mxu0 0.0
        %1728 = vmatpush.xpose.msra.mxu0 0.0
        %1729 = vmatpush.xpose.msra.mxu0 0.0
        %1730 = vmatpush.xpose.msra.mxu0 0.0
        %1731 = vmatpush.xpose.msra.mxu0 0.0
        %1732 = vmatpush.xpose.msra.mxu0 0.0
        %1733 = vmatpush.xpose.msra.mxu0 0.0
        %1734 = vmatpush.xpose.msra.mxu0 %v1717
        %1735 = vmatmul.f32.gmra.mxu0 %v1417
        %v1736 = vpop.f32.mrf.mxu0
        %v1737 = vadd.f32 %v1642, %v1736
        %1738 = vdwg.mxu0
        %v1740 = vsel %vm772, %v1440, 0
        %v1743 = vsel %vm772, %v1554, 0
        %1745 = vmatpush.xpose.msra.mxu0 0.0
        %1746 = vmatpush.xpose.msra.mxu0 0.0
        %1747 = vmatpush.xpose.msra.mxu0 0.0
        %1748 = vmatpush.xpose.msra.mxu0 0.0
        %1749 = vmatpush.xpose.msra.mxu0 0.0
        %1750 = vmatpush.xpose.msra.mxu0 0.0
        %1751 = vmatpush.xpose.msra.mxu0 0.0
        %1752 = vmatpush.xpose.msra.mxu0 0.0
        %1753 = vmatpush.xpose.msra.mxu0 0.0
        %1754 = vmatpush.xpose.msra.mxu0 0.0
        %1755 = vmatpush.xpose.msra.mxu0 0.0
        %1756 = vmatpush.xpose.msra.mxu0 0.0
        %1757 = vmatpush.xpose.msra.mxu0 0.0
        %1758 = vmatpush.xpose.msra.mxu0 0.0
        %1759 = vmatpush.xpose.msra.mxu0 0.0
        %1760 = vmatpush.xpose.msra.mxu0 %v1743
        %1761 = vmatmul.f32.gmra.mxu0 %v1740
        %v1762 = vpop.f32.mrf.mxu0
        %v1763 = vadd.f32 0.0, %v1762
        %1764 = vdwg.mxu0
        %v1766 = vsel %vm772, %v1463, 0
        %v1769 = vsel %vm772, %v1577, 0
        %1771 = vmatpush.xpose.msra.mxu0 0.0
        %1772 = vmatpush.xpose.msra.mxu0 0.0
        %1773 = vmatpush.xpose.msra.mxu0 0.0
        %1774 = vmatpush.xpose.msra.mxu0 0.0
        %1775 = vmatpush.xpose.msra.mxu0 0.0
        %1776 = vmatpush.xpose.msra.mxu0 0.0
        %1777 = vmatpush.xpose.msra.mxu0 0.0
        %1778 = vmatpush.xpose.msra.mxu0 0.0
        %1779 = vmatpush.xpose.msra.mxu0 0.0
        %1780 = vmatpush.xpose.msra.mxu0 0.0
        %1781 = vmatpush.xpose.msra.mxu0 0.0
        %1782 = vmatpush.xpose.msra.mxu0 0.0
        %1783 = vmatpush.xpose.msra.mxu0 0.0
        %1784 = vmatpush.xpose.msra.mxu0 0.0
        %1785 = vmatpush.xpose.msra.mxu0 0.0
        %1786 = vmatpush.xpose.msra.mxu0 %v1769
        %1787 = vmatmul.f32.gmra.mxu0 %v1766
        %v1788 = vpop.f32.mrf.mxu0
        %v1789 = vadd.f32 0.0, %v1788
        %1790 = vdwg.mxu0
        %v1792 = vsel %vm772, %v1486, 0
        %v1795 = vsel %vm772, %v1600, 0
        %1797 = vmatpush.xpose.msra.mxu0 0.0
        %1798 = vmatpush.xpose.msra.mxu0 0.0
        %1799 = vmatpush.xpose.msra.mxu0 0.0
        %1800 = vmatpush.xpose.msra.mxu0 0.0
        %1801 = vmatpush.xpose.msra.mxu0 0.0
        %1802 = vmatpush.xpose.msra.mxu0 0.0
        %1803 = vmatpush.xpose.msra.mxu0 0.0
        %1804 = vmatpush.xpose.msra.mxu0 0.0
        %1805 = vmatpush.xpose.msra.mxu0 0.0
        %1806 = vmatpush.xpose.msra.mxu0 0.0
        %1807 = vmatpush.xpose.msra.mxu0 0.0
        %1808 = vmatpush.xpose.msra.mxu0 0.0
        %1809 = vmatpush.xpose.msra.mxu0 0.0
        %1810 = vmatpush.xpose.msra.mxu0 0.0
        %1811 = vmatpush.xpose.msra.mxu0 0.0
        %1812 = vmatpush.xpose.msra.mxu0 %v1795
        %1813 = vmatmul.f32.gmra.mxu0 %v1792
        %v1814 = vpop.f32.mrf.mxu0
        %v1815 = vadd.f32 0.0, %v1814
        %1816 = vdwg.mxu0
        %v1818 = vsel %vm772, %v1509, 0
        %v1821 = vsel %vm772, %v1623, 0
        %1823 = vmatpush.xpose.msra.mxu0 0.0
        %1824 = vmatpush.xpose.msra.mxu0 0.0
        %1825 = vmatpush.xpose.msra.mxu0 0.0
        %1826 = vmatpush.xpose.msra.mxu0 0.0
        %1827 = vmatpush.xpose.msra.mxu0 0.0
        %1828 = vmatpush.xpose.msra.mxu0 0.0
        %1829 = vmatpush.xpose.msra.mxu0 0.0
        %1830 = vmatpush.xpose.msra.mxu0 0.0
        %1831 = vmatpush.xpose.msra.mxu0 0.0
        %1832 = vmatpush.xpose.msra.mxu0 0.0
        %1833 = vmatpush.xpose.msra.mxu0 0.0
        %1834 = vmatpush.xpose.msra.mxu0 0.0
        %1835 = vmatpush.xpose.msra.mxu0 0.0
        %1836 = vmatpush.xpose.msra.mxu0 0.0
        %1837 = vmatpush.xpose.msra.mxu0 0.0
        %1838 = vmatpush.xpose.msra.mxu0 %v1821
        %1839 = vmatmul.f32.gmra.mxu0 %v1818
        %v1840 = vpop.f32.mrf.mxu0
        %v1841 = vadd.f32 0.0, %v1840
        %1842 = vdwg.mxu0
        %v1843 = vmul.f32 %v1763, 0.35355338
        %v1844 = vmul.f32 %v1789, 0.35355338
        %v1845 = vmul.f32 %v1815, 0.35355338
        %v1846 = vmul.f32 %v1841, 0.35355338
        %v1847 = vsel %vm391, -1e+30, %v1843
        %v1848 = vsel %vm391, -1e+30, %v1844
        %v1849 = vsel %vm391, -1e+30, %v1845
        %v1850 = vsel %vm391, -1e+30, %v1846
        %v1851 = vsel %vm772, %v1847, -inf
        %1852 = vmax.xlane.f32.xlu0 %v1851
        %v1853 = vpop.xlane.xlu0 %1852
        %v1854 = vsel %vm772, %v1848, -inf
        %1855 = vmax.xlane.f32.xlu0 %v1854
        %v1856 = vpop.xlane.xlu0 %1855
        %v1857 = vsel %vm772, %v1849, -inf
        %1858 = vmax.xlane.f32.xlu0 %v1857
        %v1859 = vpop.xlane.xlu0 %1858
        %v1860 = vsel %vm772, %v1850, -inf
        %1861 = vmax.xlane.f32.xlu0 %v1860
        %v1862 = vpop.xlane.xlu0 %1861
        %v1863 = vsub.f32 %v1847, %v1853
        %v1864 = vsub.f32 %v1848, %v1856
        %v1865 = vsub.f32 %v1849, %v1859
        %v1866 = vsub.f32 %v1850, %v1862
        %v1867 = vmul.f32 %v1863, 1.442695
        %v1868 = vpow.pop %v1867
        %v1869 = vmul.f32 %v1864, 1.442695
        %v1870 = vpow.pop %v1869
        %v1871 = vmul.f32 %v1865, 1.442695
        %v1872 = vpow.pop %v1871
        %v1873 = vmul.f32 %v1866, 1.442695
        %v1874 = vpow.pop %v1873
        %v1875 = vsel %vm772, %v1868, 0.0
        %1876 = vadd.xlane.f32.xlu0 %v1875
        %v1877 = vpop.xlane.xlu0 %1876
        %v1878 = vsel %vm772, %v1870, 0.0
        %1879 = vadd.xlane.f32.xlu0 %v1878
        %v1880 = vpop.xlane.xlu0 %1879
        %v1881 = vsel %vm772, %v1872, 0.0
        %1882 = vadd.xlane.f32.xlu0 %v1881
        %v1883 = vpop.xlane.xlu0 %1882
        %v1884 = vsel %vm772, %v1874, 0.0
        %1885 = vadd.xlane.f32.xlu0 %v1884
        %v1886 = vpop.xlane.xlu0 %1885
        %v1887 = vrcp.pop %v1877
        %v1888 = vmul.f32 %v1877, %v1887
        %v1889 = vsub.f32 1.0, %v1888
        %v1890 = vmul.f32 %v1887, %v1889
        %v1891 = vadd.f32 %v1887, %v1890
        %vm1892 = vweird.f32 %v1877
        %vm1893 = vweird.f32 %v1887
        %vm1894 = vmor %vm1892, %vm1893
        %v1895 = vsel %vm1894, %v1887, %v1891
        %v1896 = vand.u32 2147483647, %v1877
        %vm1897 = vcmp.eq.f32.partialorder %v1896, 8.507059e+37
        %v1898 = vand.u32 %v1877, 2147483648
        %v1899 = vor.u32 1.1754944e-38, %v1898
        %v1900 = vsel %vm1897, %v1899, %v1895
        %v1901 = vmul.f32 %v1868, %v1900
        %v1902 = vrcp.pop %v1880
        %v1903 = vmul.f32 %v1880, %v1902
        %v1904 = vsub.f32 1.0, %v1903
        %v1905 = vmul.f32 %v1902, %v1904
        %v1906 = vadd.f32 %v1902, %v1905
        %vm1907 = vweird.f32 %v1880
        %vm1908 = vweird.f32 %v1902
        %vm1909 = vmor %vm1907, %vm1908
        %v1910 = vsel %vm1909, %v1902, %v1906
        %v1911 = vand.u32 2147483647, %v1880
        %vm1912 = vcmp.eq.f32.partialorder %v1911, 8.507059e+37
        %v1913 = vand.u32 %v1880, 2147483648
        %v1914 = vor.u32 1.1754944e-38, %v1913
        %v1915 = vsel %vm1912, %v1914, %v1910
        %v1916 = vmul.f32 %v1870, %v1915
        %v1917 = vrcp.pop %v1883
        %v1918 = vmul.f32 %v1883, %v1917
        %v1919 = vsub.f32 1.0, %v1918
        %v1920 = vmul.f32 %v1917, %v1919
        %v1921 = vadd.f32 %v1917, %v1920
        %vm1922 = vweird.f32 %v1883
        %vm1923 = vweird.f32 %v1917
        %vm1924 = vmor %vm1922, %vm1923
        %v1925 = vsel %vm1924, %v1917, %v1921
        %v1926 = vand.u32 2147483647, %v1883
        %vm1927 = vcmp.eq.f32.partialorder %v1926, 8.507059e+37
        %v1928 = vand.u32 %v1883, 2147483648
        %v1929 = vor.u32 1.1754944e-38, %v1928
        %v1930 = vsel %vm1927, %v1929, %v1925
        %v1931 = vmul.f32 %v1872, %v1930
        %v1932 = vrcp.pop %v1886
        %v1933 = vmul.f32 %v1886, %v1932
        %v1934 = vsub.f32 1.0, %v1933
        %v1935 = vmul.f32 %v1932, %v1934
        %v1936 = vadd.f32 %v1932, %v1935
        %vm1937 = vweird.f32 %v1886
        %vm1938 = vweird.f32 %v1932
        %vm1939 = vmor %vm1937, %vm1938
        %v1940 = vsel %vm1939, %v1932, %v1936
        %v1941 = vand.u32 2147483647, %v1886
        %vm1942 = vcmp.eq.f32.partialorder %v1941, 8.507059e+37
        %v1943 = vand.u32 %v1886, 2147483648
        %v1944 = vor.u32 1.1754944e-38, %v1943
        %v1945 = vsel %vm1942, %v1944, %v1940
        %v1946 = vmul.f32 %v1874, %v1945
        %v1948 = vsel %vm772, %v1901, 0
        %1950 = vmatpush.msra.mxu0 0.0
        %1951 = vmatpush.msra.mxu0 0.0
        %1952 = vmatpush.msra.mxu0 0.0
        %1953 = vmatpush.msra.mxu0 0.0
        %1954 = vmatpush.msra.mxu0 0.0
        %1955 = vmatpush.msra.mxu0 0.0
        %1956 = vmatpush.msra.mxu0 0.0
        %1957 = vmatpush.msra.mxu0 0.0
        %1958 = vmatpush.msra.mxu0 0.0
        %1959 = vmatpush.msra.mxu0 0.0
        %1960 = vmatpush.msra.mxu0 0.0
        %1961 = vmatpush.msra.mxu0 0.0
        %1962 = vmatpush.msra.mxu0 0.0
        %1963 = vmatpush.msra.mxu0 0.0
        %1964 = vmatpush.msra.mxu0 0.0
        %1965 = vmatpush.msra.mxu0 %v1668
        %1966 = vmatmul.f32.gmra.mxu0 %v1948
        %v1967 = vpop.f32.mrf.mxu0
        %v1968 = vadd.f32 0.0, %v1967
        %1969 = vdwg.mxu0
        %v1971 = vsel %vm772, %v1916, 0
        %1973 = vmatpush.msra.mxu0 0.0
        %1974 = vmatpush.msra.mxu0 0.0
        %1975 = vmatpush.msra.mxu0 0.0
        %1976 = vmatpush.msra.mxu0 0.0
        %1977 = vmatpush.msra.mxu0 0.0
        %1978 = vmatpush.msra.mxu0 0.0
        %1979 = vmatpush.msra.mxu0 0.0
        %1980 = vmatpush.msra.mxu0 0.0
        %1981 = vmatpush.msra.mxu0 0.0
        %1982 = vmatpush.msra.mxu0 0.0
        %1983 = vmatpush.msra.mxu0 0.0
        %1984 = vmatpush.msra.mxu0 0.0
        %1985 = vmatpush.msra.mxu0 0.0
        %1986 = vmatpush.msra.mxu0 0.0
        %1987 = vmatpush.msra.mxu0 0.0
        %1988 = vmatpush.msra.mxu0 %v1691
        %1989 = vmatmul.f32.gmra.mxu0 %v1971
        %v1990 = vpop.f32.mrf.mxu0
        %v1991 = vadd.f32 0.0, %v1990
        %1992 = vdwg.mxu0
        %v1994 = vsel %vm772, %v1931, 0
        %1996 = vmatpush.msra.mxu0 0.0
        %1997 = vmatpush.msra.mxu0 0.0
        %1998 = vmatpush.msra.mxu0 0.0
        %1999 = vmatpush.msra.mxu0 0.0
        %2000 = vmatpush.msra.mxu0 0.0
        %2001 = vmatpush.msra.mxu0 0.0
        %2002 = vmatpush.msra.mxu0 0.0
        %2003 = vmatpush.msra.mxu0 0.0
        %2004 = vmatpush.msra.mxu0 0.0
        %2005 = vmatpush.msra.mxu0 0.0
        %2006 = vmatpush.msra.mxu0 0.0
        %2007 = vmatpush.msra.mxu0 0.0
        %2008 = vmatpush.msra.mxu0 0.0
        %2009 = vmatpush.msra.mxu0 0.0
        %2010 = vmatpush.msra.mxu0 0.0
        %2011 = vmatpush.msra.mxu0 %v1714
        %2012 = vmatmul.f32.gmra.mxu0 %v1994
        %v2013 = vpop.f32.mrf.mxu0
        %v2014 = vadd.f32 0.0, %v2013
        %2015 = vdwg.mxu0
        %v2017 = vsel %vm772, %v1946, 0
        %2019 = vmatpush.msra.mxu0 0.0
        %2020 = vmatpush.msra.mxu0 0.0
        %2021 = vmatpush.msra.mxu0 0.0
        %2022 = vmatpush.msra.mxu0 0.0
        %2023 = vmatpush.msra.mxu0 0.0
        %2024 = vmatpush.msra.mxu0 0.0
        %2025 = vmatpush.msra.mxu0 0.0
        %2026 = vmatpush.msra.mxu0 0.0
        %2027 = vmatpush.msra.mxu0 0.0
        %2028 = vmatpush.msra.mxu0 0.0
        %2029 = vmatpush.msra.mxu0 0.0
        %2030 = vmatpush.msra.mxu0 0.0
        %2031 = vmatpush.msra.mxu0 0.0
        %2032 = vmatpush.msra.mxu0 0.0
        %2033 = vmatpush.msra.mxu0 0.0
        %2034 = vmatpush.msra.mxu0 %v1737
        %2035 = vmatmul.f32.gmra.mxu0 %v2017
        %v2036 = vpop.f32.mrf.mxu0
        %v2037 = vadd.f32 0.0, %v2036
        %2038 = vdwg.mxu0
        %s2039 = scalar_lea.vmem %s4, 32
        %v2040 = vld [vmem:[%s2039] sm:$0xff]
        %v2041 = vld [vmem:[%s2039 + $0x8] sm:$0xff]
        %v2042 = vld [vmem:[%s2039 + $0x10] sm:$0xff]
        %v2043 = vld [vmem:[%s2039 + $0x18] sm:$0xff]
        %v2045 = vsel %vm772, %v1968, 0
        %2047 = vmatpush.msra.mxu0 0.0
        %2048 = vmatpush.msra.mxu0 0.0
        %2049 = vmatpush.msra.mxu0 0.0
        %2050 = vmatpush.msra.mxu0 0.0
        %2051 = vmatpush.msra.mxu0 0.0
        %2052 = vmatpush.msra.mxu0 0.0
        %2053 = vmatpush.msra.mxu0 0.0
        %2054 = vmatpush.msra.mxu0 0.0
        %2055 = vmatpush.msra.mxu0 0.0
        %2056 = vmatpush.msra.mxu0 0.0
        %2057 = vmatpush.msra.mxu0 0.0
        %2058 = vmatpush.msra.mxu0 0.0
        %2059 = vmatpush.msra.mxu0 0.0
        %2060 = vmatpush.msra.mxu0 0.0
        %2061 = vmatpush.msra.mxu0 0.0
        %2062 = vmatpush.msra.mxu0 %v2040
        %2063 = vmatmul.f32.gmra.mxu0 %v2045
        %v2064 = vpop.f32.mrf.mxu0
        %v2065 = vadd.f32 0.0, %v2064
        %2066 = vdwg.mxu0
        %v2068 = vsel %vm772, %v1991, 0
        %2070 = vmatpush.msra.mxu0 0.0
        %2071 = vmatpush.msra.mxu0 0.0
        %2072 = vmatpush.msra.mxu0 0.0
        %2073 = vmatpush.msra.mxu0 0.0
        %2074 = vmatpush.msra.mxu0 0.0
        %2075 = vmatpush.msra.mxu0 0.0
        %2076 = vmatpush.msra.mxu0 0.0
        %2077 = vmatpush.msra.mxu0 0.0
        %2078 = vmatpush.msra.mxu0 0.0
        %2079 = vmatpush.msra.mxu0 0.0
        %2080 = vmatpush.msra.mxu0 0.0
        %2081 = vmatpush.msra.mxu0 0.0
        %2082 = vmatpush.msra.mxu0 0.0
        %2083 = vmatpush.msra.mxu0 0.0
        %2084 = vmatpush.msra.mxu0 0.0
        %2085 = vmatpush.msra.mxu0 %v2041
        %2086 = vmatmul.f32.gmra.mxu0 %v2068
        %v2087 = vpop.f32.mrf.mxu0
        %v2088 = vadd.f32 0.0, %v2087
        %2089 = vdwg.mxu0
        %v2091 = vsel %vm772, %v2014, 0
        %2093 = vmatpush.msra.mxu0 0.0
        %2094 = vmatpush.msra.mxu0 0.0
        %2095 = vmatpush.msra.mxu0 0.0
        %2096 = vmatpush.msra.mxu0 0.0
        %2097 = vmatpush.msra.mxu0 0.0
        %2098 = vmatpush.msra.mxu0 0.0
        %2099 = vmatpush.msra.mxu0 0.0
        %2100 = vmatpush.msra.mxu0 0.0
        %2101 = vmatpush.msra.mxu0 0.0
        %2102 = vmatpush.msra.mxu0 0.0
        %2103 = vmatpush.msra.mxu0 0.0
        %2104 = vmatpush.msra.mxu0 0.0
        %2105 = vmatpush.msra.mxu0 0.0
        %2106 = vmatpush.msra.mxu0 0.0
        %2107 = vmatpush.msra.mxu0 0.0
        %2108 = vmatpush.msra.mxu0 %v2042
        %2109 = vmatmul.f32.gmra.mxu0 %v2091
        %v2110 = vpop.f32.mrf.mxu0
        %v2111 = vadd.f32 0.0, %v2110
        %2112 = vdwg.mxu0
        %v2114 = vsel %vm772, %v2037, 0
        %2116 = vmatpush.msra.mxu0 0.0
        %2117 = vmatpush.msra.mxu0 0.0
        %2118 = vmatpush.msra.mxu0 0.0
        %2119 = vmatpush.msra.mxu0 0.0
        %2120 = vmatpush.msra.mxu0 0.0
        %2121 = vmatpush.msra.mxu0 0.0
        %2122 = vmatpush.msra.mxu0 0.0
        %2123 = vmatpush.msra.mxu0 0.0
        %2124 = vmatpush.msra.mxu0 0.0
        %2125 = vmatpush.msra.mxu0 0.0
        %2126 = vmatpush.msra.mxu0 0.0
        %2127 = vmatpush.msra.mxu0 0.0
        %2128 = vmatpush.msra.mxu0 0.0
        %2129 = vmatpush.msra.mxu0 0.0
        %2130 = vmatpush.msra.mxu0 0.0
        %2131 = vmatpush.msra.mxu0 %v2043
        %2132 = vmatmul.f32.gmra.mxu0 %v2114
        %v2133 = vpop.f32.mrf.mxu0
        %v2134 = vadd.f32 0.0, %v2133
        %2135 = vdwg.mxu0
        %v2136 = vadd.f32 %v2065, %v2088
        %v2137 = vadd.f32 %v2136, %v2111
        %v2138 = vadd.f32 %v2137, %v2134
        %v2139 = vld [vmem:[%s1365 + $0x4] sm:$0x1]
        %v2140 = vperm.slane %v2139, 0
        %v2141 = vadd.f32 %v2138, %v2140
        %v2142 = vadd.f32 %v1393, %v2141
        %v2143 = vld [vmem:[%s1365 + $0x2] sm:$0x1]
        %v2144 = vld [vmem:[%s1365 + $0x3] sm:$0x1]
        %v2145 = vsel %vm395, %v2142, 0.0
        %2146 = vadd.xlane.f32.xlu0 %v2145
        %v2147 = vpop.xlane.xlu0 %2146
        %v2148 = vmul.f32 %v2147, %v405
        %v2149 = vsub.f32 %v2142, %v2148
        %v2150 = vmul.f32 %v2149, %v2149
        %v2151 = vsel %vm395, %v2150, 0.0
        %2152 = vadd.xlane.f32.xlu0 %v2151
        %v2153 = vpop.xlane.xlu0 %2152
        %v2154 = vmul.f32 %v2153, %v405
        %v2155 = vadd.f32 %v2154, 1e-05
        %v2156 = vrsqrt.pop %v2155
        %v2157 = vmul.f32 %v2156, %v2155
        %v2158 = vmul.f32 %v2157, %v2156
        %v2159 = vmul.f32 0.5, %v2158
        %v2160 = vsub.f32 1.5, %v2159
        %v2161 = vmul.f32 %v2156, %v2160
        %vm2162 = vweird.f32 %v2155
        %vm2163 = vweird.f32 %v2156
        %vm2164 = vmor %vm2162, %vm2163
        %v2165 = vsel %vm2164, %v2156, %v2161
        %v2166 = vmul.f32 %v2149, %v2165
        %v2167 = vperm.slane %v2143, 0
        %v2168 = vmul.f32 %v2166, %v2167
        %v2169 = vperm.slane %v2144, 0
        %v2170 = vadd.f32 %v2168, %v2169
        %s2171 = scalar_lea.vmem %s5, 128
        %v2172 = vld [vmem:[%s2171] sm:$0xff]
        %v2173 = vld [vmem:[%s2171 + $0x8] sm:$0xff]
        %v2174 = vld [vmem:[%s2171 + $0x10] sm:$0xff]
        %v2175 = vld [vmem:[%s2171 + $0x18] sm:$0xff]
        %v2176 = vld [vmem:[%s2171 + $0x20] sm:$0xff]
        %v2177 = vld [vmem:[%s2171 + $0x28] sm:$0xff]
        %v2178 = vld [vmem:[%s2171 + $0x30] sm:$0xff]
        %v2179 = vld [vmem:[%s2171 + $0x38] sm:$0xff]
        %v2180 = vld [vmem:[%s2171 + $0x40] sm:$0xff]
        %v2181 = vld [vmem:[%s2171 + $0x48] sm:$0xff]
        %v2182 = vld [vmem:[%s2171 + $0x50] sm:$0xff]
        %v2183 = vld [vmem:[%s2171 + $0x58] sm:$0xff]
        %v2184 = vld [vmem:[%s2171 + $0x60] sm:$0xff]
        %v2185 = vld [vmem:[%s2171 + $0x68] sm:$0xff]
        %v2186 = vld [vmem:[%s2171 + $0x70] sm:$0xff]
        %v2187 = vld [vmem:[%s2171 + $0x78] sm:$0xff]
        %v2188 = vld [vmem:[%s1365 + $0x6] sm:$0x1]
        %v2189 = vperm.slane %v2188, 0
        %v2191 = vsel %vm395, %v2170, 0
        %v2194 = vsel %vm395, %v2172, 0
        %v2197 = vsel %vm395, %v2173, 0
        %v2200 = vsel %vm395, %v2174, 0
        %v2203 = vsel %vm395, %v2175, 0
        %v2206 = vsel %vm395, %v2176, 0
        %v2209 = vsel %vm395, %v2177, 0
        %v2212 = vsel %vm395, %v2178, 0
        %v2215 = vsel %vm395, %v2179, 0
        %v2218 = vsel %vm395, %v2180, 0
        %v2221 = vsel %vm395, %v2181, 0
        %v2224 = vsel %vm395, %v2182, 0
        %v2227 = vsel %vm395, %v2183, 0
        %v2230 = vsel %vm395, %v2184, 0
        %v2233 = vsel %vm395, %v2185, 0
        %v2236 = vsel %vm395, %v2186, 0
        %v2239 = vsel %vm395, %v2187, 0
        %2241 = vmatpush.xpose.msra.mxu0 %v2239
        %2242 = vmatpush.xpose.msra.mxu0 %v2236
        %2243 = vmatpush.xpose.msra.mxu0 %v2233
        %2244 = vmatpush.xpose.msra.mxu0 %v2230
        %2245 = vmatpush.xpose.msra.mxu0 %v2227
        %2246 = vmatpush.xpose.msra.mxu0 %v2224
        %2247 = vmatpush.xpose.msra.mxu0 %v2221
        %2248 = vmatpush.xpose.msra.mxu0 %v2218
        %2249 = vmatpush.xpose.msra.mxu0 %v2215
        %2250 = vmatpush.xpose.msra.mxu0 %v2212
        %2251 = vmatpush.xpose.msra.mxu0 %v2209
        %2252 = vmatpush.xpose.msra.mxu0 %v2206
        %2253 = vmatpush.xpose.msra.mxu0 %v2203
        %2254 = vmatpush.xpose.msra.mxu0 %v2200
        %2255 = vmatpush.xpose.msra.mxu0 %v2197
        %2256 = vmatpush.xpose.msra.mxu0 %v2194
        %2257 = vmatmul.f32.gmra.mxu0 %v2191
        %v2258 = vpop.f32.mrf.mxu0
        %v2259 = vadd.f32 %v2189, %v2258
        %2260 = vdwg.mxu0
        %v2261 = vmul.f32 %v2259, 0.5
        %v2262 = vmul.f32 %v2259, 0.70710677
        %v2263 = vmul.f32 %v2262, %v2262
        %v2264 = vmin.f32 16.0, %v2263
        %v2265 = vmul.f32 %v2264, 2.1237322e-06
        %v2266 = vadd.f32 %v2265, 0.00028619796
        %v2267 = vmul.f32 %v2264, %v2266
        %v2268 = vadd.f32 %v2267, 0.0036580483
        %v2269 = vmul.f32 %v2264, %v2268
        %v2270 = vadd.f32 %v2269, 0.05243302
        %v2271 = vmul.f32 %v2264, %v2270
        %v2272 = vadd.f32 %v2271, 0.18741608
        %v2273 = vmul.f32 %v2264, %v2272
        %v2274 = vadd.f32 %v2273, 1.1283791
        %v2275 = vmul.f32 %v2262, %v2274
        %v2276 = vmul.f32 %v2264, 3.8918573e-05
        %v2277 = vadd.f32 %v2276, 0.001143296
        %v2278 = vmul.f32 %v2264, %v2277
        %v2279 = vadd.f32 %v2278, 0.014752088
        %v2280 = vmul.f32 %v2264, %v2279
        %v2281 = vadd.f32 %v2280, 0.112945676
        %v2282 = vmul.f32 %v2264, %v2281
        %v2283 = vadd.f32 %v2282, 0.4994258
        %v2284 = vmul.f32 %v2264, %v2283
        %v2285 = vadd.f32 %v2284, 1.0
        %v2286 = vrcp.pop %v2285
        %v2287 = vmul.f32 %v2285, %v2286
        %v2288 = vsub.f32 1.0, %v2287
        %v2289 = vmul.f32 %v2286, %v2288
        %v2290 = vadd.f32 %v2286, %v2289
        %vm2291 = vweird.f32 %v2285
        %vm2292 = vweird.f32 %v2286
        %vm2293 = vmor %vm2291, %vm2292
        %v2294 = vsel %vm2293, %v2286, %v2290
        %v2295 = vand.u32 2147483647, %v2285
        %vm2296 = vcmp.eq.f32.partialorder %v2295, 8.507059e+37
        %v2297 = vand.u32 %v2285, 2147483648
        %v2298 = vor.u32 1.1754944e-38, %v2297
        %v2299 = vsel %vm2296, %v2298, %v2294
        %v2300 = vmul.f32 %v2275, %v2299
        %v2301 = vmin.f32 %v2300, 1.0
        %v2302 = vmax.f32 %v2301, -1.0
        %v2303 = vadd.f32 %v2302, 1.0
        %v2304 = vmul.f32 %v2261, %v2303
        %s2305 = scalar_lea.vmem %s6, 32
        %v2306 = vld [vmem:[%s2305] sm:$0xff]
        %v2307 = vld [vmem:[%s2305 + $0x8] sm:$0xff]
        %v2308 = vld [vmem:[%s2305 + $0x10] sm:$0xff]
        %v2309 = vld [vmem:[%s2305 + $0x18] sm:$0xff]
        %v2310 = vld [vmem:[%s1365 + $0x5] sm:$0x1]
        %v2311 = vperm.slane %v2310, 0
        %2312 = vmatpush.xpose.msra.mxu0 0.0
        %2313 = vmatpush.xpose.msra.mxu0 0.0
        %2314 = vmatpush.xpose.msra.mxu0 0.0
        %2315 = vmatpush.xpose.msra.mxu0 0.0
        %2316 = vmatpush.xpose.msra.mxu0 0.0
        %2317 = vmatpush.xpose.msra.mxu0 0.0
        %2318 = vmatpush.xpose.msra.mxu0 0.0
        %2319 = vmatpush.xpose.msra.mxu0 0.0
        %2320 = vmatpush.xpose.msra.mxu0 0.0
        %2321 = vmatpush.xpose.msra.mxu0 0.0
        %2322 = vmatpush.xpose.msra.mxu0 0.0
        %2323 = vmatpush.xpose.msra.mxu0 0.0
        %2324 = vmatpush.xpose.msra.mxu0 %v2309
        %2325 = vmatpush.xpose.msra.mxu0 %v2308
        %2326 = vmatpush.xpose.msra.mxu0 %v2307
        %2327 = vmatpush.xpose.msra.mxu0 %v2306
        %2328 = vmatmul.f32.gmra.mxu0 %v2304
        %v2329 = vpop.f32.mrf.mxu0
        %v2330 = vadd.f32 %v2311, %v2329
        %2331 = vdwg.mxu0
        %v2332 = vadd.f32 %v2142, %v2330
        %v2333 = vadd.f32 %v2332, %v383
        %s2334 = scalar_lea.vmem %s7, 16
        %v2335 = vld [vmem:[%s2334] sm:$0x1]
        %v2336 = vld [vmem:[%s2334 + $0x1] sm:$0x1]
        %v2337 = vsel %vm395, %v2333, 0.0
        %2338 = vadd.xlane.f32.xlu0 %v2337
        %v2339 = vpop.xlane.xlu0 %2338
        %v2340 = vmul.f32 %v2339, %v405
        %v2341 = vsub.f32 %v2333, %v2340
        %v2342 = vmul.f32 %v2341, %v2341
        %v2343 = vsel %vm395, %v2342, 0.0
        %2344 = vadd.xlane.f32.xlu0 %v2343
        %v2345 = vpop.xlane.xlu0 %2344
        %v2346 = vmul.f32 %v2345, %v405
        %v2347 = vadd.f32 %v2346, 1e-05
        %v2348 = vrsqrt.pop %v2347
        %v2349 = vmul.f32 %v2348, %v2347
        %v2350 = vmul.f32 %v2349, %v2348
        %v2351 = vmul.f32 0.5, %v2350
        %v2352 = vsub.f32 1.5, %v2351
        %v2353 = vmul.f32 %v2348, %v2352
        %vm2354 = vweird.f32 %v2347
        %vm2355 = vweird.f32 %v2348
        %vm2356 = vmor %vm2354, %vm2355
        %v2357 = vsel %vm2356, %v2348, %v2353
        %v2358 = vmul.f32 %v2341, %v2357
        %v2359 = vperm.slane %v2335, 0
        %v2360 = vmul.f32 %v2358, %v2359
        %v2361 = vperm.slane %v2336, 0
        %v2362 = vadd.f32 %v2360, %v2361
        %s2363 = scalar_lea.vmem %s2, 192
        %v2364 = vld [vmem:[%s2363] sm:$0xff]
        %v2365 = vld [vmem:[%s2363 + $0x8] sm:$0xff]
        %v2366 = vld [vmem:[%s2363 + $0x10] sm:$0xff]
        %v2367 = vld [vmem:[%s2363 + $0x18] sm:$0xff]
        %s2368 = scalar_lea.vmem %s3, 24
        %v2369 = vld [vmem:[%s2368] sm:$0x1]
        %v2370 = vld [vmem:[%s2368 + $0x1] sm:$0x1]
        %v2371 = vld [vmem:[%s2368 + $0x2] sm:$0x1]
        %v2372 = vld [vmem:[%s2368 + $0x3] sm:$0x1]
        %v2377 = vperm.slane %v2369, 0
        %v2378 = vperm.slane %v2370, 0
        %v2379 = vperm.slane %v2371, 0
        %v2380 = vperm.slane %v2372, 0
        %v2386 = vsel %vm395, %v2362, 0
        %v2389 = vsel %vm395, %v2364, 0
        %2391 = vmatpush.xpose.msra.mxu0 0.0
        %2392 = vmatpush.xpose.msra.mxu0 0.0
        %2393 = vmatpush.xpose.msra.mxu0 0.0
        %2394 = vmatpush.xpose.msra.mxu0 0.0
        %2395 = vmatpush.xpose.msra.mxu0 0.0
        %2396 = vmatpush.xpose.msra.mxu0 0.0
        %2397 = vmatpush.xpose.msra.mxu0 0.0
        %2398 = vmatpush.xpose.msra.mxu0 0.0
        %2399 = vmatpush.xpose.msra.mxu0 0.0
        %2400 = vmatpush.xpose.msra.mxu0 0.0
        %2401 = vmatpush.xpose.msra.mxu0 0.0
        %2402 = vmatpush.xpose.msra.mxu0 0.0
        %2403 = vmatpush.xpose.msra.mxu0 0.0
        %2404 = vmatpush.xpose.msra.mxu0 0.0
        %2405 = vmatpush.xpose.msra.mxu0 0.0
        %2406 = vmatpush.xpose.msra.mxu0 %v2389
        %2407 = vmatmul.f32.gmra.mxu0 %v2386
        %v2408 = vpop.f32.mrf.mxu0
        %v2409 = vadd.f32 %v2377, %v2408
        %2410 = vdwg.mxu0
        %v2412 = vsel %vm395, %v2365, 0
        %2414 = vmatpush.xpose.msra.mxu0 0.0
        %2415 = vmatpush.xpose.msra.mxu0 0.0
        %2416 = vmatpush.xpose.msra.mxu0 0.0
        %2417 = vmatpush.xpose.msra.mxu0 0.0
        %2418 = vmatpush.xpose.msra.mxu0 0.0
        %2419 = vmatpush.xpose.msra.mxu0 0.0
        %2420 = vmatpush.xpose.msra.mxu0 0.0
        %2421 = vmatpush.xpose.msra.mxu0 0.0
        %2422 = vmatpush.xpose.msra.mxu0 0.0
        %2423 = vmatpush.xpose.msra.mxu0 0.0
        %2424 = vmatpush.xpose.msra.mxu0 0.0
        %2425 = vmatpush.xpose.msra.mxu0 0.0
        %2426 = vmatpush.xpose.msra.mxu0 0.0
        %2427 = vmatpush.xpose.msra.mxu0 0.0
        %2428 = vmatpush.xpose.msra.mxu0 0.0
        %2429 = vmatpush.xpose.msra.mxu0 %v2412
        %2430 = vmatmul.f32.gmra.mxu0 %v2386
        %v2431 = vpop.f32.mrf.mxu0
        %v2432 = vadd.f32 %v2378, %v2431
        %2433 = vdwg.mxu0
        %v2435 = vsel %vm395, %v2366, 0
        %2437 = vmatpush.xpose.msra.mxu0 0.0
        %2438 = vmatpush.xpose.msra.mxu0 0.0
        %2439 = vmatpush.xpose.msra.mxu0 0.0
        %2440 = vmatpush.xpose.msra.mxu0 0.0
        %2441 = vmatpush.xpose.msra.mxu0 0.0
        %2442 = vmatpush.xpose.msra.mxu0 0.0
        %2443 = vmatpush.xpose.msra.mxu0 0.0
        %2444 = vmatpush.xpose.msra.mxu0 0.0
        %2445 = vmatpush.xpose.msra.mxu0 0.0
        %2446 = vmatpush.xpose.msra.mxu0 0.0
        %2447 = vmatpush.xpose.msra.mxu0 0.0
        %2448 = vmatpush.xpose.msra.mxu0 0.0
        %2449 = vmatpush.xpose.msra.mxu0 0.0
        %2450 = vmatpush.xpose.msra.mxu0 0.0
        %2451 = vmatpush.xpose.msra.mxu0 0.0
        %2452 = vmatpush.xpose.msra.mxu0 %v2435
        %2453 = vmatmul.f32.gmra.mxu0 %v2386
        %v2454 = vpop.f32.mrf.mxu0
        %v2455 = vadd.f32 %v2379, %v2454
        %2456 = vdwg.mxu0
        %v2458 = vsel %vm395, %v2367, 0
        %2460 = vmatpush.xpose.msra.mxu0 0.0
        %2461 = vmatpush.xpose.msra.mxu0 0.0
        %2462 = vmatpush.xpose.msra.mxu0 0.0
        %2463 = vmatpush.xpose.msra.mxu0 0.0
        %2464 = vmatpush.xpose.msra.mxu0 0.0
        %2465 = vmatpush.xpose.msra.mxu0 0.0
        %2466 = vmatpush.xpose.msra.mxu0 0.0
        %2467 = vmatpush.xpose.msra.mxu0 0.0
        %2468 = vmatpush.xpose.msra.mxu0 0.0
        %2469 = vmatpush.xpose.msra.mxu0 0.0
        %2470 = vmatpush.xpose.msra.mxu0 0.0
        %2471 = vmatpush.xpose.msra.mxu0 0.0
        %2472 = vmatpush.xpose.msra.mxu0 0.0
        %2473 = vmatpush.xpose.msra.mxu0 0.0
        %2474 = vmatpush.xpose.msra.mxu0 0.0
        %2475 = vmatpush.xpose.msra.mxu0 %v2458
        %2476 = vmatmul.f32.gmra.mxu0 %v2386
        %v2477 = vpop.f32.mrf.mxu0
        %v2478 = vadd.f32 %v2380, %v2477
        %2479 = vdwg.mxu0
        %s2480 = scalar_lea.vmem %s2, 224
        %v2481 = vld [vmem:[%s2480] sm:$0xff]
        %v2482 = vld [vmem:[%s2480 + $0x8] sm:$0xff]
        %v2483 = vld [vmem:[%s2480 + $0x10] sm:$0xff]
        %v2484 = vld [vmem:[%s2480 + $0x18] sm:$0xff]
        %s2485 = scalar_lea.vmem %s3, 28
        %v2486 = vld [vmem:[%s2485] sm:$0x1]
        %v2487 = vld [vmem:[%s2485 + $0x1] sm:$0x1]
        %v2488 = vld [vmem:[%s2485 + $0x2] sm:$0x1]
        %v2489 = vld [vmem:[%s2485 + $0x3] sm:$0x1]
        %v2494 = vperm.slane %v2486, 0
        %v2495 = vperm.slane %v2487, 0
        %v2496 = vperm.slane %v2488, 0
        %v2497 = vperm.slane %v2489, 0
        %v2503 = vsel %vm395, %v2481, 0
        %2505 = vmatpush.xpose.msra.mxu0 0.0
        %2506 = vmatpush.xpose.msra.mxu0 0.0
        %2507 = vmatpush.xpose.msra.mxu0 0.0
        %2508 = vmatpush.xpose.msra.mxu0 0.0
        %2509 = vmatpush.xpose.msra.mxu0 0.0
        %2510 = vmatpush.xpose.msra.mxu0 0.0
        %2511 = vmatpush.xpose.msra.mxu0 0.0
        %2512 = vmatpush.xpose.msra.mxu0 0.0
        %2513 = vmatpush.xpose.msra.mxu0 0.0
        %2514 = vmatpush.xpose.msra.mxu0 0.0
        %2515 = vmatpush.xpose.msra.mxu0 0.0
        %2516 = vmatpush.xpose.msra.mxu0 0.0
        %2517 = vmatpush.xpose.msra.mxu0 0.0
        %2518 = vmatpush.xpose.msra.mxu0 0.0
        %2519 = vmatpush.xpose.msra.mxu0 0.0
        %2520 = vmatpush.xpose.msra.mxu0 %v2503
        %2521 = vmatmul.f32.gmra.mxu0 %v2386
        %v2522 = vpop.f32.mrf.mxu0
        %v2523 = vadd.f32 %v2494, %v2522
        %2524 = vdwg.mxu0
        %v2526 = vsel %vm395, %v2482, 0
        %2528 = vmatpush.xpose.msra.mxu0 0.0
        %2529 = vmatpush.xpose.msra.mxu0 0.0
        %2530 = vmatpush.xpose.msra.mxu0 0.0
        %2531 = vmatpush.xpose.msra.mxu0 0.0
        %2532 = vmatpush.xpose.msra.mxu0 0.0
        %2533 = vmatpush.xpose.msra.mxu0 0.0
        %2534 = vmatpush.xpose.msra.mxu0 0.0
        %2535 = vmatpush.xpose.msra.mxu0 0.0
        %2536 = vmatpush.xpose.msra.mxu0 0.0
        %2537 = vmatpush.xpose.msra.mxu0 0.0
        %2538 = vmatpush.xpose.msra.mxu0 0.0
        %2539 = vmatpush.xpose.msra.mxu0 0.0
        %2540 = vmatpush.xpose.msra.mxu0 0.0
        %2541 = vmatpush.xpose.msra.mxu0 0.0
        %2542 = vmatpush.xpose.msra.mxu0 0.0
        %2543 = vmatpush.xpose.msra.mxu0 %v2526
        %2544 = vmatmul.f32.gmra.mxu0 %v2386
        %v2545 = vpop.f32.mrf.mxu0
        %v2546 = vadd.f32 %v2495, %v2545
        %2547 = vdwg.mxu0
        %v2549 = vsel %vm395, %v2483, 0
        %2551 = vmatpush.xpose.msra.mxu0 0.0
        %2552 = vmatpush.xpose.msra.mxu0 0.0
        %2553 = vmatpush.xpose.msra.mxu0 0.0
        %2554 = vmatpush.xpose.msra.mxu0 0.0
        %2555 = vmatpush.xpose.msra.mxu0 0.0
        %2556 = vmatpush.xpose.msra.mxu0 0.0
        %2557 = vmatpush.xpose.msra.mxu0 0.0
        %2558 = vmatpush.xpose.msra.mxu0 0.0
        %2559 = vmatpush.xpose.msra.mxu0 0.0
        %2560 = vmatpush.xpose.msra.mxu0 0.0
        %2561 = vmatpush.xpose.msra.mxu0 0.0
        %2562 = vmatpush.xpose.msra.mxu0 0.0
        %2563 = vmatpush.xpose.msra.mxu0 0.0
        %2564 = vmatpush.xpose.msra.mxu0 0.0
        %2565 = vmatpush.xpose.msra.mxu0 0.0
        %2566 = vmatpush.xpose.msra.mxu0 %v2549
        %2567 = vmatmul.f32.gmra.mxu0 %v2386
        %v2568 = vpop.f32.mrf.mxu0
        %v2569 = vadd.f32 %v2496, %v2568
        %2570 = vdwg.mxu0
        %v2572 = vsel %vm395, %v2484, 0
        %2574 = vmatpush.xpose.msra.mxu0 0.0
        %2575 = vmatpush.xpose.msra.mxu0 0.0
        %2576 = vmatpush.xpose.msra.mxu0 0.0
        %2577 = vmatpush.xpose.msra.mxu0 0.0
        %2578 = vmatpush.xpose.msra.mxu0 0.0
        %2579 = vmatpush.xpose.msra.mxu0 0.0
        %2580 = vmatpush.xpose.msra.mxu0 0.0
        %2581 = vmatpush.xpose.msra.mxu0 0.0
        %2582 = vmatpush.xpose.msra.mxu0 0.0
        %2583 = vmatpush.xpose.msra.mxu0 0.0
        %2584 = vmatpush.xpose.msra.mxu0 0.0
        %2585 = vmatpush.xpose.msra.mxu0 0.0
        %2586 = vmatpush.xpose.msra.mxu0 0.0
        %2587 = vmatpush.xpose.msra.mxu0 0.0
        %2588 = vmatpush.xpose.msra.mxu0 0.0
        %2589 = vmatpush.xpose.msra.mxu0 %v2572
        %2590 = vmatmul.f32.gmra.mxu0 %v2386
        %v2591 = vpop.f32.mrf.mxu0
        %v2592 = vadd.f32 %v2497, %v2591
        %2593 = vdwg.mxu0
        %s2594 = scalar_lea.vmem %s2, 256
        %v2595 = vld [vmem:[%s2594] sm:$0xff]
        %v2596 = vld [vmem:[%s2594 + $0x8] sm:$0xff]
        %v2597 = vld [vmem:[%s2594 + $0x10] sm:$0xff]
        %v2598 = vld [vmem:[%s2594 + $0x18] sm:$0xff]
        %s2599 = scalar_lea.vmem %s3, 32
        %v2600 = vld [vmem:[%s2599] sm:$0x1]
        %v2601 = vld [vmem:[%s2599 + $0x1] sm:$0x1]
        %v2602 = vld [vmem:[%s2599 + $0x2] sm:$0x1]
        %v2603 = vld [vmem:[%s2599 + $0x3] sm:$0x1]
        %v2608 = vperm.slane %v2600, 0
        %v2609 = vperm.slane %v2601, 0
        %v2610 = vperm.slane %v2602, 0
        %v2611 = vperm.slane %v2603, 0
        %v2617 = vsel %vm395, %v2595, 0
        %2619 = vmatpush.xpose.msra.mxu0 0.0
        %2620 = vmatpush.xpose.msra.mxu0 0.0
        %2621 = vmatpush.xpose.msra.mxu0 0.0
        %2622 = vmatpush.xpose.msra.mxu0 0.0
        %2623 = vmatpush.xpose.msra.mxu0 0.0
        %2624 = vmatpush.xpose.msra.mxu0 0.0
        %2625 = vmatpush.xpose.msra.mxu0 0.0
        %2626 = vmatpush.xpose.msra.mxu0 0.0
        %2627 = vmatpush.xpose.msra.mxu0 0.0
        %2628 = vmatpush.xpose.msra.mxu0 0.0
        %2629 = vmatpush.xpose.msra.mxu0 0.0
        %2630 = vmatpush.xpose.msra.mxu0 0.0
        %2631 = vmatpush.xpose.msra.mxu0 0.0
        %2632 = vmatpush.xpose.msra.mxu0 0.0
        %2633 = vmatpush.xpose.msra.mxu0 0.0
        %2634 = vmatpush.xpose.msra.mxu0 %v2617
        %2635 = vmatmul.f32.gmra.mxu0 %v2386
        %v2636 = vpop.f32.mrf.mxu0
        %v2637 = vadd.f32 %v2608, %v2636
        %2638 = vdwg.mxu0
        %v2640 = vsel %vm395, %v2596, 0
        %2642 = vmatpush.xpose.msra.mxu0 0.0
        %2643 = vmatpush.xpose.msra.mxu0 0.0
        %2644 = vmatpush.xpose.msra.mxu0 0.0
        %2645 = vmatpush.xpose.msra.mxu0 0.0
        %2646 = vmatpush.xpose.msra.mxu0 0.0
        %2647 = vmatpush.xpose.msra.mxu0 0.0
        %2648 = vmatpush.xpose.msra.mxu0 0.0
        %2649 = vmatpush.xpose.msra.mxu0 0.0
        %2650 = vmatpush.xpose.msra.mxu0 0.0
        %2651 = vmatpush.xpose.msra.mxu0 0.0
        %2652 = vmatpush.xpose.msra.mxu0 0.0
        %2653 = vmatpush.xpose.msra.mxu0 0.0
        %2654 = vmatpush.xpose.msra.mxu0 0.0
        %2655 = vmatpush.xpose.msra.mxu0 0.0
        %2656 = vmatpush.xpose.msra.mxu0 0.0
        %2657 = vmatpush.xpose.msra.mxu0 %v2640
        %2658 = vmatmul.f32.gmra.mxu0 %v2386
        %v2659 = vpop.f32.mrf.mxu0
        %v2660 = vadd.f32 %v2609, %v2659
        %2661 = vdwg.mxu0
        %v2663 = vsel %vm395, %v2597, 0
        %2665 = vmatpush.xpose.msra.mxu0 0.0
        %2666 = vmatpush.xpose.msra.mxu0 0.0
        %2667 = vmatpush.xpose.msra.mxu0 0.0
        %2668 = vmatpush.xpose.msra.mxu0 0.0
        %2669 = vmatpush.xpose.msra.mxu0 0.0
        %2670 = vmatpush.xpose.msra.mxu0 0.0
        %2671 = vmatpush.xpose.msra.mxu0 0.0
        %2672 = vmatpush.xpose.msra.mxu0 0.0
        %2673 = vmatpush.xpose.msra.mxu0 0.0
        %2674 = vmatpush.xpose.msra.mxu0 0.0
        %2675 = vmatpush.xpose.msra.mxu0 0.0
        %2676 = vmatpush.xpose.msra.mxu0 0.0
        %2677 = vmatpush.xpose.msra.mxu0 0.0
        %2678 = vmatpush.xpose.msra.mxu0 0.0
        %2679 = vmatpush.xpose.msra.mxu0 0.0
        %2680 = vmatpush.xpose.msra.mxu0 %v2663
        %2681 = vmatmul.f32.gmra.mxu0 %v2386
        %v2682 = vpop.f32.mrf.mxu0
        %v2683 = vadd.f32 %v2610, %v2682
        %2684 = vdwg.mxu0
        %v2686 = vsel %vm395, %v2598, 0
        %2688 = vmatpush.xpose.msra.mxu0 0.0
        %2689 = vmatpush.xpose.msra.mxu0 0.0
        %2690 = vmatpush.xpose.msra.mxu0 0.0
        %2691 = vmatpush.xpose.msra.mxu0 0.0
        %2692 = vmatpush.xpose.msra.mxu0 0.0
        %2693 = vmatpush.xpose.msra.mxu0 0.0
        %2694 = vmatpush.xpose.msra.mxu0 0.0
        %2695 = vmatpush.xpose.msra.mxu0 0.0
        %2696 = vmatpush.xpose.msra.mxu0 0.0
        %2697 = vmatpush.xpose.msra.mxu0 0.0
        %2698 = vmatpush.xpose.msra.mxu0 0.0
        %2699 = vmatpush.xpose.msra.mxu0 0.0
        %2700 = vmatpush.xpose.msra.mxu0 0.0
        %2701 = vmatpush.xpose.msra.mxu0 0.0
        %2702 = vmatpush.xpose.msra.mxu0 0.0
        %2703 = vmatpush.xpose.msra.mxu0 %v2686
        %2704 = vmatmul.f32.gmra.mxu0 %v2386
        %v2705 = vpop.f32.mrf.mxu0
        %v2706 = vadd.f32 %v2611, %v2705
        %2707 = vdwg.mxu0
        %v2709 = vsel %vm772, %v2409, 0
        %v2712 = vsel %vm772, %v2523, 0
        %2714 = vmatpush.xpose.msra.mxu0 0.0
        %2715 = vmatpush.xpose.msra.mxu0 0.0
        %2716 = vmatpush.xpose.msra.mxu0 0.0
        %2717 = vmatpush.xpose.msra.mxu0 0.0
        %2718 = vmatpush.xpose.msra.mxu0 0.0
        %2719 = vmatpush.xpose.msra.mxu0 0.0
        %2720 = vmatpush.xpose.msra.mxu0 0.0
        %2721 = vmatpush.xpose.msra.mxu0 0.0
        %2722 = vmatpush.xpose.msra.mxu0 0.0
        %2723 = vmatpush.xpose.msra.mxu0 0.0
        %2724 = vmatpush.xpose.msra.mxu0 0.0
        %2725 = vmatpush.xpose.msra.mxu0 0.0
        %2726 = vmatpush.xpose.msra.mxu0 0.0
        %2727 = vmatpush.xpose.msra.mxu0 0.0
        %2728 = vmatpush.xpose.msra.mxu0 0.0
        %2729 = vmatpush.xpose.msra.mxu0 %v2712
        %2730 = vmatmul.f32.gmra.mxu0 %v2709
        %v2731 = vpop.f32.mrf.mxu0
        %v2732 = vadd.f32 0.0, %v2731
        %2733 = vdwg.mxu0
        %v2735 = vsel %vm772, %v2432, 0
        %v2738 = vsel %vm772, %v2546, 0
        %2740 = vmatpush.xpose.msra.mxu0 0.0
        %2741 = vmatpush.xpose.msra.mxu0 0.0
        %2742 = vmatpush.xpose.msra.mxu0 0.0
        %2743 = vmatpush.xpose.msra.mxu0 0.0
        %2744 = vmatpush.xpose.msra.mxu0 0.0
        %2745 = vmatpush.xpose.msra.mxu0 0.0
        %2746 = vmatpush.xpose.msra.mxu0 0.0
        %2747 = vmatpush.xpose.msra.mxu0 0.0
        %2748 = vmatpush.xpose.msra.mxu0 0.0
        %2749 = vmatpush.xpose.msra.mxu0 0.0
        %2750 = vmatpush.xpose.msra.mxu0 0.0
        %2751 = vmatpush.xpose.msra.mxu0 0.0
        %2752 = vmatpush.xpose.msra.mxu0 0.0
        %2753 = vmatpush.xpose.msra.mxu0 0.0
        %2754 = vmatpush.xpose.msra.mxu0 0.0
        %2755 = vmatpush.xpose.msra.mxu0 %v2738
        %2756 = vmatmul.f32.gmra.mxu0 %v2735
        %v2757 = vpop.f32.mrf.mxu0
        %v2758 = vadd.f32 0.0, %v2757
        %2759 = vdwg.mxu0
        %v2761 = vsel %vm772, %v2455, 0
        %v2764 = vsel %vm772, %v2569, 0
        %2766 = vmatpush.xpose.msra.mxu0 0.0
        %2767 = vmatpush.xpose.msra.mxu0 0.0
        %2768 = vmatpush.xpose.msra.mxu0 0.0
        %2769 = vmatpush.xpose.msra.mxu0 0.0
        %2770 = vmatpush.xpose.msra.mxu0 0.0
        %2771 = vmatpush.xpose.msra.mxu0 0.0
        %2772 = vmatpush.xpose.msra.mxu0 0.0
        %2773 = vmatpush.xpose.msra.mxu0 0.0
        %2774 = vmatpush.xpose.msra.mxu0 0.0
        %2775 = vmatpush.xpose.msra.mxu0 0.0
        %2776 = vmatpush.xpose.msra.mxu0 0.0
        %2777 = vmatpush.xpose.msra.mxu0 0.0
        %2778 = vmatpush.xpose.msra.mxu0 0.0
        %2779 = vmatpush.xpose.msra.mxu0 0.0
        %2780 = vmatpush.xpose.msra.mxu0 0.0
        %2781 = vmatpush.xpose.msra.mxu0 %v2764
        %2782 = vmatmul.f32.gmra.mxu0 %v2761
        %v2783 = vpop.f32.mrf.mxu0
        %v2784 = vadd.f32 0.0, %v2783
        %2785 = vdwg.mxu0
        %v2787 = vsel %vm772, %v2478, 0
        %v2790 = vsel %vm772, %v2592, 0
        %2792 = vmatpush.xpose.msra.mxu0 0.0
        %2793 = vmatpush.xpose.msra.mxu0 0.0
        %2794 = vmatpush.xpose.msra.mxu0 0.0
        %2795 = vmatpush.xpose.msra.mxu0 0.0
        %2796 = vmatpush.xpose.msra.mxu0 0.0
        %2797 = vmatpush.xpose.msra.mxu0 0.0
        %2798 = vmatpush.xpose.msra.mxu0 0.0
        %2799 = vmatpush.xpose.msra.mxu0 0.0
        %2800 = vmatpush.xpose.msra.mxu0 0.0
        %2801 = vmatpush.xpose.msra.mxu0 0.0
        %2802 = vmatpush.xpose.msra.mxu0 0.0
        %2803 = vmatpush.xpose.msra.mxu0 0.0
        %2804 = vmatpush.xpose.msra.mxu0 0.0
        %2805 = vmatpush.xpose.msra.mxu0 0.0
        %2806 = vmatpush.xpose.msra.mxu0 0.0
        %2807 = vmatpush.xpose.msra.mxu0 %v2790
        %2808 = vmatmul.f32.gmra.mxu0 %v2787
        %v2809 = vpop.f32.mrf.mxu0
        %v2810 = vadd.f32 0.0, %v2809
        %2811 = vdwg.mxu0
        %v2812 = vmul.f32 %v2732, 0.35355338
        %v2813 = vmul.f32 %v2758, 0.35355338
        %v2814 = vmul.f32 %v2784, 0.35355338
        %v2815 = vmul.f32 %v2810, 0.35355338
        %v2816 = vsel %vm391, -1e+30, %v2812
        %v2817 = vsel %vm391, -1e+30, %v2813
        %v2818 = vsel %vm391, -1e+30, %v2814
        %v2819 = vsel %vm391, -1e+30, %v2815
        %v2820 = vsel %vm772, %v2816, -inf
        %2821 = vmax.xlane.f32.xlu0 %v2820
        %v2822 = vpop.xlane.xlu0 %2821
        %v2823 = vsel %vm772, %v2817, -inf
        %2824 = vmax.xlane.f32.xlu0 %v2823
        %v2825 = vpop.xlane.xlu0 %2824
        %v2826 = vsel %vm772, %v2818, -inf
        %2827 = vmax.xlane.f32.xlu0 %v2826
        %v2828 = vpop.xlane.xlu0 %2827
        %v2829 = vsel %vm772, %v2819, -inf
        %2830 = vmax.xlane.f32.xlu0 %v2829
        %v2831 = vpop.xlane.xlu0 %2830
        %v2832 = vsub.f32 %v2816, %v2822
        %v2833 = vsub.f32 %v2817, %v2825
        %v2834 = vsub.f32 %v2818, %v2828
        %v2835 = vsub.f32 %v2819, %v2831
        %v2836 = vmul.f32 %v2832, 1.442695
        %v2837 = vpow.pop %v2836
        %v2838 = vmul.f32 %v2833, 1.442695
        %v2839 = vpow.pop %v2838
        %v2840 = vmul.f32 %v2834, 1.442695
        %v2841 = vpow.pop %v2840
        %v2842 = vmul.f32 %v2835, 1.442695
        %v2843 = vpow.pop %v2842
        %v2844 = vsel %vm772, %v2837, 0.0
        %2845 = vadd.xlane.f32.xlu0 %v2844
        %v2846 = vpop.xlane.xlu0 %2845
        %v2847 = vsel %vm772, %v2839, 0.0
        %2848 = vadd.xlane.f32.xlu0 %v2847
        %v2849 = vpop.xlane.xlu0 %2848
        %v2850 = vsel %vm772, %v2841, 0.0
        %2851 = vadd.xlane.f32.xlu0 %v2850
        %v2852 = vpop.xlane.xlu0 %2851
        %v2853 = vsel %vm772, %v2843, 0.0
        %2854 = vadd.xlane.f32.xlu0 %v2853
        %v2855 = vpop.xlane.xlu0 %2854
        %v2856 = vrcp.pop %v2846
        %v2857 = vmul.f32 %v2846, %v2856
        %v2858 = vsub.f32 1.0, %v2857
        %v2859 = vmul.f32 %v2856, %v2858
        %v2860 = vadd.f32 %v2856, %v2859
        %vm2861 = vweird.f32 %v2846
        %vm2862 = vweird.f32 %v2856
        %vm2863 = vmor %vm2861, %vm2862
        %v2864 = vsel %vm2863, %v2856, %v2860
        %v2865 = vand.u32 2147483647, %v2846
        %vm2866 = vcmp.eq.f32.partialorder %v2865, 8.507059e+37
        %v2867 = vand.u32 %v2846, 2147483648
        %v2868 = vor.u32 1.1754944e-38, %v2867
        %v2869 = vsel %vm2866, %v2868, %v2864
        %v2870 = vmul.f32 %v2837, %v2869
        %v2871 = vrcp.pop %v2849
        %v2872 = vmul.f32 %v2849, %v2871
        %v2873 = vsub.f32 1.0, %v2872
        %v2874 = vmul.f32 %v2871, %v2873
        %v2875 = vadd.f32 %v2871, %v2874
        %vm2876 = vweird.f32 %v2849
        %vm2877 = vweird.f32 %v2871
        %vm2878 = vmor %vm2876, %vm2877
        %v2879 = vsel %vm2878, %v2871, %v2875
        %v2880 = vand.u32 2147483647, %v2849
        %vm2881 = vcmp.eq.f32.partialorder %v2880, 8.507059e+37
        %v2882 = vand.u32 %v2849, 2147483648
        %v2883 = vor.u32 1.1754944e-38, %v2882
        %v2884 = vsel %vm2881, %v2883, %v2879
        %v2885 = vmul.f32 %v2839, %v2884
        %v2886 = vrcp.pop %v2852
        %v2887 = vmul.f32 %v2852, %v2886
        %v2888 = vsub.f32 1.0, %v2887
        %v2889 = vmul.f32 %v2886, %v2888
        %v2890 = vadd.f32 %v2886, %v2889
        %vm2891 = vweird.f32 %v2852
        %vm2892 = vweird.f32 %v2886
        %vm2893 = vmor %vm2891, %vm2892
        %v2894 = vsel %vm2893, %v2886, %v2890
        %v2895 = vand.u32 2147483647, %v2852
        %vm2896 = vcmp.eq.f32.partialorder %v2895, 8.507059e+37
        %v2897 = vand.u32 %v2852, 2147483648
        %v2898 = vor.u32 1.1754944e-38, %v2897
        %v2899 = vsel %vm2896, %v2898, %v2894
        %v2900 = vmul.f32 %v2841, %v2899
        %v2901 = vrcp.pop %v2855
        %v2902 = vmul.f32 %v2855, %v2901
        %v2903 = vsub.f32 1.0, %v2902
        %v2904 = vmul.f32 %v2901, %v2903
        %v2905 = vadd.f32 %v2901, %v2904
        %vm2906 = vweird.f32 %v2855
        %vm2907 = vweird.f32 %v2901
        %vm2908 = vmor %vm2906, %vm2907
        %v2909 = vsel %vm2908, %v2901, %v2905
        %v2910 = vand.u32 2147483647, %v2855
        %vm2911 = vcmp.eq.f32.partialorder %v2910, 8.507059e+37
        %v2912 = vand.u32 %v2855, 2147483648
        %v2913 = vor.u32 1.1754944e-38, %v2912
        %v2914 = vsel %vm2911, %v2913, %v2909
        %v2915 = vmul.f32 %v2843, %v2914
        %v2917 = vsel %vm772, %v2870, 0
        %2919 = vmatpush.msra.mxu0 0.0
        %2920 = vmatpush.msra.mxu0 0.0
        %2921 = vmatpush.msra.mxu0 0.0
        %2922 = vmatpush.msra.mxu0 0.0
        %2923 = vmatpush.msra.mxu0 0.0
        %2924 = vmatpush.msra.mxu0 0.0
        %2925 = vmatpush.msra.mxu0 0.0
        %2926 = vmatpush.msra.mxu0 0.0
        %2927 = vmatpush.msra.mxu0 0.0
        %2928 = vmatpush.msra.mxu0 0.0
        %2929 = vmatpush.msra.mxu0 0.0
        %2930 = vmatpush.msra.mxu0 0.0
        %2931 = vmatpush.msra.mxu0 0.0
        %2932 = vmatpush.msra.mxu0 0.0
        %2933 = vmatpush.msra.mxu0 0.0
        %2934 = vmatpush.msra.mxu0 %v2637
        %2935 = vmatmul.f32.gmra.mxu0 %v2917
        %v2936 = vpop.f32.mrf.mxu0
        %v2937 = vadd.f32 0.0, %v2936
        %2938 = vdwg.mxu0
        %v2940 = vsel %vm772, %v2885, 0
        %2942 = vmatpush.msra.mxu0 0.0
        %2943 = vmatpush.msra.mxu0 0.0
        %2944 = vmatpush.msra.mxu0 0.0
        %2945 = vmatpush.msra.mxu0 0.0
        %2946 = vmatpush.msra.mxu0 0.0
        %2947 = vmatpush.msra.mxu0 0.0
        %2948 = vmatpush.msra.mxu0 0.0
        %2949 = vmatpush.msra.mxu0 0.0
        %2950 = vmatpush.msra.mxu0 0.0
        %2951 = vmatpush.msra.mxu0 0.0
        %2952 = vmatpush.msra.mxu0 0.0
        %2953 = vmatpush.msra.mxu0 0.0
        %2954 = vmatpush.msra.mxu0 0.0
        %2955 = vmatpush.msra.mxu0 0.0
        %2956 = vmatpush.msra.mxu0 0.0
        %2957 = vmatpush.msra.mxu0 %v2660
        %2958 = vmatmul.f32.gmra.mxu0 %v2940
        %v2959 = vpop.f32.mrf.mxu0
        %v2960 = vadd.f32 0.0, %v2959
        %2961 = vdwg.mxu0
        %v2963 = vsel %vm772, %v2900, 0
        %2965 = vmatpush.msra.mxu0 0.0
        %2966 = vmatpush.msra.mxu0 0.0
        %2967 = vmatpush.msra.mxu0 0.0
        %2968 = vmatpush.msra.mxu0 0.0
        %2969 = vmatpush.msra.mxu0 0.0
        %2970 = vmatpush.msra.mxu0 0.0
        %2971 = vmatpush.msra.mxu0 0.0
        %2972 = vmatpush.msra.mxu0 0.0
        %2973 = vmatpush.msra.mxu0 0.0
        %2974 = vmatpush.msra.mxu0 0.0
        %2975 = vmatpush.msra.mxu0 0.0
        %2976 = vmatpush.msra.mxu0 0.0
        %2977 = vmatpush.msra.mxu0 0.0
        %2978 = vmatpush.msra.mxu0 0.0
        %2979 = vmatpush.msra.mxu0 0.0
        %2980 = vmatpush.msra.mxu0 %v2683
        %2981 = vmatmul.f32.gmra.mxu0 %v2963
        %v2982 = vpop.f32.mrf.mxu0
        %v2983 = vadd.f32 0.0, %v2982
        %2984 = vdwg.mxu0
        %v2986 = vsel %vm772, %v2915, 0
        %2988 = vmatpush.msra.mxu0 0.0
        %2989 = vmatpush.msra.mxu0 0.0
        %2990 = vmatpush.msra.mxu0 0.0
        %2991 = vmatpush.msra.mxu0 0.0
        %2992 = vmatpush.msra.mxu0 0.0
        %2993 = vmatpush.msra.mxu0 0.0
        %2994 = vmatpush.msra.mxu0 0.0
        %2995 = vmatpush.msra.mxu0 0.0
        %2996 = vmatpush.msra.mxu0 0.0
        %2997 = vmatpush.msra.mxu0 0.0
        %2998 = vmatpush.msra.mxu0 0.0
        %2999 = vmatpush.msra.mxu0 0.0
        %3000 = vmatpush.msra.mxu0 0.0
        %3001 = vmatpush.msra.mxu0 0.0
        %3002 = vmatpush.msra.mxu0 0.0
        %3003 = vmatpush.msra.mxu0 %v2706
        %3004 = vmatmul.f32.gmra.mxu0 %v2986
        %v3005 = vpop.f32.mrf.mxu0
        %v3006 = vadd.f32 0.0, %v3005
        %3007 = vdwg.mxu0
        %s3008 = scalar_lea.vmem %s4, 64
        %v3009 = vld [vmem:[%s3008] sm:$0xff]
        %v3010 = vld [vmem:[%s3008 + $0x8] sm:$0xff]
        %v3011 = vld [vmem:[%s3008 + $0x10] sm:$0xff]
        %v3012 = vld [vmem:[%s3008 + $0x18] sm:$0xff]
        %v3014 = vsel %vm772, %v2937, 0
        %3016 = vmatpush.msra.mxu0 0.0
        %3017 = vmatpush.msra.mxu0 0.0
        %3018 = vmatpush.msra.mxu0 0.0
        %3019 = vmatpush.msra.mxu0 0.0
        %3020 = vmatpush.msra.mxu0 0.0
        %3021 = vmatpush.msra.mxu0 0.0
        %3022 = vmatpush.msra.mxu0 0.0
        %3023 = vmatpush.msra.mxu0 0.0
        %3024 = vmatpush.msra.mxu0 0.0
        %3025 = vmatpush.msra.mxu0 0.0
        %3026 = vmatpush.msra.mxu0 0.0
        %3027 = vmatpush.msra.mxu0 0.0
        %3028 = vmatpush.msra.mxu0 0.0
        %3029 = vmatpush.msra.mxu0 0.0
        %3030 = vmatpush.msra.mxu0 0.0
        %3031 = vmatpush.msra.mxu0 %v3009
        %3032 = vmatmul.f32.gmra.mxu0 %v3014
        %v3033 = vpop.f32.mrf.mxu0
        %v3034 = vadd.f32 0.0, %v3033
        %3035 = vdwg.mxu0
        %v3037 = vsel %vm772, %v2960, 0
        %3039 = vmatpush.msra.mxu0 0.0
        %3040 = vmatpush.msra.mxu0 0.0
        %3041 = vmatpush.msra.mxu0 0.0
        %3042 = vmatpush.msra.mxu0 0.0
        %3043 = vmatpush.msra.mxu0 0.0
        %3044 = vmatpush.msra.mxu0 0.0
        %3045 = vmatpush.msra.mxu0 0.0
        %3046 = vmatpush.msra.mxu0 0.0
        %3047 = vmatpush.msra.mxu0 0.0
        %3048 = vmatpush.msra.mxu0 0.0
        %3049 = vmatpush.msra.mxu0 0.0
        %3050 = vmatpush.msra.mxu0 0.0
        %3051 = vmatpush.msra.mxu0 0.0
        %3052 = vmatpush.msra.mxu0 0.0
        %3053 = vmatpush.msra.mxu0 0.0
        %3054 = vmatpush.msra.mxu0 %v3010
        %3055 = vmatmul.f32.gmra.mxu0 %v3037
        %v3056 = vpop.f32.mrf.mxu0
        %v3057 = vadd.f32 0.0, %v3056
        %3058 = vdwg.mxu0
        %v3060 = vsel %vm772, %v2983, 0
        %3062 = vmatpush.msra.mxu0 0.0
        %3063 = vmatpush.msra.mxu0 0.0
        %3064 = vmatpush.msra.mxu0 0.0
        %3065 = vmatpush.msra.mxu0 0.0
        %3066 = vmatpush.msra.mxu0 0.0
        %3067 = vmatpush.msra.mxu0 0.0
        %3068 = vmatpush.msra.mxu0 0.0
        %3069 = vmatpush.msra.mxu0 0.0
        %3070 = vmatpush.msra.mxu0 0.0
        %3071 = vmatpush.msra.mxu0 0.0
        %3072 = vmatpush.msra.mxu0 0.0
        %3073 = vmatpush.msra.mxu0 0.0
        %3074 = vmatpush.msra.mxu0 0.0
        %3075 = vmatpush.msra.mxu0 0.0
        %3076 = vmatpush.msra.mxu0 0.0
        %3077 = vmatpush.msra.mxu0 %v3011
        %3078 = vmatmul.f32.gmra.mxu0 %v3060
        %v3079 = vpop.f32.mrf.mxu0
        %v3080 = vadd.f32 0.0, %v3079
        %3081 = vdwg.mxu0
        %v3083 = vsel %vm772, %v3006, 0
        %3085 = vmatpush.msra.mxu0 0.0
        %3086 = vmatpush.msra.mxu0 0.0
        %3087 = vmatpush.msra.mxu0 0.0
        %3088 = vmatpush.msra.mxu0 0.0
        %3089 = vmatpush.msra.mxu0 0.0
        %3090 = vmatpush.msra.mxu0 0.0
        %3091 = vmatpush.msra.mxu0 0.0
        %3092 = vmatpush.msra.mxu0 0.0
        %3093 = vmatpush.msra.mxu0 0.0
        %3094 = vmatpush.msra.mxu0 0.0
        %3095 = vmatpush.msra.mxu0 0.0
        %3096 = vmatpush.msra.mxu0 0.0
        %3097 = vmatpush.msra.mxu0 0.0
        %3098 = vmatpush.msra.mxu0 0.0
        %3099 = vmatpush.msra.mxu0 0.0
        %3100 = vmatpush.msra.mxu0 %v3012
        %3101 = vmatmul.f32.gmra.mxu0 %v3083
        %v3102 = vpop.f32.mrf.mxu0
        %v3103 = vadd.f32 0.0, %v3102
        %3104 = vdwg.mxu0
        %v3105 = vadd.f32 %v3034, %v3057
        %v3106 = vadd.f32 %v3105, %v3080
        %v3107 = vadd.f32 %v3106, %v3103
        %v3108 = vld [vmem:[%s2334 + $0x4] sm:$0x1]
        %v3109 = vperm.slane %v3108, 0
        %v3110 = vadd.f32 %v3107, %v3109
        %v3111 = vadd.f32 %v2362, %v3110
        %v3112 = vld [vmem:[%s2334 + $0x2] sm:$0x1]
        %v3113 = vld [vmem:[%s2334 + $0x3] sm:$0x1]
        %v3114 = vsel %vm395, %v3111, 0.0
        %3115 = vadd.xlane.f32.xlu0 %v3114
        %v3116 = vpop.xlane.xlu0 %3115
        %v3117 = vmul.f32 %v3116, %v405
        %v3118 = vsub.f32 %v3111, %v3117
        %v3119 = vmul.f32 %v3118, %v3118
        %v3120 = vsel %vm395, %v3119, 0.0
        %3121 = vadd.xlane.f32.xlu0 %v3120
        %v3122 = vpop.xlane.xlu0 %3121
        %v3123 = vmul.f32 %v3122, %v405
        %v3124 = vadd.f32 %v3123, 1e-05
        %v3125 = vrsqrt.pop %v3124
        %v3126 = vmul.f32 %v3125, %v3124
        %v3127 = vmul.f32 %v3126, %v3125
        %v3128 = vmul.f32 0.5, %v3127
        %v3129 = vsub.f32 1.5, %v3128
        %v3130 = vmul.f32 %v3125, %v3129
        %vm3131 = vweird.f32 %v3124
        %vm3132 = vweird.f32 %v3125
        %vm3133 = vmor %vm3131, %vm3132
        %v3134 = vsel %vm3133, %v3125, %v3130
        %v3135 = vmul.f32 %v3118, %v3134
        %v3136 = vperm.slane %v3112, 0
        %v3137 = vmul.f32 %v3135, %v3136
        %v3138 = vperm.slane %v3113, 0
        %v3139 = vadd.f32 %v3137, %v3138
        %s3140 = scalar_lea.vmem %s5, 256
        %v3141 = vld [vmem:[%s3140] sm:$0xff]
        %v3142 = vld [vmem:[%s3140 + $0x8] sm:$0xff]
        %v3143 = vld [vmem:[%s3140 + $0x10] sm:$0xff]
        %v3144 = vld [vmem:[%s3140 + $0x18] sm:$0xff]
        %v3145 = vld [vmem:[%s3140 + $0x20] sm:$0xff]
        %v3146 = vld [vmem:[%s3140 + $0x28] sm:$0xff]
        %v3147 = vld [vmem:[%s3140 + $0x30] sm:$0xff]
        %v3148 = vld [vmem:[%s3140 + $0x38] sm:$0xff]
        %v3149 = vld [vmem:[%s3140 + $0x40] sm:$0xff]
        %v3150 = vld [vmem:[%s3140 + $0x48] sm:$0xff]
        %v3151 = vld [vmem:[%s3140 + $0x50] sm:$0xff]
        %v3152 = vld [vmem:[%s3140 + $0x58] sm:$0xff]
        %v3153 = vld [vmem:[%s3140 + $0x60] sm:$0xff]
        %v3154 = vld [vmem:[%s3140 + $0x68] sm:$0xff]
        %v3155 = vld [vmem:[%s3140 + $0x70] sm:$0xff]
        %v3156 = vld [vmem:[%s3140 + $0x78] sm:$0xff]
        %v3157 = vld [vmem:[%s2334 + $0x6] sm:$0x1]
        %v3158 = vperm.slane %v3157, 0
        %v3160 = vsel %vm395, %v3139, 0
        %v3163 = vsel %vm395, %v3141, 0
        %v3166 = vsel %vm395, %v3142, 0
        %v3169 = vsel %vm395, %v3143, 0
        %v3172 = vsel %vm395, %v3144, 0
        %v3175 = vsel %vm395, %v3145, 0
        %v3178 = vsel %vm395, %v3146, 0
        %v3181 = vsel %vm395, %v3147, 0
        %v3184 = vsel %vm395, %v3148, 0
        %v3187 = vsel %vm395, %v3149, 0
        %v3190 = vsel %vm395, %v3150, 0
        %v3193 = vsel %vm395, %v3151, 0
        %v3196 = vsel %vm395, %v3152, 0
        %v3199 = vsel %vm395, %v3153, 0
        %v3202 = vsel %vm395, %v3154, 0
        %v3205 = vsel %vm395, %v3155, 0
        %v3208 = vsel %vm395, %v3156, 0
        %3210 = vmatpush.xpose.msra.mxu0 %v3208
        %3211 = vmatpush.xpose.msra.mxu0 %v3205
        %3212 = vmatpush.xpose.msra.mxu0 %v3202
        %3213 = vmatpush.xpose.msra.mxu0 %v3199
        %3214 = vmatpush.xpose.msra.mxu0 %v3196
        %3215 = vmatpush.xpose.msra.mxu0 %v3193
        %3216 = vmatpush.xpose.msra.mxu0 %v3190
        %3217 = vmatpush.xpose.msra.mxu0 %v3187
        %3218 = vmatpush.xpose.msra.mxu0 %v3184
        %3219 = vmatpush.xpose.msra.mxu0 %v3181
        %3220 = vmatpush.xpose.msra.mxu0 %v3178
        %3221 = vmatpush.xpose.msra.mxu0 %v3175
        %3222 = vmatpush.xpose.msra.mxu0 %v3172
        %3223 = vmatpush.xpose.msra.mxu0 %v3169
        %3224 = vmatpush.xpose.msra.mxu0 %v3166
        %3225 = vmatpush.xpose.msra.mxu0 %v3163
        %3226 = vmatmul.f32.gmra.mxu0 %v3160
        %v3227 = vpop.f32.mrf.mxu0
        %v3228 = vadd.f32 %v3158, %v3227
        %3229 = vdwg.mxu0
        %v3230 = vmul.f32 %v3228, 0.5
        %v3231 = vmul.f32 %v3228, 0.70710677
        %v3232 = vmul.f32 %v3231, %v3231
        %v3233 = vmin.f32 16.0, %v3232
        %v3234 = vmul.f32 %v3233, 2.1237322e-06
        %v3235 = vadd.f32 %v3234, 0.00028619796
        %v3236 = vmul.f32 %v3233, %v3235
        %v3237 = vadd.f32 %v3236, 0.0036580483
        %v3238 = vmul.f32 %v3233, %v3237
        %v3239 = vadd.f32 %v3238, 0.05243302
        %v3240 = vmul.f32 %v3233, %v3239
        %v3241 = vadd.f32 %v3240, 0.18741608
        %v3242 = vmul.f32 %v3233, %v3241
        %v3243 = vadd.f32 %v3242, 1.1283791
        %v3244 = vmul.f32 %v3231, %v3243
        %v3245 = vmul.f32 %v3233, 3.8918573e-05
        %v3246 = vadd.f32 %v3245, 0.001143296
        %v3247 = vmul.f32 %v3233, %v3246
        %v3248 = vadd.f32 %v3247, 0.014752088
        %v3249 = vmul.f32 %v3233, %v3248
        %v3250 = vadd.f32 %v3249, 0.112945676
        %v3251 = vmul.f32 %v3233, %v3250
        %v3252 = vadd.f32 %v3251, 0.4994258
        %v3253 = vmul.f32 %v3233, %v3252
        %v3254 = vadd.f32 %v3253, 1.0
        %v3255 = vrcp.pop %v3254
        %v3256 = vmul.f32 %v3254, %v3255
        %v3257 = vsub.f32 1.0, %v3256
        %v3258 = vmul.f32 %v3255, %v3257
        %v3259 = vadd.f32 %v3255, %v3258
        %vm3260 = vweird.f32 %v3254
        %vm3261 = vweird.f32 %v3255
        %vm3262 = vmor %vm3260, %vm3261
        %v3263 = vsel %vm3262, %v3255, %v3259
        %v3264 = vand.u32 2147483647, %v3254
        %vm3265 = vcmp.eq.f32.partialorder %v3264, 8.507059e+37
        %v3266 = vand.u32 %v3254, 2147483648
        %v3267 = vor.u32 1.1754944e-38, %v3266
        %v3268 = vsel %vm3265, %v3267, %v3263
        %v3269 = vmul.f32 %v3244, %v3268
        %v3270 = vmin.f32 %v3269, 1.0
        %v3271 = vmax.f32 %v3270, -1.0
        %v3272 = vadd.f32 %v3271, 1.0
        %v3273 = vmul.f32 %v3230, %v3272
        %s3274 = scalar_lea.vmem %s6, 64
        %v3275 = vld [vmem:[%s3274] sm:$0xff]
        %v3276 = vld [vmem:[%s3274 + $0x8] sm:$0xff]
        %v3277 = vld [vmem:[%s3274 + $0x10] sm:$0xff]
        %v3278 = vld [vmem:[%s3274 + $0x18] sm:$0xff]
        %v3279 = vld [vmem:[%s2334 + $0x5] sm:$0x1]
        %v3280 = vperm.slane %v3279, 0
        %3281 = vmatpush.xpose.msra.mxu0 0.0
        %3282 = vmatpush.xpose.msra.mxu0 0.0
        %3283 = vmatpush.xpose.msra.mxu0 0.0
        %3284 = vmatpush.xpose.msra.mxu0 0.0
        %3285 = vmatpush.xpose.msra.mxu0 0.0
        %3286 = vmatpush.xpose.msra.mxu0 0.0
        %3287 = vmatpush.xpose.msra.mxu0 0.0
        %3288 = vmatpush.xpose.msra.mxu0 0.0
        %3289 = vmatpush.xpose.msra.mxu0 0.0
        %3290 = vmatpush.xpose.msra.mxu0 0.0
        %3291 = vmatpush.xpose.msra.mxu0 0.0
        %3292 = vmatpush.xpose.msra.mxu0 0.0
        %3293 = vmatpush.xpose.msra.mxu0 %v3278
        %3294 = vmatpush.xpose.msra.mxu0 %v3277
        %3295 = vmatpush.xpose.msra.mxu0 %v3276
        %3296 = vmatpush.xpose.msra.mxu0 %v3275
        %3297 = vmatmul.f32.gmra.mxu0 %v3273
        %v3298 = vpop.f32.mrf.mxu0
        %v3299 = vadd.f32 %v3280, %v3298
        %3300 = vdwg.mxu0
        %v3301 = vadd.f32 %v3111, %v3299
        %v3302 = vadd.f32 %v3301, %v383
        %s3303 = scalar_lea.vmem %s7, 24
        %v3304 = vld [vmem:[%s3303] sm:$0x1]
        %v3305 = vld [vmem:[%s3303 + $0x1] sm:$0x1]
        %v3306 = vsel %vm395, %v3302, 0.0
        %3307 = vadd.xlane.f32.xlu0 %v3306
        %v3308 = vpop.xlane.xlu0 %3307
        %v3309 = vmul.f32 %v3308, %v405
        %v3310 = vsub.f32 %v3302, %v3309
        %v3311 = vmul.f32 %v3310, %v3310
        %v3312 = vsel %vm395, %v3311, 0.0
        %3313 = vadd.xlane.f32.xlu0 %v3312
        %v3314 = vpop.xlane.xlu0 %3313
        %v3315 = vmul.f32 %v3314, %v405
        %v3316 = vadd.f32 %v3315, 1e-05
        %v3317 = vrsqrt.pop %v3316
        %v3318 = vmul.f32 %v3317, %v3316
        %v3319 = vmul.f32 %v3318, %v3317
        %v3320 = vmul.f32 0.5, %v3319
        %v3321 = vsub.f32 1.5, %v3320
        %v3322 = vmul.f32 %v3317, %v3321
        %vm3323 = vweird.f32 %v3316
        %vm3324 = vweird.f32 %v3317
        %vm3325 = vmor %vm3323, %vm3324
        %v3326 = vsel %vm3325, %v3317, %v3322
        %v3327 = vmul.f32 %v3310, %v3326
        %v3328 = vperm.slane %v3304, 0
        %v3329 = vmul.f32 %v3327, %v3328
        %v3330 = vperm.slane %v3305, 0
        %v3331 = vadd.f32 %v3329, %v3330
        %s3332 = scalar_lea.vmem %s2, 288
        %v3333 = vld [vmem:[%s3332] sm:$0xff]
        %v3334 = vld [vmem:[%s3332 + $0x8] sm:$0xff]
        %v3335 = vld [vmem:[%s3332 + $0x10] sm:$0xff]
        %v3336 = vld [vmem:[%s3332 + $0x18] sm:$0xff]
        %s3337 = scalar_lea.vmem %s3, 36
        %v3338 = vld [vmem:[%s3337] sm:$0x1]
        %v3339 = vld [vmem:[%s3337 + $0x1] sm:$0x1]
        %v3340 = vld [vmem:[%s3337 + $0x2] sm:$0x1]
        %v3341 = vld [vmem:[%s3337 + $0x3] sm:$0x1]
        %v3346 = vperm.slane %v3338, 0
        %v3347 = vperm.slane %v3339, 0
        %v3348 = vperm.slane %v3340, 0
        %v3349 = vperm.slane %v3341, 0
        %v3355 = vsel %vm395, %v3331, 0
        %v3358 = vsel %vm395, %v3333, 0
        %3360 = vmatpush.xpose.msra.mxu0 0.0
        %3361 = vmatpush.xpose.msra.mxu0 0.0
        %3362 = vmatpush.xpose.msra.mxu0 0.0
        %3363 = vmatpush.xpose.msra.mxu0 0.0
        %3364 = vmatpush.xpose.msra.mxu0 0.0
        %3365 = vmatpush.xpose.msra.mxu0 0.0
        %3366 = vmatpush.xpose.msra.mxu0 0.0
        %3367 = vmatpush.xpose.msra.mxu0 0.0
        %3368 = vmatpush.xpose.msra.mxu0 0.0
        %3369 = vmatpush.xpose.msra.mxu0 0.0
        %3370 = vmatpush.xpose.msra.mxu0 0.0
        %3371 = vmatpush.xpose.msra.mxu0 0.0
        %3372 = vmatpush.xpose.msra.mxu0 0.0
        %3373 = vmatpush.xpose.msra.mxu0 0.0
        %3374 = vmatpush.xpose.msra.mxu0 0.0
        %3375 = vmatpush.xpose.msra.mxu0 %v3358
        %3376 = vmatmul.f32.gmra.mxu0 %v3355
        %v3377 = vpop.f32.mrf.mxu0
        %v3378 = vadd.f32 %v3346, %v3377
        %3379 = vdwg.mxu0
        %v3381 = vsel %vm395, %v3334, 0
        %3383 = vmatpush.xpose.msra.mxu0 0.0
        %3384 = vmatpush.xpose.msra.mxu0 0.0
        %3385 = vmatpush.xpose.msra.mxu0 0.0
        %3386 = vmatpush.xpose.msra.mxu0 0.0
        %3387 = vmatpush.xpose.msra.mxu0 0.0
        %3388 = vmatpush.xpose.msra.mxu0 0.0
        %3389 = vmatpush.xpose.msra.mxu0 0.0
        %3390 = vmatpush.xpose.msra.mxu0 0.0
        %3391 = vmatpush.xpose.msra.mxu0 0.0
        %3392 = vmatpush.xpose.msra.mxu0 0.0
        %3393 = vmatpush.xpose.msra.mxu0 0.0
        %3394 = vmatpush.xpose.msra.mxu0 0.0
        %3395 = vmatpush.xpose.msra.mxu0 0.0
        %3396 = vmatpush.xpose.msra.mxu0 0.0
        %3397 = vmatpush.xpose.msra.mxu0 0.0
        %3398 = vmatpush.xpose.msra.mxu0 %v3381
        %3399 = vmatmul.f32.gmra.mxu0 %v3355
        %v3400 = vpop.f32.mrf.mxu0
        %v3401 = vadd.f32 %v3347, %v3400
        %3402 = vdwg.mxu0
        %v3404 = vsel %vm395, %v3335, 0
        %3406 = vmatpush.xpose.msra.mxu0 0.0
        %3407 = vmatpush.xpose.msra.mxu0 0.0
        %3408 = vmatpush.xpose.msra.mxu0 0.0
        %3409 = vmatpush.xpose.msra.mxu0 0.0
        %3410 = vmatpush.xpose.msra.mxu0 0.0
        %3411 = vmatpush.xpose.msra.mxu0 0.0
        %3412 = vmatpush.xpose.msra.mxu0 0.0
        %3413 = vmatpush.xpose.msra.mxu0 0.0
        %3414 = vmatpush.xpose.msra.mxu0 0.0
        %3415 = vmatpush.xpose.msra.mxu0 0.0
        %3416 = vmatpush.xpose.msra.mxu0 0.0
        %3417 = vmatpush.xpose.msra.mxu0 0.0
        %3418 = vmatpush.xpose.msra.mxu0 0.0
        %3419 = vmatpush.xpose.msra.mxu0 0.0
        %3420 = vmatpush.xpose.msra.mxu0 0.0
        %3421 = vmatpush.xpose.msra.mxu0 %v3404
        %3422 = vmatmul.f32.gmra.mxu0 %v3355
        %v3423 = vpop.f32.mrf.mxu0
        %v3424 = vadd.f32 %v3348, %v3423
        %3425 = vdwg.mxu0
        %v3427 = vsel %vm395, %v3336, 0
        %3429 = vmatpush.xpose.msra.mxu0 0.0
        %3430 = vmatpush.xpose.msra.mxu0 0.0
        %3431 = vmatpush.xpose.msra.mxu0 0.0
        %3432 = vmatpush.xpose.msra.mxu0 0.0
        %3433 = vmatpush.xpose.msra.mxu0 0.0
        %3434 = vmatpush.xpose.msra.mxu0 0.0
        %3435 = vmatpush.xpose.msra.mxu0 0.0
        %3436 = vmatpush.xpose.msra.mxu0 0.0
        %3437 = vmatpush.xpose.msra.mxu0 0.0
        %3438 = vmatpush.xpose.msra.mxu0 0.0
        %3439 = vmatpush.xpose.msra.mxu0 0.0
        %3440 = vmatpush.xpose.msra.mxu0 0.0
        %3441 = vmatpush.xpose.msra.mxu0 0.0
        %3442 = vmatpush.xpose.msra.mxu0 0.0
        %3443 = vmatpush.xpose.msra.mxu0 0.0
        %3444 = vmatpush.xpose.msra.mxu0 %v3427
        %3445 = vmatmul.f32.gmra.mxu0 %v3355
        %v3446 = vpop.f32.mrf.mxu0
        %v3447 = vadd.f32 %v3349, %v3446
        %3448 = vdwg.mxu0
        %s3449 = scalar_lea.vmem %s2, 320
        %v3450 = vld [vmem:[%s3449] sm:$0xff]
        %v3451 = vld [vmem:[%s3449 + $0x8] sm:$0xff]
        %v3452 = vld [vmem:[%s3449 + $0x10] sm:$0xff]
        %v3453 = vld [vmem:[%s3449 + $0x18] sm:$0xff]
        %s3454 = scalar_lea.vmem %s3, 40
        %v3455 = vld [vmem:[%s3454] sm:$0x1]
        %v3456 = vld [vmem:[%s3454 + $0x1] sm:$0x1]
        %v3457 = vld [vmem:[%s3454 + $0x2] sm:$0x1]
        %v3458 = vld [vmem:[%s3454 + $0x3] sm:$0x1]
        %v3463 = vperm.slane %v3455, 0
        %v3464 = vperm.slane %v3456, 0
        %v3465 = vperm.slane %v3457, 0
        %v3466 = vperm.slane %v3458, 0
        %v3472 = vsel %vm395, %v3450, 0
        %3474 = vmatpush.xpose.msra.mxu0 0.0
        %3475 = vmatpush.xpose.msra.mxu0 0.0
        %3476 = vmatpush.xpose.msra.mxu0 0.0
        %3477 = vmatpush.xpose.msra.mxu0 0.0
        %3478 = vmatpush.xpose.msra.mxu0 0.0
        %3479 = vmatpush.xpose.msra.mxu0 0.0
        %3480 = vmatpush.xpose.msra.mxu0 0.0
        %3481 = vmatpush.xpose.msra.mxu0 0.0
        %3482 = vmatpush.xpose.msra.mxu0 0.0
        %3483 = vmatpush.xpose.msra.mxu0 0.0
        %3484 = vmatpush.xpose.msra.mxu0 0.0
        %3485 = vmatpush.xpose.msra.mxu0 0.0
        %3486 = vmatpush.xpose.msra.mxu0 0.0
        %3487 = vmatpush.xpose.msra.mxu0 0.0
        %3488 = vmatpush.xpose.msra.mxu0 0.0
        %3489 = vmatpush.xpose.msra.mxu0 %v3472
        %3490 = vmatmul.f32.gmra.mxu0 %v3355
        %v3491 = vpop.f32.mrf.mxu0
        %v3492 = vadd.f32 %v3463, %v3491
        %3493 = vdwg.mxu0
        %v3495 = vsel %vm395, %v3451, 0
        %3497 = vmatpush.xpose.msra.mxu0 0.0
        %3498 = vmatpush.xpose.msra.mxu0 0.0
        %3499 = vmatpush.xpose.msra.mxu0 0.0
        %3500 = vmatpush.xpose.msra.mxu0 0.0
        %3501 = vmatpush.xpose.msra.mxu0 0.0
        %3502 = vmatpush.xpose.msra.mxu0 0.0
        %3503 = vmatpush.xpose.msra.mxu0 0.0
        %3504 = vmatpush.xpose.msra.mxu0 0.0
        %3505 = vmatpush.xpose.msra.mxu0 0.0
        %3506 = vmatpush.xpose.msra.mxu0 0.0
        %3507 = vmatpush.xpose.msra.mxu0 0.0
        %3508 = vmatpush.xpose.msra.mxu0 0.0
        %3509 = vmatpush.xpose.msra.mxu0 0.0
        %3510 = vmatpush.xpose.msra.mxu0 0.0
        %3511 = vmatpush.xpose.msra.mxu0 0.0
        %3512 = vmatpush.xpose.msra.mxu0 %v3495
        %3513 = vmatmul.f32.gmra.mxu0 %v3355
        %v3514 = vpop.f32.mrf.mxu0
        %v3515 = vadd.f32 %v3464, %v3514
        %3516 = vdwg.mxu0
        %v3518 = vsel %vm395, %v3452, 0
        %3520 = vmatpush.xpose.msra.mxu0 0.0
        %3521 = vmatpush.xpose.msra.mxu0 0.0
        %3522 = vmatpush.xpose.msra.mxu0 0.0
        %3523 = vmatpush.xpose.msra.mxu0 0.0
        %3524 = vmatpush.xpose.msra.mxu0 0.0
        %3525 = vmatpush.xpose.msra.mxu0 0.0
        %3526 = vmatpush.xpose.msra.mxu0 0.0
        %3527 = vmatpush.xpose.msra.mxu0 0.0
        %3528 = vmatpush.xpose.msra.mxu0 0.0
        %3529 = vmatpush.xpose.msra.mxu0 0.0
        %3530 = vmatpush.xpose.msra.mxu0 0.0
        %3531 = vmatpush.xpose.msra.mxu0 0.0
        %3532 = vmatpush.xpose.msra.mxu0 0.0
        %3533 = vmatpush.xpose.msra.mxu0 0.0
        %3534 = vmatpush.xpose.msra.mxu0 0.0
        %3535 = vmatpush.xpose.msra.mxu0 %v3518
        %3536 = vmatmul.f32.gmra.mxu0 %v3355
        %v3537 = vpop.f32.mrf.mxu0
        %v3538 = vadd.f32 %v3465, %v3537
        %3539 = vdwg.mxu0
        %v3541 = vsel %vm395, %v3453, 0
        %3543 = vmatpush.xpose.msra.mxu0 0.0
        %3544 = vmatpush.xpose.msra.mxu0 0.0
        %3545 = vmatpush.xpose.msra.mxu0 0.0
        %3546 = vmatpush.xpose.msra.mxu0 0.0
        %3547 = vmatpush.xpose.msra.mxu0 0.0
        %3548 = vmatpush.xpose.msra.mxu0 0.0
        %3549 = vmatpush.xpose.msra.mxu0 0.0
        %3550 = vmatpush.xpose.msra.mxu0 0.0
        %3551 = vmatpush.xpose.msra.mxu0 0.0
        %3552 = vmatpush.xpose.msra.mxu0 0.0
        %3553 = vmatpush.xpose.msra.mxu0 0.0
        %3554 = vmatpush.xpose.msra.mxu0 0.0
        %3555 = vmatpush.xpose.msra.mxu0 0.0
        %3556 = vmatpush.xpose.msra.mxu0 0.0
        %3557 = vmatpush.xpose.msra.mxu0 0.0
        %3558 = vmatpush.xpose.msra.mxu0 %v3541
        %3559 = vmatmul.f32.gmra.mxu0 %v3355
        %v3560 = vpop.f32.mrf.mxu0
        %v3561 = vadd.f32 %v3466, %v3560
        %3562 = vdwg.mxu0
        %s3563 = scalar_lea.vmem %s2, 352
        %v3564 = vld [vmem:[%s3563] sm:$0xff]
        %v3565 = vld [vmem:[%s3563 + $0x8] sm:$0xff]
        %v3566 = vld [vmem:[%s3563 + $0x10] sm:$0xff]
        %v3567 = vld [vmem:[%s3563 + $0x18] sm:$0xff]
        %s3568 = scalar_lea.vmem %s3, 44
        %v3569 = vld [vmem:[%s3568] sm:$0x1]
        %v3570 = vld [vmem:[%s3568 + $0x1] sm:$0x1]
        %v3571 = vld [vmem:[%s3568 + $0x2] sm:$0x1]
        %v3572 = vld [vmem:[%s3568 + $0x3] sm:$0x1]
        %v3577 = vperm.slane %v3569, 0
        %v3578 = vperm.slane %v3570, 0
        %v3579 = vperm.slane %v3571, 0
        %v3580 = vperm.slane %v3572, 0
        %v3586 = vsel %vm395, %v3564, 0
        %3588 = vmatpush.xpose.msra.mxu0 0.0
        %3589 = vmatpush.xpose.msra.mxu0 0.0
        %3590 = vmatpush.xpose.msra.mxu0 0.0
        %3591 = vmatpush.xpose.msra.mxu0 0.0
        %3592 = vmatpush.xpose.msra.mxu0 0.0
        %3593 = vmatpush.xpose.msra.mxu0 0.0
        %3594 = vmatpush.xpose.msra.mxu0 0.0
        %3595 = vmatpush.xpose.msra.mxu0 0.0
        %3596 = vmatpush.xpose.msra.mxu0 0.0
        %3597 = vmatpush.xpose.msra.mxu0 0.0
        %3598 = vmatpush.xpose.msra.mxu0 0.0
        %3599 = vmatpush.xpose.msra.mxu0 0.0
        %3600 = vmatpush.xpose.msra.mxu0 0.0
        %3601 = vmatpush.xpose.msra.mxu0 0.0
        %3602 = vmatpush.xpose.msra.mxu0 0.0
        %3603 = vmatpush.xpose.msra.mxu0 %v3586
        %3604 = vmatmul.f32.gmra.mxu0 %v3355
        %v3605 = vpop.f32.mrf.mxu0
        %v3606 = vadd.f32 %v3577, %v3605
        %3607 = vdwg.mxu0
        %v3609 = vsel %vm395, %v3565, 0
        %3611 = vmatpush.xpose.msra.mxu0 0.0
        %3612 = vmatpush.xpose.msra.mxu0 0.0
        %3613 = vmatpush.xpose.msra.mxu0 0.0
        %3614 = vmatpush.xpose.msra.mxu0 0.0
        %3615 = vmatpush.xpose.msra.mxu0 0.0
        %3616 = vmatpush.xpose.msra.mxu0 0.0
        %3617 = vmatpush.xpose.msra.mxu0 0.0
        %3618 = vmatpush.xpose.msra.mxu0 0.0
        %3619 = vmatpush.xpose.msra.mxu0 0.0
        %3620 = vmatpush.xpose.msra.mxu0 0.0
        %3621 = vmatpush.xpose.msra.mxu0 0.0
        %3622 = vmatpush.xpose.msra.mxu0 0.0
        %3623 = vmatpush.xpose.msra.mxu0 0.0
        %3624 = vmatpush.xpose.msra.mxu0 0.0
        %3625 = vmatpush.xpose.msra.mxu0 0.0
        %3626 = vmatpush.xpose.msra.mxu0 %v3609
        %3627 = vmatmul.f32.gmra.mxu0 %v3355
        %v3628 = vpop.f32.mrf.mxu0
        %v3629 = vadd.f32 %v3578, %v3628
        %3630 = vdwg.mxu0
        %v3632 = vsel %vm395, %v3566, 0
        %3634 = vmatpush.xpose.msra.mxu0 0.0
        %3635 = vmatpush.xpose.msra.mxu0 0.0
        %3636 = vmatpush.xpose.msra.mxu0 0.0
        %3637 = vmatpush.xpose.msra.mxu0 0.0
        %3638 = vmatpush.xpose.msra.mxu0 0.0
        %3639 = vmatpush.xpose.msra.mxu0 0.0
        %3640 = vmatpush.xpose.msra.mxu0 0.0
        %3641 = vmatpush.xpose.msra.mxu0 0.0
        %3642 = vmatpush.xpose.msra.mxu0 0.0
        %3643 = vmatpush.xpose.msra.mxu0 0.0
        %3644 = vmatpush.xpose.msra.mxu0 0.0
        %3645 = vmatpush.xpose.msra.mxu0 0.0
        %3646 = vmatpush.xpose.msra.mxu0 0.0
        %3647 = vmatpush.xpose.msra.mxu0 0.0
        %3648 = vmatpush.xpose.msra.mxu0 0.0
        %3649 = vmatpush.xpose.msra.mxu0 %v3632
        %3650 = vmatmul.f32.gmra.mxu0 %v3355
        %v3651 = vpop.f32.mrf.mxu0
        %v3652 = vadd.f32 %v3579, %v3651
        %3653 = vdwg.mxu0
        %v3655 = vsel %vm395, %v3567, 0
        %3657 = vmatpush.xpose.msra.mxu0 0.0
        %3658 = vmatpush.xpose.msra.mxu0 0.0
        %3659 = vmatpush.xpose.msra.mxu0 0.0
        %3660 = vmatpush.xpose.msra.mxu0 0.0
        %3661 = vmatpush.xpose.msra.mxu0 0.0
        %3662 = vmatpush.xpose.msra.mxu0 0.0
        %3663 = vmatpush.xpose.msra.mxu0 0.0
        %3664 = vmatpush.xpose.msra.mxu0 0.0
        %3665 = vmatpush.xpose.msra.mxu0 0.0
        %3666 = vmatpush.xpose.msra.mxu0 0.0
        %3667 = vmatpush.xpose.msra.mxu0 0.0
        %3668 = vmatpush.xpose.msra.mxu0 0.0
        %3669 = vmatpush.xpose.msra.mxu0 0.0
        %3670 = vmatpush.xpose.msra.mxu0 0.0
        %3671 = vmatpush.xpose.msra.mxu0 0.0
        %3672 = vmatpush.xpose.msra.mxu0 %v3655
        %3673 = vmatmul.f32.gmra.mxu0 %v3355
        %v3674 = vpop.f32.mrf.mxu0
        %v3675 = vadd.f32 %v3580, %v3674
        %3676 = vdwg.mxu0
        %v3678 = vsel %vm772, %v3378, 0
        %v3681 = vsel %vm772, %v3492, 0
        %3683 = vmatpush.xpose.msra.mxu0 0.0
        %3684 = vmatpush.xpose.msra.mxu0 0.0
        %3685 = vmatpush.xpose.msra.mxu0 0.0
        %3686 = vmatpush.xpose.msra.mxu0 0.0
        %3687 = vmatpush.xpose.msra.mxu0 0.0
        %3688 = vmatpush.xpose.msra.mxu0 0.0
        %3689 = vmatpush.xpose.msra.mxu0 0.0
        %3690 = vmatpush.xpose.msra.mxu0 0.0
        %3691 = vmatpush.xpose.msra.mxu0 0.0
        %3692 = vmatpush.xpose.msra.mxu0 0.0
        %3693 = vmatpush.xpose.msra.mxu0 0.0
        %3694 = vmatpush.xpose.msra.mxu0 0.0
        %3695 = vmatpush.xpose.msra.mxu0 0.0
        %3696 = vmatpush.xpose.msra.mxu0 0.0
        %3697 = vmatpush.xpose.msra.mxu0 0.0
        %3698 = vmatpush.xpose.msra.mxu0 %v3681
        %3699 = vmatmul.f32.gmra.mxu0 %v3678
        %v3700 = vpop.f32.mrf.mxu0
        %v3701 = vadd.f32 0.0, %v3700
        %3702 = vdwg.mxu0
        %v3704 = vsel %vm772, %v3401, 0
        %v3707 = vsel %vm772, %v3515, 0
        %3709 = vmatpush.xpose.msra.mxu0 0.0
        %3710 = vmatpush.xpose.msra.mxu0 0.0
        %3711 = vmatpush.xpose.msra.mxu0 0.0
        %3712 = vmatpush.xpose.msra.mxu0 0.0
        %3713 = vmatpush.xpose.msra.mxu0 0.0
        %3714 = vmatpush.xpose.msra.mxu0 0.0
        %3715 = vmatpush.xpose.msra.mxu0 0.0
        %3716 = vmatpush.xpose.msra.mxu0 0.0
        %3717 = vmatpush.xpose.msra.mxu0 0.0
        %3718 = vmatpush.xpose.msra.mxu0 0.0
        %3719 = vmatpush.xpose.msra.mxu0 0.0
        %3720 = vmatpush.xpose.msra.mxu0 0.0
        %3721 = vmatpush.xpose.msra.mxu0 0.0
        %3722 = vmatpush.xpose.msra.mxu0 0.0
        %3723 = vmatpush.xpose.msra.mxu0 0.0
        %3724 = vmatpush.xpose.msra.mxu0 %v3707
        %3725 = vmatmul.f32.gmra.mxu0 %v3704
        %v3726 = vpop.f32.mrf.mxu0
        %v3727 = vadd.f32 0.0, %v3726
        %3728 = vdwg.mxu0
        %v3730 = vsel %vm772, %v3424, 0
        %v3733 = vsel %vm772, %v3538, 0
        %3735 = vmatpush.xpose.msra.mxu0 0.0
        %3736 = vmatpush.xpose.msra.mxu0 0.0
        %3737 = vmatpush.xpose.msra.mxu0 0.0
        %3738 = vmatpush.xpose.msra.mxu0 0.0
        %3739 = vmatpush.xpose.msra.mxu0 0.0
        %3740 = vmatpush.xpose.msra.mxu0 0.0
        %3741 = vmatpush.xpose.msra.mxu0 0.0
        %3742 = vmatpush.xpose.msra.mxu0 0.0
        %3743 = vmatpush.xpose.msra.mxu0 0.0
        %3744 = vmatpush.xpose.msra.mxu0 0.0
        %3745 = vmatpush.xpose.msra.mxu0 0.0
        %3746 = vmatpush.xpose.msra.mxu0 0.0
        %3747 = vmatpush.xpose.msra.mxu0 0.0
        %3748 = vmatpush.xpose.msra.mxu0 0.0
        %3749 = vmatpush.xpose.msra.mxu0 0.0
        %3750 = vmatpush.xpose.msra.mxu0 %v3733
        %3751 = vmatmul.f32.gmra.mxu0 %v3730
        %v3752 = vpop.f32.mrf.mxu0
        %v3753 = vadd.f32 0.0, %v3752
        %3754 = vdwg.mxu0
        %v3756 = vsel %vm772, %v3447, 0
        %v3759 = vsel %vm772, %v3561, 0
        %3761 = vmatpush.xpose.msra.mxu0 0.0
        %3762 = vmatpush.xpose.msra.mxu0 0.0
        %3763 = vmatpush.xpose.msra.mxu0 0.0
        %3764 = vmatpush.xpose.msra.mxu0 0.0
        %3765 = vmatpush.xpose.msra.mxu0 0.0
        %3766 = vmatpush.xpose.msra.mxu0 0.0
        %3767 = vmatpush.xpose.msra.mxu0 0.0
        %3768 = vmatpush.xpose.msra.mxu0 0.0
        %3769 = vmatpush.xpose.msra.mxu0 0.0
        %3770 = vmatpush.xpose.msra.mxu0 0.0
        %3771 = vmatpush.xpose.msra.mxu0 0.0
        %3772 = vmatpush.xpose.msra.mxu0 0.0
        %3773 = vmatpush.xpose.msra.mxu0 0.0
        %3774 = vmatpush.xpose.msra.mxu0 0.0
        %3775 = vmatpush.xpose.msra.mxu0 0.0
        %3776 = vmatpush.xpose.msra.mxu0 %v3759
        %3777 = vmatmul.f32.gmra.mxu0 %v3756
        %v3778 = vpop.f32.mrf.mxu0
        %v3779 = vadd.f32 0.0, %v3778
        %3780 = vdwg.mxu0
        %v3781 = vmul.f32 %v3701, 0.35355338
        %v3782 = vmul.f32 %v3727, 0.35355338
        %v3783 = vmul.f32 %v3753, 0.35355338
        %v3784 = vmul.f32 %v3779, 0.35355338
        %v3785 = vsel %vm391, -1e+30, %v3781
        %v3786 = vsel %vm391, -1e+30, %v3782
        %v3787 = vsel %vm391, -1e+30, %v3783
        %v3788 = vsel %vm391, -1e+30, %v3784
        %v3789 = vsel %vm772, %v3785, -inf
        %3790 = vmax.xlane.f32.xlu0 %v3789
        %v3791 = vpop.xlane.xlu0 %3790
        %v3792 = vsel %vm772, %v3786, -inf
        %3793 = vmax.xlane.f32.xlu0 %v3792
        %v3794 = vpop.xlane.xlu0 %3793
        %v3795 = vsel %vm772, %v3787, -inf
        %3796 = vmax.xlane.f32.xlu0 %v3795
        %v3797 = vpop.xlane.xlu0 %3796
        %v3798 = vsel %vm772, %v3788, -inf
        %3799 = vmax.xlane.f32.xlu0 %v3798
        %v3800 = vpop.xlane.xlu0 %3799
        %v3801 = vsub.f32 %v3785, %v3791
        %v3802 = vsub.f32 %v3786, %v3794
        %v3803 = vsub.f32 %v3787, %v3797
        %v3804 = vsub.f32 %v3788, %v3800
        %v3805 = vmul.f32 %v3801, 1.442695
        %v3806 = vpow.pop %v3805
        %v3807 = vmul.f32 %v3802, 1.442695
        %v3808 = vpow.pop %v3807
        %v3809 = vmul.f32 %v3803, 1.442695
        %v3810 = vpow.pop %v3809
        %v3811 = vmul.f32 %v3804, 1.442695
        %v3812 = vpow.pop %v3811
        %v3813 = vsel %vm772, %v3806, 0.0
        %3814 = vadd.xlane.f32.xlu0 %v3813
        %v3815 = vpop.xlane.xlu0 %3814
        %v3816 = vsel %vm772, %v3808, 0.0
        %3817 = vadd.xlane.f32.xlu0 %v3816
        %v3818 = vpop.xlane.xlu0 %3817
        %v3819 = vsel %vm772, %v3810, 0.0
        %3820 = vadd.xlane.f32.xlu0 %v3819
        %v3821 = vpop.xlane.xlu0 %3820
        %v3822 = vsel %vm772, %v3812, 0.0
        %3823 = vadd.xlane.f32.xlu0 %v3822
        %v3824 = vpop.xlane.xlu0 %3823
        %v3825 = vrcp.pop %v3815
        %v3826 = vmul.f32 %v3815, %v3825
        %v3827 = vsub.f32 1.0, %v3826
        %v3828 = vmul.f32 %v3825, %v3827
        %v3829 = vadd.f32 %v3825, %v3828
        %vm3830 = vweird.f32 %v3815
        %vm3831 = vweird.f32 %v3825
        %vm3832 = vmor %vm3830, %vm3831
        %v3833 = vsel %vm3832, %v3825, %v3829
        %v3834 = vand.u32 2147483647, %v3815
        %vm3835 = vcmp.eq.f32.partialorder %v3834, 8.507059e+37
        %v3836 = vand.u32 %v3815, 2147483648
        %v3837 = vor.u32 1.1754944e-38, %v3836
        %v3838 = vsel %vm3835, %v3837, %v3833
        %v3839 = vmul.f32 %v3806, %v3838
        %v3840 = vrcp.pop %v3818
        %v3841 = vmul.f32 %v3818, %v3840
        %v3842 = vsub.f32 1.0, %v3841
        %v3843 = vmul.f32 %v3840, %v3842
        %v3844 = vadd.f32 %v3840, %v3843
        %vm3845 = vweird.f32 %v3818
        %vm3846 = vweird.f32 %v3840
        %vm3847 = vmor %vm3845, %vm3846
        %v3848 = vsel %vm3847, %v3840, %v3844
        %v3849 = vand.u32 2147483647, %v3818
        %vm3850 = vcmp.eq.f32.partialorder %v3849, 8.507059e+37
        %v3851 = vand.u32 %v3818, 2147483648
        %v3852 = vor.u32 1.1754944e-38, %v3851
        %v3853 = vsel %vm3850, %v3852, %v3848
        %v3854 = vmul.f32 %v3808, %v3853
        %v3855 = vrcp.pop %v3821
        %v3856 = vmul.f32 %v3821, %v3855
        %v3857 = vsub.f32 1.0, %v3856
        %v3858 = vmul.f32 %v3855, %v3857
        %v3859 = vadd.f32 %v3855, %v3858
        %vm3860 = vweird.f32 %v3821
        %vm3861 = vweird.f32 %v3855
        %vm3862 = vmor %vm3860, %vm3861
        %v3863 = vsel %vm3862, %v3855, %v3859
        %v3864 = vand.u32 2147483647, %v3821
        %vm3865 = vcmp.eq.f32.partialorder %v3864, 8.507059e+37
        %v3866 = vand.u32 %v3821, 2147483648
        %v3867 = vor.u32 1.1754944e-38, %v3866
        %v3868 = vsel %vm3865, %v3867, %v3863
        %v3869 = vmul.f32 %v3810, %v3868
        %v3870 = vrcp.pop %v3824
        %v3871 = vmul.f32 %v3824, %v3870
        %v3872 = vsub.f32 1.0, %v3871
        %v3873 = vmul.f32 %v3870, %v3872
        %v3874 = vadd.f32 %v3870, %v3873
        %vm3875 = vweird.f32 %v3824
        %vm3876 = vweird.f32 %v3870
        %vm3877 = vmor %vm3875, %vm3876
        %v3878 = vsel %vm3877, %v3870, %v3874
        %v3879 = vand.u32 2147483647, %v3824
        %vm3880 = vcmp.eq.f32.partialorder %v3879, 8.507059e+37
        %v3881 = vand.u32 %v3824, 2147483648
        %v3882 = vor.u32 1.1754944e-38, %v3881
        %v3883 = vsel %vm3880, %v3882, %v3878
        %v3884 = vmul.f32 %v3812, %v3883
        %v3886 = vsel %vm772, %v3839, 0
        %3888 = vmatpush.msra.mxu0 0.0
        %3889 = vmatpush.msra.mxu0 0.0
        %3890 = vmatpush.msra.mxu0 0.0
        %3891 = vmatpush.msra.mxu0 0.0
        %3892 = vmatpush.msra.mxu0 0.0
        %3893 = vmatpush.msra.mxu0 0.0
        %3894 = vmatpush.msra.mxu0 0.0
        %3895 = vmatpush.msra.mxu0 0.0
        %3896 = vmatpush.msra.mxu0 0.0
        %3897 = vmatpush.msra.mxu0 0.0
        %3898 = vmatpush.msra.mxu0 0.0
        %3899 = vmatpush.msra.mxu0 0.0
        %3900 = vmatpush.msra.mxu0 0.0
        %3901 = vmatpush.msra.mxu0 0.0
        %3902 = vmatpush.msra.mxu0 0.0
        %3903 = vmatpush.msra.mxu0 %v3606
        %3904 = vmatmul.f32.gmra.mxu0 %v3886
        %v3905 = vpop.f32.mrf.mxu0
        %v3906 = vadd.f32 0.0, %v3905
        %3907 = vdwg.mxu0
        %v3909 = vsel %vm772, %v3854, 0
        %3911 = vmatpush.msra.mxu0 0.0
        %3912 = vmatpush.msra.mxu0 0.0
        %3913 = vmatpush.msra.mxu0 0.0
        %3914 = vmatpush.msra.mxu0 0.0
        %3915 = vmatpush.msra.mxu0 0.0
        %3916 = vmatpush.msra.mxu0 0.0
        %3917 = vmatpush.msra.mxu0 0.0
        %3918 = vmatpush.msra.mxu0 0.0
        %3919 = vmatpush.msra.mxu0 0.0
        %3920 = vmatpush.msra.mxu0 0.0
        %3921 = vmatpush.msra.mxu0 0.0
        %3922 = vmatpush.msra.mxu0 0.0
        %3923 = vmatpush.msra.mxu0 0.0
        %3924 = vmatpush.msra.mxu0 0.0
        %3925 = vmatpush.msra.mxu0 0.0
        %3926 = vmatpush.msra.mxu0 %v3629
        %3927 = vmatmul.f32.gmra.mxu0 %v3909
        %v3928 = vpop.f32.mrf.mxu0
        %v3929 = vadd.f32 0.0, %v3928
        %3930 = vdwg.mxu0
        %v3932 = vsel %vm772, %v3869, 0
        %3934 = vmatpush.msra.mxu0 0.0
        %3935 = vmatpush.msra.mxu0 0.0
        %3936 = vmatpush.msra.mxu0 0.0
        %3937 = vmatpush.msra.mxu0 0.0
        %3938 = vmatpush.msra.mxu0 0.0
        %3939 = vmatpush.msra.mxu0 0.0
        %3940 = vmatpush.msra.mxu0 0.0
        %3941 = vmatpush.msra.mxu0 0.0
        %3942 = vmatpush.msra.mxu0 0.0
        %3943 = vmatpush.msra.mxu0 0.0
        %3944 = vmatpush.msra.mxu0 0.0
        %3945 = vmatpush.msra.mxu0 0.0
        %3946 = vmatpush.msra.mxu0 0.0
        %3947 = vmatpush.msra.mxu0 0.0
        %3948 = vmatpush.msra.mxu0 0.0
        %3949 = vmatpush.msra.mxu0 %v3652
        %3950 = vmatmul.f32.gmra.mxu0 %v3932
        %v3951 = vpop.f32.mrf.mxu0
        %v3952 = vadd.f32 0.0, %v3951
        %3953 = vdwg.mxu0
        %v3955 = vsel %vm772, %v3884, 0
        %3957 = vmatpush.msra.mxu0 0.0
        %3958 = vmatpush.msra.mxu0 0.0
        %3959 = vmatpush.msra.mxu0 0.0
        %3960 = vmatpush.msra.mxu0 0.0
        %3961 = vmatpush.msra.mxu0 0.0
        %3962 = vmatpush.msra.mxu0 0.0
        %3963 = vmatpush.msra.mxu0 0.0
        %3964 = vmatpush.msra.mxu0 0.0
        %3965 = vmatpush.msra.mxu0 0.0
        %3966 = vmatpush.msra.mxu0 0.0
        %3967 = vmatpush.msra.mxu0 0.0
        %3968 = vmatpush.msra.mxu0 0.0
        %3969 = vmatpush.msra.mxu0 0.0
        %3970 = vmatpush.msra.mxu0 0.0
        %3971 = vmatpush.msra.mxu0 0.0
        %3972 = vmatpush.msra.mxu0 %v3675
        %3973 = vmatmul.f32.gmra.mxu0 %v3955
        %v3974 = vpop.f32.mrf.mxu0
        %v3975 = vadd.f32 0.0, %v3974
        %3976 = vdwg.mxu0
        %s3977 = scalar_lea.vmem %s4, 96
        %v3978 = vld [vmem:[%s3977] sm:$0xff]
        %v3979 = vld [vmem:[%s3977 + $0x8] sm:$0xff]
        %v3980 = vld [vmem:[%s3977 + $0x10] sm:$0xff]
        %v3981 = vld [vmem:[%s3977 + $0x18] sm:$0xff]
        %v3983 = vsel %vm772, %v3906, 0
        %3985 = vmatpush.msra.mxu0 0.0
        %3986 = vmatpush.msra.mxu0 0.0
        %3987 = vmatpush.msra.mxu0 0.0
        %3988 = vmatpush.msra.mxu0 0.0
        %3989 = vmatpush.msra.mxu0 0.0
        %3990 = vmatpush.msra.mxu0 0.0
        %3991 = vmatpush.msra.mxu0 0.0
        %3992 = vmatpush.msra.mxu0 0.0
        %3993 = vmatpush.msra.mxu0 0.0
        %3994 = vmatpush.msra.mxu0 0.0
        %3995 = vmatpush.msra.mxu0 0.0
        %3996 = vmatpush.msra.mxu0 0.0
        %3997 = vmatpush.msra.mxu0 0.0
        %3998 = vmatpush.msra.mxu0 0.0
        %3999 = vmatpush.msra.mxu0 0.0
        %4000 = vmatpush.msra.mxu0 %v3978
        %4001 = vmatmul.f32.gmra.mxu0 %v3983
        %v4002 = vpop.f32.mrf.mxu0
        %v4003 = vadd.f32 0.0, %v4002
        %4004 = vdwg.mxu0
        %v4006 = vsel %vm772, %v3929, 0
        %4008 = vmatpush.msra.mxu0 0.0
        %4009 = vmatpush.msra.mxu0 0.0
        %4010 = vmatpush.msra.mxu0 0.0
        %4011 = vmatpush.msra.mxu0 0.0
        %4012 = vmatpush.msra.mxu0 0.0
        %4013 = vmatpush.msra.mxu0 0.0
        %4014 = vmatpush.msra.mxu0 0.0
        %4015 = vmatpush.msra.mxu0 0.0
        %4016 = vmatpush.msra.mxu0 0.0
        %4017 = vmatpush.msra.mxu0 0.0
        %4018 = vmatpush.msra.mxu0 0.0
        %4019 = vmatpush.msra.mxu0 0.0
        %4020 = vmatpush.msra.mxu0 0.0
        %4021 = vmatpush.msra.mxu0 0.0
        %4022 = vmatpush.msra.mxu0 0.0
        %4023 = vmatpush.msra.mxu0 %v3979
        %4024 = vmatmul.f32.gmra.mxu0 %v4006
        %v4025 = vpop.f32.mrf.mxu0
        %v4026 = vadd.f32 0.0, %v4025
        %4027 = vdwg.mxu0
        %v4029 = vsel %vm772, %v3952, 0
        %4031 = vmatpush.msra.mxu0 0.0
        %4032 = vmatpush.msra.mxu0 0.0
        %4033 = vmatpush.msra.mxu0 0.0
        %4034 = vmatpush.msra.mxu0 0.0
        %4035 = vmatpush.msra.mxu0 0.0
        %4036 = vmatpush.msra.mxu0 0.0
        %4037 = vmatpush.msra.mxu0 0.0
        %4038 = vmatpush.msra.mxu0 0.0
        %4039 = vmatpush.msra.mxu0 0.0
        %4040 = vmatpush.msra.mxu0 0.0
        %4041 = vmatpush.msra.mxu0 0.0
        %4042 = vmatpush.msra.mxu0 0.0
        %4043 = vmatpush.msra.mxu0 0.0
        %4044 = vmatpush.msra.mxu0 0.0
        %4045 = vmatpush.msra.mxu0 0.0
        %4046 = vmatpush.msra.mxu0 %v3980
        %4047 = vmatmul.f32.gmra.mxu0 %v4029
        %v4048 = vpop.f32.mrf.mxu0
        %v4049 = vadd.f32 0.0, %v4048
        %4050 = vdwg.mxu0
        %v4052 = vsel %vm772, %v3975, 0
        %4054 = vmatpush.msra.mxu0 0.0
        %4055 = vmatpush.msra.mxu0 0.0
        %4056 = vmatpush.msra.mxu0 0.0
        %4057 = vmatpush.msra.mxu0 0.0
        %4058 = vmatpush.msra.mxu0 0.0
        %4059 = vmatpush.msra.mxu0 0.0
        %4060 = vmatpush.msra.mxu0 0.0
        %4061 = vmatpush.msra.mxu0 0.0
        %4062 = vmatpush.msra.mxu0 0.0
        %4063 = vmatpush.msra.mxu0 0.0
        %4064 = vmatpush.msra.mxu0 0.0
        %4065 = vmatpush.msra.mxu0 0.0
        %4066 = vmatpush.msra.mxu0 0.0
        %4067 = vmatpush.msra.mxu0 0.0
        %4068 = vmatpush.msra.mxu0 0.0
        %4069 = vmatpush.msra.mxu0 %v3981
        %4070 = vmatmul.f32.gmra.mxu0 %v4052
        %v4071 = vpop.f32.mrf.mxu0
        %v4072 = vadd.f32 0.0, %v4071
        %4073 = vdwg.mxu0
        %v4074 = vadd.f32 %v4003, %v4026
        %v4075 = vadd.f32 %v4074, %v4049
        %v4076 = vadd.f32 %v4075, %v4072
        %v4077 = vld [vmem:[%s3303 + $0x4] sm:$0x1]
        %v4078 = vperm.slane %v4077, 0
        %v4079 = vadd.f32 %v4076, %v4078
        %v4080 = vadd.f32 %v3331, %v4079
        %v4081 = vld [vmem:[%s3303 + $0x2] sm:$0x1]
        %v4082 = vld [vmem:[%s3303 + $0x3] sm:$0x1]
        %v4083 = vsel %vm395, %v4080, 0.0
        %4084 = vadd.xlane.f32.xlu0 %v4083
        %v4085 = vpop.xlane.xlu0 %4084
        %v4086 = vmul.f32 %v4085, %v405
        %v4087 = vsub.f32 %v4080, %v4086
        %v4088 = vmul.f32 %v4087, %v4087
        %v4089 = vsel %vm395, %v4088, 0.0
        %4090 = vadd.xlane.f32.xlu0 %v4089
        %v4091 = vpop.xlane.xlu0 %4090
        %v4092 = vmul.f32 %v4091, %v405
        %v4093 = vadd.f32 %v4092, 1e-05
        %v4094 = vrsqrt.pop %v4093
        %v4095 = vmul.f32 %v4094, %v4093
        %v4096 = vmul.f32 %v4095, %v4094
        %v4097 = vmul.f32 0.5, %v4096
        %v4098 = vsub.f32 1.5, %v4097
        %v4099 = vmul.f32 %v4094, %v4098
        %vm4100 = vweird.f32 %v4093
        %vm4101 = vweird.f32 %v4094
        %vm4102 = vmor %vm4100, %vm4101
        %v4103 = vsel %vm4102, %v4094, %v4099
        %v4104 = vmul.f32 %v4087, %v4103
        %v4105 = vperm.slane %v4081, 0
        %v4106 = vmul.f32 %v4104, %v4105
        %v4107 = vperm.slane %v4082, 0
        %v4108 = vadd.f32 %v4106, %v4107
        %s4109 = scalar_lea.vmem %s5, 384
        %v4110 = vld [vmem:[%s4109] sm:$0xff]
        %v4111 = vld [vmem:[%s4109 + $0x8] sm:$0xff]
        %v4112 = vld [vmem:[%s4109 + $0x10] sm:$0xff]
        %v4113 = vld [vmem:[%s4109 + $0x18] sm:$0xff]
        %v4114 = vld [vmem:[%s4109 + $0x20] sm:$0xff]
        %v4115 = vld [vmem:[%s4109 + $0x28] sm:$0xff]
        %v4116 = vld [vmem:[%s4109 + $0x30] sm:$0xff]
        %v4117 = vld [vmem:[%s4109 + $0x38] sm:$0xff]
        %v4118 = vld [vmem:[%s4109 + $0x40] sm:$0xff]
        %v4119 = vld [vmem:[%s4109 + $0x48] sm:$0xff]
        %v4120 = vld [vmem:[%s4109 + $0x50] sm:$0xff]
        %v4121 = vld [vmem:[%s4109 + $0x58] sm:$0xff]
        %v4122 = vld [vmem:[%s4109 + $0x60] sm:$0xff]
        %v4123 = vld [vmem:[%s4109 + $0x68] sm:$0xff]
        %v4124 = vld [vmem:[%s4109 + $0x70] sm:$0xff]
        %v4125 = vld [vmem:[%s4109 + $0x78] sm:$0xff]
        %v4126 = vld [vmem:[%s3303 + $0x6] sm:$0x1]
        %v4127 = vperm.slane %v4126, 0
        %v4129 = vsel %vm395, %v4108, 0
        %v4132 = vsel %vm395, %v4110, 0
        %v4135 = vsel %vm395, %v4111, 0
        %v4138 = vsel %vm395, %v4112, 0
        %v4141 = vsel %vm395, %v4113, 0
        %v4144 = vsel %vm395, %v4114, 0
        %v4147 = vsel %vm395, %v4115, 0
        %v4150 = vsel %vm395, %v4116, 0
        %v4153 = vsel %vm395, %v4117, 0
        %v4156 = vsel %vm395, %v4118, 0
        %v4159 = vsel %vm395, %v4119, 0
        %v4162 = vsel %vm395, %v4120, 0
        %v4165 = vsel %vm395, %v4121, 0
        %v4168 = vsel %vm395, %v4122, 0
        %v4171 = vsel %vm395, %v4123, 0
        %v4174 = vsel %vm395, %v4124, 0
        %v4177 = vsel %vm395, %v4125, 0
        %4179 = vmatpush.xpose.msra.mxu0 %v4177
        %4180 = vmatpush.xpose.msra.mxu0 %v4174
        %4181 = vmatpush.xpose.msra.mxu0 %v4171
        %4182 = vmatpush.xpose.msra.mxu0 %v4168
        %4183 = vmatpush.xpose.msra.mxu0 %v4165
        %4184 = vmatpush.xpose.msra.mxu0 %v4162
        %4185 = vmatpush.xpose.msra.mxu0 %v4159
        %4186 = vmatpush.xpose.msra.mxu0 %v4156
        %4187 = vmatpush.xpose.msra.mxu0 %v4153
        %4188 = vmatpush.xpose.msra.mxu0 %v4150
        %4189 = vmatpush.xpose.msra.mxu0 %v4147
        %4190 = vmatpush.xpose.msra.mxu0 %v4144
        %4191 = vmatpush.xpose.msra.mxu0 %v4141
        %4192 = vmatpush.xpose.msra.mxu0 %v4138
        %4193 = vmatpush.xpose.msra.mxu0 %v4135
        %4194 = vmatpush.xpose.msra.mxu0 %v4132
        %4195 = vmatmul.f32.gmra.mxu0 %v4129
        %v4196 = vpop.f32.mrf.mxu0
        %v4197 = vadd.f32 %v4127, %v4196
        %4198 = vdwg.mxu0
        %v4199 = vmul.f32 %v4197, 0.5
        %v4200 = vmul.f32 %v4197, 0.70710677
        %v4201 = vmul.f32 %v4200, %v4200
        %v4202 = vmin.f32 16.0, %v4201
        %v4203 = vmul.f32 %v4202, 2.1237322e-06
        %v4204 = vadd.f32 %v4203, 0.00028619796
        %v4205 = vmul.f32 %v4202, %v4204
        %v4206 = vadd.f32 %v4205, 0.0036580483
        %v4207 = vmul.f32 %v4202, %v4206
        %v4208 = vadd.f32 %v4207, 0.05243302
        %v4209 = vmul.f32 %v4202, %v4208
        %v4210 = vadd.f32 %v4209, 0.18741608
        %v4211 = vmul.f32 %v4202, %v4210
        %v4212 = vadd.f32 %v4211, 1.1283791
        %v4213 = vmul.f32 %v4200, %v4212
        %v4214 = vmul.f32 %v4202, 3.8918573e-05
        %v4215 = vadd.f32 %v4214, 0.001143296
        %v4216 = vmul.f32 %v4202, %v4215
        %v4217 = vadd.f32 %v4216, 0.014752088
        %v4218 = vmul.f32 %v4202, %v4217
        %v4219 = vadd.f32 %v4218, 0.112945676
        %v4220 = vmul.f32 %v4202, %v4219
        %v4221 = vadd.f32 %v4220, 0.4994258
        %v4222 = vmul.f32 %v4202, %v4221
        %v4223 = vadd.f32 %v4222, 1.0
        %v4224 = vrcp.pop %v4223
        %v4225 = vmul.f32 %v4223, %v4224
        %v4226 = vsub.f32 1.0, %v4225
        %v4227 = vmul.f32 %v4224, %v4226
        %v4228 = vadd.f32 %v4224, %v4227
        %vm4229 = vweird.f32 %v4223
        %vm4230 = vweird.f32 %v4224
        %vm4231 = vmor %vm4229, %vm4230
        %v4232 = vsel %vm4231, %v4224, %v4228
        %v4233 = vand.u32 2147483647, %v4223
        %vm4234 = vcmp.eq.f32.partialorder %v4233, 8.507059e+37
        %v4235 = vand.u32 %v4223, 2147483648
        %v4236 = vor.u32 1.1754944e-38, %v4235
        %v4237 = vsel %vm4234, %v4236, %v4232
        %v4238 = vmul.f32 %v4213, %v4237
        %v4239 = vmin.f32 %v4238, 1.0
        %v4240 = vmax.f32 %v4239, -1.0
        %v4241 = vadd.f32 %v4240, 1.0
        %v4242 = vmul.f32 %v4199, %v4241
        %s4243 = scalar_lea.vmem %s6, 96
        %v4244 = vld [vmem:[%s4243] sm:$0xff]
        %v4245 = vld [vmem:[%s4243 + $0x8] sm:$0xff]
        %v4246 = vld [vmem:[%s4243 + $0x10] sm:$0xff]
        %v4247 = vld [vmem:[%s4243 + $0x18] sm:$0xff]
        %v4248 = vld [vmem:[%s3303 + $0x5] sm:$0x1]
        %v4249 = vperm.slane %v4248, 0
        %4250 = vmatpush.xpose.msra.mxu0 0.0
        %4251 = vmatpush.xpose.msra.mxu0 0.0
        %4252 = vmatpush.xpose.msra.mxu0 0.0
        %4253 = vmatpush.xpose.msra.mxu0 0.0
        %4254 = vmatpush.xpose.msra.mxu0 0.0
        %4255 = vmatpush.xpose.msra.mxu0 0.0
        %4256 = vmatpush.xpose.msra.mxu0 0.0
        %4257 = vmatpush.xpose.msra.mxu0 0.0
        %4258 = vmatpush.xpose.msra.mxu0 0.0
        %4259 = vmatpush.xpose.msra.mxu0 0.0
        %4260 = vmatpush.xpose.msra.mxu0 0.0
        %4261 = vmatpush.xpose.msra.mxu0 0.0
        %4262 = vmatpush.xpose.msra.mxu0 %v4247
        %4263 = vmatpush.xpose.msra.mxu0 %v4246
        %4264 = vmatpush.xpose.msra.mxu0 %v4245
        %4265 = vmatpush.xpose.msra.mxu0 %v4244
        %4266 = vmatmul.f32.gmra.mxu0 %v4242
        %v4267 = vpop.f32.mrf.mxu0
        %v4268 = vadd.f32 %v4249, %v4267
        %4269 = vdwg.mxu0
        %v4270 = vadd.f32 %v4080, %v4268
        %4271 = vst.msk [vmem:[%s382] sm:$0xff] %vm395, %v4270
        %v4272 = vld [vmem:[%s8] sm:$0x1]
        %v4273 = vld [vmem:[%s8 + $0x1] sm:$0x1]
        %v4274 = vsel %vm395, %v4270, 0.0
        %4275 = vadd.xlane.f32.xlu0 %v4274
        %v4276 = vpop.xlane.xlu0 %4275
        %v4277 = vmul.f32 %v4276, %v405
        %v4278 = vsub.f32 %v4270, %v4277
        %v4279 = vmul.f32 %v4278, %v4278
        %v4280 = vsel %vm395, %v4279, 0.0
        %4281 = vadd.xlane.f32.xlu0 %v4280
        %v4282 = vpop.xlane.xlu0 %4281
        %v4283 = vmul.f32 %v4282, %v405
        %v4284 = vadd.f32 %v4283, 1e-05
        %v4285 = vrsqrt.pop %v4284
        %v4286 = vmul.f32 %v4285, %v4284
        %v4287 = vmul.f32 %v4286, %v4285
        %v4288 = vmul.f32 0.5, %v4287
        %v4289 = vsub.f32 1.5, %v4288
        %v4290 = vmul.f32 %v4285, %v4289
        %vm4291 = vweird.f32 %v4284
        %vm4292 = vweird.f32 %v4285
        %vm4293 = vmor %vm4291, %vm4292
        %v4294 = vsel %vm4293, %v4285, %v4290
        %v4295 = vmul.f32 %v4278, %v4294
        %v4296 = vperm.slane %v4272, 0
        %v4297 = vmul.f32 %v4295, %v4296
        %v4298 = vperm.slane %v4273, 0
        %v4299 = vadd.f32 %v4297, %v4298
        %4300 = vst.msk [vmem:[%s370] sm:$0xff] %vm395, %v4299
        %p4301 = scmp.lt.s32.totalorder %s25, 1
        %s4302 = scalar_select %p4301, %s25, 1
        %s4303 = smul.addr %s4302, 8
        %s4304 = scalar_lea.vmem %s9, %s4303
        %s4305 = sand.u32 %s258, 1
        %s4306 = scalar_lea.sflag [#allocation3], %s4305
        %s4307 = sand.u32 %s258, 1
        %s4308 = smul.addr %s4307, 8
        %s4309 = scalar_lea.vmem [#allocation2], %s4308
        // Predicated region
        $region57: #{gpt_extractor_forward.1} parent=55 // pred_check
          %p4310 = pneg %p242
        $region58: #{gpt_extractor_forward.1} parent=55 // pred_check_branch
          %4312 = sbr.rel (%p4310) target = $region60
        $region59: #{gpt_extractor_forward.1} parent=55 // pred_region
          _
        $region60: #{gpt_extractor_forward.1} parent=55 // pred_fallthru
          _
        // Predicated region
        $region61: #{gpt_extractor_forward.1} parent=55 // pred_check
          %p4313 = pneg %p268
        $region62: #{gpt_extractor_forward.1} parent=55 // pred_check_branch
          %4315 = sbr.rel (%p4313) target = $region64
        $region63: #{gpt_extractor_forward.1} parent=55 // pred_region
          %4317 = vsyncadd %s4306, 0
          %s4318 = smul.addr %s25, 8
          %s4319 = scalar_lea.hbm %s10, %s4318
          %s4321 = sshll.u32 %s4309, 4
          %s4322 = int_to_ptr.vmem [resolvable:$true] %s4321
          %s4323 = sshll.u32 %s4319, 4
          %s4324 = int_to_ptr.hbm [resolvable:$true] %s4323
          %4326 = dma.vmem_to_hbm [thread:$0]  %s4322, 128, %s4324, %s4306
        $region64: #{gpt_extractor_forward.1} parent=55 // pred_fallthru
          _
      $region56: #{gpt_extractor_forward.1} parent=5 // pred_fallthru
        _
      %p4327 = scmp.le.s32.totalorder 2, %s20
      // Predicated region
      $region65: #{gpt_extractor_forward.1} parent=5 // pred_check
        %p4328 = pneg %p4327
      $region66: #{gpt_extractor_forward.1} parent=5 // pred_check_branch
        %4330 = sbr.rel (%p4328) target = $region68
      $region67: #{gpt_extractor_forward.1} parent=5 // pred_region
        %s4331 = ssub.s32 %s20, 2
        // Predicated region
        $region69: #{gpt_extractor_forward.1} parent=67 // pred_check
          %p4332 = pneg %p248
        $region70: #{gpt_extractor_forward.1} parent=67 // pred_check_branch
          %4334 = sbr.rel (%p4332) target = $region72
        $region71: #{gpt_extractor_forward.1} parent=67 // pred_region
          %p4335 = scmp.lt.s32.totalorder %s26, 1
          %s4336 = scalar_select %p4335, %s26, 1
          %s4337 = smul.addr %s4336, 8
          %s4338 = scalar_lea.vmem %s9, %s4337
        $region72: #{gpt_extractor_forward.1} parent=67 // pred_fallthru
          _
        // Predicated region
        $region73: #{gpt_extractor_forward.1} parent=67 // pred_check
          %p4339 = pneg %p274
        $region74: #{gpt_extractor_forward.1} parent=67 // pred_check_branch
          %4341 = sbr.rel (%p4339) target = $region76
        $region75: #{gpt_extractor_forward.1} parent=67 // pred_region
          %s4342 = sand.u32 %s259, 1
          %s4343 = scalar_lea.sflag [#allocation3], %s4342
          %s4344 = sand.u32 %s259, 1
          %s4345 = smul.addr %s4344, 8
          %s4346 = scalar_lea.vmem [#allocation2], %s4345
          %4348 = dma.done %s4343, 128
        $region76: #{gpt_extractor_forward.1} parent=67 // pred_fallthru
          _
      $region68: #{gpt_extractor_forward.1} parent=5 // pred_fallthru
        _
    $region6: #{gpt_extractor_forward.1} parent=1 // loop_footer
      %s24 = sadd.s32 1, %s20
    $region7: #{gpt_extractor_forward.1} parent=1 // loop_footer_branch
      %19 = sbr.rel target = $region3
    $region8: #{gpt_extractor_forward.1} parent=1 // loop_exit
      _
    %4349 = vsyncpa [#allocation3], 1
    %s4350 = scalar_lea.sflag [#allocation3], 1
    %4351 = vsyncpa %s4350, 1

</llo_original>
